<compile_context>
chip_gen: v7x
topology: tpu7x:2x2x1
jax: 0.10.0
libtpu: 0.0.40
codegen_flags: <defaults>
</compile_context>

<pallas_src>
import jax
import jax.numpy as jnp
from jax.experimental import pallas as pl
from jax.experimental.pallas import tpu as pltpu


# ----------------------------- Pallas kernel --------------------------------

def fused_lstm_fc_kernel(x_ref, wih0_ref, whh0_ref, b0_ref,
                         w1_hbm, b1_ref, fcw_ref, fcb_ref,
                         out_ref, w1_vmem, w1_sem):
    """Fused 2-layer LSTM + FC forward (gate order [i, f, o, g]).

    x_ref    : (T, B, 1)   time-major input                         [VMEM]
    wih0_ref : (1, 4H)     layer-0 input->gates weights (transposed) [VMEM]
    whh0_ref : (H, 4H)     layer-0 hidden->gates weights (transposed)[VMEM]
    b0_ref   : (1, 4H)     layer-0 combined bias (b_ih + b_hh)       [VMEM]
    w1_hbm   : (2H, 4H)    layer-1 fused [W_ih; W_hh] weights        [ANY/HBM]
    b1_ref   : (1, 4H)     layer-1 combined bias                     [VMEM]
    fcw_ref  : (H, O)      FC weights (transposed)                   [VMEM]
    fcb_ref  : (1, O)      FC bias                                   [VMEM]
    out_ref  : (B, O)      model output                              [VMEM]
    w1_vmem  : (2H, 4H)    VMEM landing buffer for the layer-1 weight DMA
    w1_sem   : ()          DMA completion semaphore
    """
    T, B, _ = x_ref.shape
    H = whh0_ref.shape[0]

    # Kick off the layer-1 fused-weight DMA immediately; it overlaps with the
    # layer-0 step-0 compute and is waited on just before layer-1's first use.
    w1_copy = pltpu.make_async_copy(w1_hbm, w1_vmem, w1_sem)
    w1_copy.start()

    def nonlin(gates, c):
        # Gate columns are pre-permuted to [i, f, o, g]: one contiguous
        # sigmoid over (B, 3H) and one tanh over (B, H).
        sig = jax.nn.sigmoid(gates[:, 0:3 * H])
        i = sig[:, 0:H]
        f = sig[:, H:2 * H]
        o = sig[:, 2 * H:3 * H]
        g = jnp.tanh(gates[:, 3 * H:4 * H])
        c_new = f * c + i * g
        h_new = o * jnp.tanh(c_new)
        return h_new, c_new

    def layer0_step(t, h, c):
        # d_in == 1 -> the input projection is a pure broadcast multiply
        # (no MXU op), recomputed per step to keep vreg pressure low.
        gx = x_ref[t] * wih0_ref[...] + b0_ref[...]                # (B, 4H)
        gates = gx + jnp.dot(h, whh0_ref[...],
                             preferred_element_type=jnp.float32)
        return nonlin(gates, c)

    def layer1_step(h0_in, h, c):
        # Fused K=2H matmul: [h0, h1] @ [W_ih1; W_hh1]  (one 256-deep push).
        hh = jnp.concatenate([h0_in, h], axis=1)                   # (B, 2H)
        gates = (jnp.dot(hh, w1_vmem[...],
                         preferred_element_type=jnp.float32)
                 + b1_ref[...])
        return nonlin(gates, c)

    h0 = jnp.zeros((B, H), jnp.float32)
    c0 = jnp.zeros((B, H), jnp.float32)
    h1 = jnp.zeros((B, H), jnp.float32)
    c1 = jnp.zeros((B, H), jnp.float32)

    # Prologue: layer-0 step 0 (layer-1 weight DMA still in flight).
    h0, c0 = layer0_step(0, h0, c0)
    w1_copy.wait()

    # Software-pipelined interleave: combined step t runs layer-0 step t and
    # layer-1 step t-1 — two independent dependency chains per iteration.
    for t in range(1, T):                                          # unrolled
        h0_prev = h0
        h0, c0 = layer0_step(t, h0, c0)
        h1, c1 = layer1_step(h0_prev, h1, c1)

    # Epilogue: layer-1 consumes the final layer-0 hidden state.
    h1, c1 = layer1_step(h0, h1, c1)

    # Final FC on the last layer-1 hidden state only.
    out_ref[...] = (jnp.dot(h1, fcw_ref[...],
                            preferred_element_type=jnp.float32)
                    + fcb_ref[...])


# ------------------------------ JAX wrapper ----------------------------------

_VMEM = pl.BlockSpec(memory_space=pltpu.MemorySpace.VMEM)
_ANY = pl.BlockSpec(memory_space=pl.ANY)


def lstm_model_forward(x, params):
    """x: (B, T, input_size) batch-first, like the PyTorch module."""
    xt = jnp.transpose(x, (1, 0, 2)).astype(jnp.float32)     # (T, B, D) time-major
    T, B, d_in = xt.shape
    assert d_in == 1, "layer-0 broadcast path assumes input_size == 1"
    l0 = params["l0"]
    H = l0["whh_t"].shape[0]
    O = params["fc_w_t"].shape[1]

    return pl.pallas_call(
        fused_lstm_fc_kernel,
        out_shape=jax.ShapeDtypeStruct((B, O), jnp.float32),
        in_specs=[
            _VMEM,   # x
            _VMEM,   # wih0
            _VMEM,   # whh0
            _VMEM,   # b0
            _ANY,    # fused layer-1 weight (manually DMA'd, overlapped)
            _VMEM,   # b1
            _VMEM,   # fc_w
            _VMEM,   # fc_b
        ],
        out_specs=_VMEM,
        scratch_shapes=[
            pltpu.VMEM((2 * H, 4 * H), jnp.float32),   # layer-1 weight buffer
            pltpu.SemaphoreType.DMA(()),               # its DMA semaphore
        ],
    )(xt,
      l0["wih_t"], l0["whh_t"], l0["b"],
      params["w1_fused"], params["b1"],
      params["fc_w_t"], params["fc_b"])


# --------------------------- parameter construction --------------------------

def _reorder_ifog(a, H):
    """Permute the gate axis (size 4H, PyTorch order [i,f,g,o]) to [i,f,o,g]."""
    return jnp.concatenate([a[0:2 * H], a[3 * H:4 * H], a[2 * H:3 * H]], axis=0)


def init_params(key, input_size=1, hidden_size=128, num_layers=2, output_size=4):
    assert num_layers == 2, "fused kernel is specialised to num_layers=2"
    H = hidden_size
    k = 1.0 / jnp.sqrt(jnp.float32(H))
    raw = []
    for layer in range(num_layers):
        d_in = input_size if layer == 0 else H
        key, k1, k2, k3, k4 = jax.random.split(key, 5)
        w_ih = jax.random.uniform(k1, (4 * H, d_in), jnp.float32, -k, k)
        w_hh = jax.random.uniform(k2, (4 * H, H), jnp.float32, -k, k)
        b_ih = jax.random.uniform(k3, (4 * H,), jnp.float32, -k, k)
        b_hh = jax.random.uniform(k4, (4 * H,), jnp.float32, -k, k)
        raw.append((w_ih, w_hh, b_ih, b_hh))
    key, k5, k6 = jax.random.split(key, 3)
    fc_w = jax.random.uniform(k5, (output_size, H), jnp.float32, -k, k)
    fc_b = jax.random.uniform(k6, (output_size,), jnp.float32, -k, k)

    # ---- kernel packing: gate order [i, f, o, g], transposed layouts --------
    w_ih0, w_hh0, b_ih0, b_hh0 = raw[0]
    w_ih1, w_hh1, b_ih1, b_hh1 = raw[1]
    l0 = {
        "wih_t": _reorder_ifog(w_ih0, H).T,                           # (1, 4H)
        "whh_t": _reorder_ifog(w_hh0, H).T,                           # (H, 4H)
        "b": _reorder_ifog(b_ih0 + b_hh0, H).reshape(1, 4 * H),       # (1, 4H)
    }
    # layer-1 fused weight: [W_ih1; W_hh1] transposed -> (2H, 4H)
    w1_fused = jnp.concatenate(
        [_reorder_ifog(w_ih1, H).T, _reorder_ifog(w_hh1, H).T], axis=0)
    b1 = _reorder_ifog(b_ih1 + b_hh1, H).reshape(1, 4 * H)

    return {
        "l0": l0,
        "w1_fused": w1_fused,
        "b1": b1,
        "fc_w_t": fc_w.T,                                             # (H, O)
        "fc_b": fc_b.reshape(1, output_size),
        # originals (PyTorch layout) for the pure-JAX reference
        "_raw_lstm": raw, "_fc_w": fc_w, "_fc_b": fc_b,
    }


# ------------------------------ pure-JAX reference ----------------------------

def lstm_model_ref(x, params):
    B = x.shape[0]
    seq = x.astype(jnp.float32)
    for (w_ih, w_hh, b_ih, b_hh) in params["_raw_lstm"]:
        H = w_hh.shape[1]
        b = b_ih + b_hh
        h = jnp.zeros((B, H), jnp.float32)
        c = jnp.zeros((B, H), jnp.float32)
        outs = []
        for t in range(seq.shape[1]):
            g = seq[:, t, :] @ w_ih.T + h @ w_hh.T + b
            i = jax.nn.sigmoid(g[:, 0:H])
            f = jax.nn.sigmoid(g[:, H:2 * H])
            gg = jnp.tanh(g[:, 2 * H:3 * H])
            o = jax.nn.sigmoid(g[:, 3 * H:4 * H])
            c = f * c + i * gg
            h = o * jnp.tanh(c)
            outs.append(h)
        seq = jnp.stack(outs, axis=1)
    return seq[:, -1, :] @ params["_fc_w"].T + params["_fc_b"]


# ----------------------------------- main -------------------------------------

if __name__ == "__main__":
    key = jax.random.PRNGKey(0)
    key, pk, xk = jax.random.split(key, 3)

    B, T, D_IN = 2, 8, 1          # batch_first input (B, T, input_size)
    params = init_params(pk, input_size=D_IN, hidden_size=128,
                         num_layers=2, output_size=4)
    x = jax.random.normal(xk, (B, T, D_IN), jnp.float32)

    out = lstm_model_forward(x, params)
    out = jax.block_until_ready(out)

    ref = lstm_model_ref(x, params)
    assert out.shape == (B, 4), out.shape
    assert jnp.allclose(out, ref, atol=1e-4, rtol=1e-4), (out, ref)

    print("KERNEL_OK")
</pallas_src>

<mosaic_0001>
module attributes {stable_mosaic.version = 11 : i64} {
  func.func @fused_lstm_fc_kernel(%arg0: memref<8x2x1xf32, #tpu.memory_space<vmem>>, %arg1: memref<1x512xf32, #tpu.memory_space<vmem>>, %arg2: memref<128x512xf32, #tpu.memory_space<vmem>>, %arg3: memref<1x512xf32, #tpu.memory_space<vmem>>, %arg4: memref<256x512xf32, #tpu.memory_space<any>>, %arg5: memref<1x512xf32, #tpu.memory_space<vmem>>, %arg6: memref<128x4xf32, #tpu.memory_space<vmem>>, %arg7: memref<1x4xf32, #tpu.memory_space<vmem>>, %arg8: memref<2x4xf32, #tpu.memory_space<vmem>>, %arg9: memref<256x512xf32, #tpu.memory_space<vmem>>, %arg10: memref<!tpu.dma_semaphore, #tpu.memory_space<semaphore_mem>>) attributes {dimension_semantics = [], scalar_prefetch = 0 : i64, scratch_operands = 2 : i64, tpu.core_type = #tpu.core_type<tc>} {
    tpu.enqueue_dma source(%arg4 : memref<256x512xf32, #tpu.memory_space<any>>) target(%arg9 : memref<256x512xf32, #tpu.memory_space<vmem>>) target_semaphore(%arg10 : memref<!tpu.dma_semaphore, #tpu.memory_space<semaphore_mem>>)
    %cst = arith.constant 0.000000e+00 : f32
    %0 = vector.broadcast %cst : f32 to vector<2x128xf32>
    %cst_0 = arith.constant 0.000000e+00 : f32
    %1 = vector.broadcast %cst_0 : f32 to vector<2x128xf32>
    %cst_1 = arith.constant 0.000000e+00 : f32
    %2 = vector.broadcast %cst_1 : f32 to vector<2x128xf32>
    %cst_2 = arith.constant 0.000000e+00 : f32
    %3 = vector.broadcast %cst_2 : f32 to vector<2x128xf32>
    %c0 = arith.constant 0 : index
    %c0_3 = arith.constant 0 : index
    %c0_4 = arith.constant 0 : index
    %4 = vector.load %arg0[%c0, %c0_3, %c0_4] : memref<8x2x1xf32, #tpu.memory_space<vmem>>, vector<1x2x1xf32>
    %5 = vector.shape_cast %4 : vector<1x2x1xf32> to vector<2x1xf32>
    %c0_5 = arith.constant 0 : index
    %c0_6 = arith.constant 0 : index
    %6 = vector.load %arg1[%c0_5, %c0_6] : memref<1x512xf32, #tpu.memory_space<vmem>>, vector<1x512xf32>
    %7 = vector.broadcast %5 : vector<2x1xf32> to vector<2x512xf32>
    %8 = vector.broadcast %6 : vector<1x512xf32> to vector<2x512xf32>
    %9 = arith.mulf %7, %8 : vector<2x512xf32>
    %c0_7 = arith.constant 0 : index
    %c0_8 = arith.constant 0 : index
    %10 = vector.load %arg3[%c0_7, %c0_8] : memref<1x512xf32, #tpu.memory_space<vmem>>, vector<1x512xf32>
    %11 = vector.broadcast %10 : vector<1x512xf32> to vector<2x512xf32>
    %12 = arith.addf %9, %11 : vector<2x512xf32>
    %c0_9 = arith.constant 0 : index
    %c0_10 = arith.constant 0 : index
    %13 = vector.load %arg2[%c0_9, %c0_10] : memref<128x512xf32, #tpu.memory_space<vmem>>, vector<128x512xf32>
    %cst_11 = arith.constant dense<0.000000e+00> : vector<2x512xf32>
    %14 = tpu.matmul %0, %13, %cst_11 {dimension_numbers = #tpu.dot_dimension_numbers<[1], [0], [0], [1], [0, 0, 1, 1], [], []>} : vector<2x128xf32>, vector<128x512xf32>, vector<2x512xf32> -> vector<2x512xf32>
    %15 = arith.addf %12, %14 : vector<2x512xf32>
    %16 = vector.extract_strided_slice %15 {offsets = [0, 0], sizes = [2, 384], strides = [1, 1]} : vector<2x512xf32> to vector<2x384xf32>
    %17 = arith.negf %16 : vector<2x384xf32>
    %18 = math.exp %17 : vector<2x384xf32>
    %cst_12 = arith.constant 1.000000e+00 : f32
    %19 = vector.broadcast %cst_12 : f32 to vector<2x384xf32>
    %20 = arith.addf %19, %18 : vector<2x384xf32>
    %21 = arith.divf %19, %20 : vector<2x384xf32>
    %22 = vector.extract_strided_slice %21 {offsets = [0, 0], sizes = [2, 128], strides = [1, 1]} : vector<2x384xf32> to vector<2x128xf32>
    %23 = vector.extract_strided_slice %21 {offsets = [0, 128], sizes = [2, 128], strides = [1, 1]} : vector<2x384xf32> to vector<2x128xf32>
    %24 = vector.extract_strided_slice %21 {offsets = [0, 256], sizes = [2, 128], strides = [1, 1]} : vector<2x384xf32> to vector<2x128xf32>
    %25 = vector.extract_strided_slice %15 {offsets = [0, 384], sizes = [2, 128], strides = [1, 1]} : vector<2x512xf32> to vector<2x128xf32>
    %26 = math.tanh %25 : vector<2x128xf32>
    %27 = arith.mulf %23, %1 : vector<2x128xf32>
    %28 = arith.mulf %22, %26 : vector<2x128xf32>
    %29 = arith.addf %27, %28 : vector<2x128xf32>
    %30 = math.tanh %29 : vector<2x128xf32>
    %31 = arith.mulf %24, %30 : vector<2x128xf32>
    tpu.wait_dma2 semaphore(%arg10 : memref<!tpu.dma_semaphore, #tpu.memory_space<semaphore_mem>>) src(%arg4 : memref<256x512xf32, #tpu.memory_space<any>>) dst(%arg9 : memref<256x512xf32, #tpu.memory_space<vmem>>)
    %c1 = arith.constant 1 : index
    %c0_13 = arith.constant 0 : index
    %c0_14 = arith.constant 0 : index
    %32 = vector.load %arg0[%c1, %c0_13, %c0_14] : memref<8x2x1xf32, #tpu.memory_space<vmem>>, vector<1x2x1xf32>
    %33 = vector.shape_cast %32 : vector<1x2x1xf32> to vector<2x1xf32>
    %c0_15 = arith.constant 0 : index
    %c0_16 = arith.constant 0 : index
    %34 = vector.load %arg1[%c0_15, %c0_16] : memref<1x512xf32, #tpu.memory_space<vmem>>, vector<1x512xf32>
    %35 = vector.broadcast %33 : vector<2x1xf32> to vector<2x512xf32>
    %36 = vector.broadcast %34 : vector<1x512xf32> to vector<2x512xf32>
    %37 = arith.mulf %35, %36 : vector<2x512xf32>
    %c0_17 = arith.constant 0 : index
    %c0_18 = arith.constant 0 : index
    %38 = vector.load %arg3[%c0_17, %c0_18] : memref<1x512xf32, #tpu.memory_space<vmem>>, vector<1x512xf32>
    %39 = vector.broadcast %38 : vector<1x512xf32> to vector<2x512xf32>
    %40 = arith.addf %37, %39 : vector<2x512xf32>
    %c0_19 = arith.constant 0 : index
    %c0_20 = arith.constant 0 : index
    %41 = vector.load %arg2[%c0_19, %c0_20] : memref<128x512xf32, #tpu.memory_space<vmem>>, vector<128x512xf32>
    %cst_21 = arith.constant dense<0.000000e+00> : vector<2x512xf32>
    %42 = tpu.matmul %31, %41, %cst_21 {dimension_numbers = #tpu.dot_dimension_numbers<[1], [0], [0], [1], [0, 0, 1, 1], [], []>} : vector<2x128xf32>, vector<128x512xf32>, vector<2x512xf32> -> vector<2x512xf32>
    %43 = arith.addf %40, %42 : vector<2x512xf32>
    %44 = vector.extract_strided_slice %43 {offsets = [0, 0], sizes = [2, 384], strides = [1, 1]} : vector<2x512xf32> to vector<2x384xf32>
    %45 = arith.negf %44 : vector<2x384xf32>
    %46 = math.exp %45 : vector<2x384xf32>
    %cst_22 = arith.constant 1.000000e+00 : f32
    %47 = vector.broadcast %cst_22 : f32 to vector<2x384xf32>
    %48 = arith.addf %47, %46 : vector<2x384xf32>
    %49 = arith.divf %47, %48 : vector<2x384xf32>
    %50 = vector.extract_strided_slice %49 {offsets = [0, 0], sizes = [2, 128], strides = [1, 1]} : vector<2x384xf32> to vector<2x128xf32>
    %51 = vector.extract_strided_slice %49 {offsets = [0, 128], sizes = [2, 128], strides = [1, 1]} : vector<2x384xf32> to vector<2x128xf32>
    %52 = vector.extract_strided_slice %49 {offsets = [0, 256], sizes = [2, 128], strides = [1, 1]} : vector<2x384xf32> to vector<2x128xf32>
    %53 = vector.extract_strided_slice %43 {offsets = [0, 384], sizes = [2, 128], strides = [1, 1]} : vector<2x512xf32> to vector<2x128xf32>
    %54 = math.tanh %53 : vector<2x128xf32>
    %55 = arith.mulf %51, %29 : vector<2x128xf32>
    %56 = arith.mulf %50, %54 : vector<2x128xf32>
    %57 = arith.addf %55, %56 : vector<2x128xf32>
    %58 = math.tanh %57 : vector<2x128xf32>
    %59 = arith.mulf %52, %58 : vector<2x128xf32>
    %60 = tpu.concatenate %31, %2 in 1 : vector<2x128xf32>, vector<2x128xf32> -> vector<2x256xf32>
    %c0_23 = arith.constant 0 : index
    %c0_24 = arith.constant 0 : index
    %61 = vector.load %arg9[%c0_23, %c0_24] : memref<256x512xf32, #tpu.memory_space<vmem>>, vector<256x512xf32>
    %cst_25 = arith.constant dense<0.000000e+00> : vector<2x512xf32>
    %62 = tpu.matmul %60, %61, %cst_25 {dimension_numbers = #tpu.dot_dimension_numbers<[1], [0], [0], [1], [0, 0, 1, 1], [], []>} : vector<2x256xf32>, vector<256x512xf32>, vector<2x512xf32> -> vector<2x512xf32>
    %c0_26 = arith.constant 0 : index
    %c0_27 = arith.constant 0 : index
    %63 = vector.load %arg5[%c0_26, %c0_27] : memref<1x512xf32, #tpu.memory_space<vmem>>, vector<1x512xf32>
    %64 = vector.broadcast %63 : vector<1x512xf32> to vector<2x512xf32>
    %65 = arith.addf %62, %64 : vector<2x512xf32>
    %66 = vector.extract_strided_slice %65 {offsets = [0, 0], sizes = [2, 384], strides = [1, 1]} : vector<2x512xf32> to vector<2x384xf32>
    %67 = arith.negf %66 : vector<2x384xf32>
    %68 = math.exp %67 : vector<2x384xf32>
    %cst_28 = arith.constant 1.000000e+00 : f32
    %69 = vector.broadcast %cst_28 : f32 to vector<2x384xf32>
    %70 = arith.addf %69, %68 : vector<2x384xf32>
    %71 = arith.divf %69, %70 : vector<2x384xf32>
    %72 = vector.extract_strided_slice %71 {offsets = [0, 0], sizes = [2, 128], strides = [1, 1]} : vector<2x384xf32> to vector<2x128xf32>
    %73 = vector.extract_strided_slice %71 {offsets = [0, 128], sizes = [2, 128], strides = [1, 1]} : vector<2x384xf32> to vector<2x128xf32>
    %74 = vector.extract_strided_slice %71 {offsets = [0, 256], sizes = [2, 128], strides = [1, 1]} : vector<2x384xf32> to vector<2x128xf32>
    %75 = vector.extract_strided_slice %65 {offsets = [0, 384], sizes = [2, 128], strides = [1, 1]} : vector<2x512xf32> to vector<2x128xf32>
    %76 = math.tanh %75 : vector<2x128xf32>
    %77 = arith.mulf %73, %3 : vector<2x128xf32>
    %78 = arith.mulf %72, %76 : vector<2x128xf32>
    %79 = arith.addf %77, %78 : vector<2x128xf32>
    %80 = math.tanh %79 : vector<2x128xf32>
    %81 = arith.mulf %74, %80 : vector<2x128xf32>
    %c2 = arith.constant 2 : index
    %c0_29 = arith.constant 0 : index
    %c0_30 = arith.constant 0 : index
    %82 = vector.load %arg0[%c2, %c0_29, %c0_30] : memref<8x2x1xf32, #tpu.memory_space<vmem>>, vector<1x2x1xf32>
    %83 = vector.shape_cast %82 : vector<1x2x1xf32> to vector<2x1xf32>
    %c0_31 = arith.constant 0 : index
    %c0_32 = arith.constant 0 : index
    %84 = vector.load %arg1[%c0_31, %c0_32] : memref<1x512xf32, #tpu.memory_space<vmem>>, vector<1x512xf32>
    %85 = vector.broadcast %83 : vector<2x1xf32> to vector<2x512xf32>
    %86 = vector.broadcast %84 : vector<1x512xf32> to vector<2x512xf32>
    %87 = arith.mulf %85, %86 : vector<2x512xf32>
    %c0_33 = arith.constant 0 : index
    %c0_34 = arith.constant 0 : index
    %88 = vector.load %arg3[%c0_33, %c0_34] : memref<1x512xf32, #tpu.memory_space<vmem>>, vector<1x512xf32>
    %89 = vector.broadcast %88 : vector<1x512xf32> to vector<2x512xf32>
    %90 = arith.addf %87, %89 : vector<2x512xf32>
    %c0_35 = arith.constant 0 : index
    %c0_36 = arith.constant 0 : index
    %91 = vector.load %arg2[%c0_35, %c0_36] : memref<128x512xf32, #tpu.memory_space<vmem>>, vector<128x512xf32>
    %cst_37 = arith.constant dense<0.000000e+00> : vector<2x512xf32>
    %92 = tpu.matmul %59, %91, %cst_37 {dimension_numbers = #tpu.dot_dimension_numbers<[1], [0], [0], [1], [0, 0, 1, 1], [], []>} : vector<2x128xf32>, vector<128x512xf32>, vector<2x512xf32> -> vector<2x512xf32>
    %93 = arith.addf %90, %92 : vector<2x512xf32>
    %94 = vector.extract_strided_slice %93 {offsets = [0, 0], sizes = [2, 384], strides = [1, 1]} : vector<2x512xf32> to vector<2x384xf32>
    %95 = arith.negf %94 : vector<2x384xf32>
    %96 = math.exp %95 : vector<2x384xf32>
    %cst_38 = arith.constant 1.000000e+00 : f32
    %97 = vector.broadcast %cst_38 : f32 to vector<2x384xf32>
    %98 = arith.addf %97, %96 : vector<2x384xf32>
    %99 = arith.divf %97, %98 : vector<2x384xf32>
    %100 = vector.extract_strided_slice %99 {offsets = [0, 0], sizes = [2, 128], strides = [1, 1]} : vector<2x384xf32> to vector<2x128xf32>
    %101 = vector.extract_strided_slice %99 {offsets = [0, 128], sizes = [2, 128], strides = [1, 1]} : vector<2x384xf32> to vector<2x128xf32>
    %102 = vector.extract_strided_slice %99 {offsets = [0, 256], sizes = [2, 128], strides = [1, 1]} : vector<2x384xf32> to vector<2x128xf32>
    %103 = vector.extract_strided_slice %93 {offsets = [0, 384], sizes = [2, 128], strides = [1, 1]} : vector<2x512xf32> to vector<2x128xf32>
    %104 = math.tanh %103 : vector<2x128xf32>
    %105 = arith.mulf %101, %57 : vector<2x128xf32>
    %106 = arith.mulf %100, %104 : vector<2x128xf32>
    %107 = arith.addf %105, %106 : vector<2x128xf32>
    %108 = math.tanh %107 : vector<2x128xf32>
    %109 = arith.mulf %102, %108 : vector<2x128xf32>
    %110 = tpu.concatenate %59, %81 in 1 : vector<2x128xf32>, vector<2x128xf32> -> vector<2x256xf32>
    %c0_39 = arith.constant 0 : index
    %c0_40 = arith.constant 0 : index
    %111 = vector.load %arg9[%c0_39, %c0_40] : memref<256x512xf32, #tpu.memory_space<vmem>>, vector<256x512xf32>
    %cst_41 = arith.constant dense<0.000000e+00> : vector<2x512xf32>
    %112 = tpu.matmul %110, %111, %cst_41 {dimension_numbers = #tpu.dot_dimension_numbers<[1], [0], [0], [1], [0, 0, 1, 1], [], []>} : vector<2x256xf32>, vector<256x512xf32>, vector<2x512xf32> -> vector<2x512xf32>
    %c0_42 = arith.constant 0 : index
    %c0_43 = arith.constant 0 : index
    %113 = vector.load %arg5[%c0_42, %c0_43] : memref<1x512xf32, #tpu.memory_space<vmem>>, vector<1x512xf32>
    %114 = vector.broadcast %113 : vector<1x512xf32> to vector<2x512xf32>
    %115 = arith.addf %112, %114 : vector<2x512xf32>
    %116 = vector.extract_strided_slice %115 {offsets = [0, 0], sizes = [2, 384], strides = [1, 1]} : vector<2x512xf32> to vector<2x384xf32>
    %117 = arith.negf %116 : vector<2x384xf32>
    %118 = math.exp %117 : vector<2x384xf32>
    %cst_44 = arith.constant 1.000000e+00 : f32
    %119 = vector.broadcast %cst_44 : f32 to vector<2x384xf32>
    %120 = arith.addf %119, %118 : vector<2x384xf32>
    %121 = arith.divf %119, %120 : vector<2x384xf32>
    %122 = vector.extract_strided_slice %121 {offsets = [0, 0], sizes = [2, 128], strides = [1, 1]} : vector<2x384xf32> to vector<2x128xf32>
    %123 = vector.extract_strided_slice %121 {offsets = [0, 128], sizes = [2, 128], strides = [1, 1]} : vector<2x384xf32> to vector<2x128xf32>
    %124 = vector.extract_strided_slice %121 {offsets = [0, 256], sizes = [2, 128], strides = [1, 1]} : vector<2x384xf32> to vector<2x128xf32>
    %125 = vector.extract_strided_slice %115 {offsets = [0, 384], sizes = [2, 128], strides = [1, 1]} : vector<2x512xf32> to vector<2x128xf32>
    %126 = math.tanh %125 : vector<2x128xf32>
    %127 = arith.mulf %123, %79 : vector<2x128xf32>
    %128 = arith.mulf %122, %126 : vector<2x128xf32>
    %129 = arith.addf %127, %128 : vector<2x128xf32>
    %130 = math.tanh %129 : vector<2x128xf32>
    %131 = arith.mulf %124, %130 : vector<2x128xf32>
    %c3 = arith.constant 3 : index
    %c0_45 = arith.constant 0 : index
    %c0_46 = arith.constant 0 : index
    %132 = vector.load %arg0[%c3, %c0_45, %c0_46] : memref<8x2x1xf32, #tpu.memory_space<vmem>>, vector<1x2x1xf32>
    %133 = vector.shape_cast %132 : vector<1x2x1xf32> to vector<2x1xf32>
    %c0_47 = arith.constant 0 : index
    %c0_48 = arith.constant 0 : index
    %134 = vector.load %arg1[%c0_47, %c0_48] : memref<1x512xf32, #tpu.memory_space<vmem>>, vector<1x512xf32>
    %135 = vector.broadcast %133 : vector<2x1xf32> to vector<2x512xf32>
    %136 = vector.broadcast %134 : vector<1x512xf32> to vector<2x512xf32>
    %137 = arith.mulf %135, %136 : vector<2x512xf32>
    %c0_49 = arith.constant 0 : index
    %c0_50 = arith.constant 0 : index
    %138 = vector.load %arg3[%c0_49, %c0_50] : memref<1x512xf32, #tpu.memory_space<vmem>>, vector<1x512xf32>
    %139 = vector.broadcast %138 : vector<1x512xf32> to vector<2x512xf32>
    %140 = arith.addf %137, %139 : vector<2x512xf32>
    %c0_51 = arith.constant 0 : index
    %c0_52 = arith.constant 0 : index
    %141 = vector.load %arg2[%c0_51, %c0_52] : memref<128x512xf32, #tpu.memory_space<vmem>>, vector<128x512xf32>
    %cst_53 = arith.constant dense<0.000000e+00> : vector<2x512xf32>
    %142 = tpu.matmul %109, %141, %cst_53 {dimension_numbers = #tpu.dot_dimension_numbers<[1], [0], [0], [1], [0, 0, 1, 1], [], []>} : vector<2x128xf32>, vector<128x512xf32>, vector<2x512xf32> -> vector<2x512xf32>
    %143 = arith.addf %140, %142 : vector<2x512xf32>
    %144 = vector.extract_strided_slice %143 {offsets = [0, 0], sizes = [2, 384], strides = [1, 1]} : vector<2x512xf32> to vector<2x384xf32>
    %145 = arith.negf %144 : vector<2x384xf32>
    %146 = math.exp %145 : vector<2x384xf32>
    %cst_54 = arith.constant 1.000000e+00 : f32
    %147 = vector.broadcast %cst_54 : f32 to vector<2x384xf32>
    %148 = arith.addf %147, %146 : vector<2x384xf32>
    %149 = arith.divf %147, %148 : vector<2x384xf32>
    %150 = vector.extract_strided_slice %149 {offsets = [0, 0], sizes = [2, 128], strides = [1, 1]} : vector<2x384xf32> to vector<2x128xf32>
    %151 = vector.extract_strided_slice %149 {offsets = [0, 128], sizes = [2, 128], strides = [1, 1]} : vector<2x384xf32> to vector<2x128xf32>
    %152 = vector.extract_strided_slice %149 {offsets = [0, 256], sizes = [2, 128], strides = [1, 1]} : vector<2x384xf32> to vector<2x128xf32>
    %153 = vector.extract_strided_slice %143 {offsets = [0, 384], sizes = [2, 128], strides = [1, 1]} : vector<2x512xf32> to vector<2x128xf32>
    %154 = math.tanh %153 : vector<2x128xf32>
    %155 = arith.mulf %151, %107 : vector<2x128xf32>
    %156 = arith.mulf %150, %154 : vector<2x128xf32>
    %157 = arith.addf %155, %156 : vector<2x128xf32>
    %158 = math.tanh %157 : vector<2x128xf32>
    %159 = arith.mulf %152, %158 : vector<2x128xf32>
    %160 = tpu.concatenate %109, %131 in 1 : vector<2x128xf32>, vector<2x128xf32> -> vector<2x256xf32>
    %c0_55 = arith.constant 0 : index
    %c0_56 = arith.constant 0 : index
    %161 = vector.load %arg9[%c0_55, %c0_56] : memref<256x512xf32, #tpu.memory_space<vmem>>, vector<256x512xf32>
    %cst_57 = arith.constant dense<0.000000e+00> : vector<2x512xf32>
    %162 = tpu.matmul %160, %161, %cst_57 {dimension_numbers = #tpu.dot_dimension_numbers<[1], [0], [0], [1], [0, 0, 1, 1], [], []>} : vector<2x256xf32>, vector<256x512xf32>, vector<2x512xf32> -> vector<2x512xf32>
    %c0_58 = arith.constant 0 : index
    %c0_59 = arith.constant 0 : index
    %163 = vector.load %arg5[%c0_58, %c0_59] : memref<1x512xf32, #tpu.memory_space<vmem>>, vector<1x512xf32>
    %164 = vector.broadcast %163 : vector<1x512xf32> to vector<2x512xf32>
    %165 = arith.addf %162, %164 : vector<2x512xf32>
    %166 = vector.extract_strided_slice %165 {offsets = [0, 0], sizes = [2, 384], strides = [1, 1]} : vector<2x512xf32> to vector<2x384xf32>
    %167 = arith.negf %166 : vector<2x384xf32>
    %168 = math.exp %167 : vector<2x384xf32>
    %cst_60 = arith.constant 1.000000e+00 : f32
    %169 = vector.broadcast %cst_60 : f32 to vector<2x384xf32>
    %170 = arith.addf %169, %168 : vector<2x384xf32>
    %171 = arith.divf %169, %170 : vector<2x384xf32>
    %172 = vector.extract_strided_slice %171 {offsets = [0, 0], sizes = [2, 128], strides = [1, 1]} : vector<2x384xf32> to vector<2x128xf32>
    %173 = vector.extract_strided_slice %171 {offsets = [0, 128], sizes = [2, 128], strides = [1, 1]} : vector<2x384xf32> to vector<2x128xf32>
    %174 = vector.extract_strided_slice %171 {offsets = [0, 256], sizes = [2, 128], strides = [1, 1]} : vector<2x384xf32> to vector<2x128xf32>
    %175 = vector.extract_strided_slice %165 {offsets = [0, 384], sizes = [2, 128], strides = [1, 1]} : vector<2x512xf32> to vector<2x128xf32>
    %176 = math.tanh %175 : vector<2x128xf32>
    %177 = arith.mulf %173, %129 : vector<2x128xf32>
    %178 = arith.mulf %172, %176 : vector<2x128xf32>
    %179 = arith.addf %177, %178 : vector<2x128xf32>
    %180 = math.tanh %179 : vector<2x128xf32>
    %181 = arith.mulf %174, %180 : vector<2x128xf32>
    %c4 = arith.constant 4 : index
    %c0_61 = arith.constant 0 : index
    %c0_62 = arith.constant 0 : index
    %182 = vector.load %arg0[%c4, %c0_61, %c0_62] : memref<8x2x1xf32, #tpu.memory_space<vmem>>, vector<1x2x1xf32>
    %183 = vector.shape_cast %182 : vector<1x2x1xf32> to vector<2x1xf32>
    %c0_63 = arith.constant 0 : index
    %c0_64 = arith.constant 0 : index
    %184 = vector.load %arg1[%c0_63, %c0_64] : memref<1x512xf32, #tpu.memory_space<vmem>>, vector<1x512xf32>
    %185 = vector.broadcast %183 : vector<2x1xf32> to vector<2x512xf32>
    %186 = vector.broadcast %184 : vector<1x512xf32> to vector<2x512xf32>
    %187 = arith.mulf %185, %186 : vector<2x512xf32>
    %c0_65 = arith.constant 0 : index
    %c0_66 = arith.constant 0 : index
    %188 = vector.load %arg3[%c0_65, %c0_66] : memref<1x512xf32, #tpu.memory_space<vmem>>, vector<1x512xf32>
    %189 = vector.broadcast %188 : vector<1x512xf32> to vector<2x512xf32>
    %190 = arith.addf %187, %189 : vector<2x512xf32>
    %c0_67 = arith.constant 0 : index
    %c0_68 = arith.constant 0 : index
    %191 = vector.load %arg2[%c0_67, %c0_68] : memref<128x512xf32, #tpu.memory_space<vmem>>, vector<128x512xf32>
    %cst_69 = arith.constant dense<0.000000e+00> : vector<2x512xf32>
    %192 = tpu.matmul %159, %191, %cst_69 {dimension_numbers = #tpu.dot_dimension_numbers<[1], [0], [0], [1], [0, 0, 1, 1], [], []>} : vector<2x128xf32>, vector<128x512xf32>, vector<2x512xf32> -> vector<2x512xf32>
    %193 = arith.addf %190, %192 : vector<2x512xf32>
    %194 = vector.extract_strided_slice %193 {offsets = [0, 0], sizes = [2, 384], strides = [1, 1]} : vector<2x512xf32> to vector<2x384xf32>
    %195 = arith.negf %194 : vector<2x384xf32>
    %196 = math.exp %195 : vector<2x384xf32>
    %cst_70 = arith.constant 1.000000e+00 : f32
    %197 = vector.broadcast %cst_70 : f32 to vector<2x384xf32>
    %198 = arith.addf %197, %196 : vector<2x384xf32>
    %199 = arith.divf %197, %198 : vector<2x384xf32>
    %200 = vector.extract_strided_slice %199 {offsets = [0, 0], sizes = [2, 128], strides = [1, 1]} : vector<2x384xf32> to vector<2x128xf32>
    %201 = vector.extract_strided_slice %199 {offsets = [0, 128], sizes = [2, 128], strides = [1, 1]} : vector<2x384xf32> to vector<2x128xf32>
    %202 = vector.extract_strided_slice %199 {offsets = [0, 256], sizes = [2, 128], strides = [1, 1]} : vector<2x384xf32> to vector<2x128xf32>
    %203 = vector.extract_strided_slice %193 {offsets = [0, 384], sizes = [2, 128], strides = [1, 1]} : vector<2x512xf32> to vector<2x128xf32>
    %204 = math.tanh %203 : vector<2x128xf32>
    %205 = arith.mulf %201, %157 : vector<2x128xf32>
    %206 = arith.mulf %200, %204 : vector<2x128xf32>
    %207 = arith.addf %205, %206 : vector<2x128xf32>
    %208 = math.tanh %207 : vector<2x128xf32>
    %209 = arith.mulf %202, %208 : vector<2x128xf32>
    %210 = tpu.concatenate %159, %181 in 1 : vector<2x128xf32>, vector<2x128xf32> -> vector<2x256xf32>
    %c0_71 = arith.constant 0 : index
    %c0_72 = arith.constant 0 : index
    %211 = vector.load %arg9[%c0_71, %c0_72] : memref<256x512xf32, #tpu.memory_space<vmem>>, vector<256x512xf32>
    %cst_73 = arith.constant dense<0.000000e+00> : vector<2x512xf32>
    %212 = tpu.matmul %210, %211, %cst_73 {dimension_numbers = #tpu.dot_dimension_numbers<[1], [0], [0], [1], [0, 0, 1, 1], [], []>} : vector<2x256xf32>, vector<256x512xf32>, vector<2x512xf32> -> vector<2x512xf32>
    %c0_74 = arith.constant 0 : index
    %c0_75 = arith.constant 0 : index
    %213 = vector.load %arg5[%c0_74, %c0_75] : memref<1x512xf32, #tpu.memory_space<vmem>>, vector<1x512xf32>
    %214 = vector.broadcast %213 : vector<1x512xf32> to vector<2x512xf32>
    %215 = arith.addf %212, %214 : vector<2x512xf32>
    %216 = vector.extract_strided_slice %215 {offsets = [0, 0], sizes = [2, 384], strides = [1, 1]} : vector<2x512xf32> to vector<2x384xf32>
    %217 = arith.negf %216 : vector<2x384xf32>
    %218 = math.exp %217 : vector<2x384xf32>
    %cst_76 = arith.constant 1.000000e+00 : f32
    %219 = vector.broadcast %cst_76 : f32 to vector<2x384xf32>
    %220 = arith.addf %219, %218 : vector<2x384xf32>
    %221 = arith.divf %219, %220 : vector<2x384xf32>
    %222 = vector.extract_strided_slice %221 {offsets = [0, 0], sizes = [2, 128], strides = [1, 1]} : vector<2x384xf32> to vector<2x128xf32>
    %223 = vector.extract_strided_slice %221 {offsets = [0, 128], sizes = [2, 128], strides = [1, 1]} : vector<2x384xf32> to vector<2x128xf32>
    %224 = vector.extract_strided_slice %221 {offsets = [0, 256], sizes = [2, 128], strides = [1, 1]} : vector<2x384xf32> to vector<2x128xf32>
    %225 = vector.extract_strided_slice %215 {offsets = [0, 384], sizes = [2, 128], strides = [1, 1]} : vector<2x512xf32> to vector<2x128xf32>
    %226 = math.tanh %225 : vector<2x128xf32>
    %227 = arith.mulf %223, %179 : vector<2x128xf32>
    %228 = arith.mulf %222, %226 : vector<2x128xf32>
    %229 = arith.addf %227, %228 : vector<2x128xf32>
    %230 = math.tanh %229 : vector<2x128xf32>
    %231 = arith.mulf %224, %230 : vector<2x128xf32>
    %c5 = arith.constant 5 : index
    %c0_77 = arith.constant 0 : index
    %c0_78 = arith.constant 0 : index
    %232 = vector.load %arg0[%c5, %c0_77, %c0_78] : memref<8x2x1xf32, #tpu.memory_space<vmem>>, vector<1x2x1xf32>
    %233 = vector.shape_cast %232 : vector<1x2x1xf32> to vector<2x1xf32>
    %c0_79 = arith.constant 0 : index
    %c0_80 = arith.constant 0 : index
    %234 = vector.load %arg1[%c0_79, %c0_80] : memref<1x512xf32, #tpu.memory_space<vmem>>, vector<1x512xf32>
    %235 = vector.broadcast %233 : vector<2x1xf32> to vector<2x512xf32>
    %236 = vector.broadcast %234 : vector<1x512xf32> to vector<2x512xf32>
    %237 = arith.mulf %235, %236 : vector<2x512xf32>
    %c0_81 = arith.constant 0 : index
    %c0_82 = arith.constant 0 : index
    %238 = vector.load %arg3[%c0_81, %c0_82] : memref<1x512xf32, #tpu.memory_space<vmem>>, vector<1x512xf32>
    %239 = vector.broadcast %238 : vector<1x512xf32> to vector<2x512xf32>
    %240 = arith.addf %237, %239 : vector<2x512xf32>
    %c0_83 = arith.constant 0 : index
    %c0_84 = arith.constant 0 : index
    %241 = vector.load %arg2[%c0_83, %c0_84] : memref<128x512xf32, #tpu.memory_space<vmem>>, vector<128x512xf32>
    %cst_85 = arith.constant dense<0.000000e+00> : vector<2x512xf32>
    %242 = tpu.matmul %209, %241, %cst_85 {dimension_numbers = #tpu.dot_dimension_numbers<[1], [0], [0], [1], [0, 0, 1, 1], [], []>} : vector<2x128xf32>, vector<128x512xf32>, vector<2x512xf32> -> vector<2x512xf32>
    %243 = arith.addf %240, %242 : vector<2x512xf32>
    %244 = vector.extract_strided_slice %243 {offsets = [0, 0], sizes = [2, 384], strides = [1, 1]} : vector<2x512xf32> to vector<2x384xf32>
    %245 = arith.negf %244 : vector<2x384xf32>
    %246 = math.exp %245 : vector<2x384xf32>
    %cst_86 = arith.constant 1.000000e+00 : f32
    %247 = vector.broadcast %cst_86 : f32 to vector<2x384xf32>
    %248 = arith.addf %247, %246 : vector<2x384xf32>
    %249 = arith.divf %247, %248 : vector<2x384xf32>
    %250 = vector.extract_strided_slice %249 {offsets = [0, 0], sizes = [2, 128], strides = [1, 1]} : vector<2x384xf32> to vector<2x128xf32>
    %251 = vector.extract_strided_slice %249 {offsets = [0, 128], sizes = [2, 128], strides = [1, 1]} : vector<2x384xf32> to vector<2x128xf32>
    %252 = vector.extract_strided_slice %249 {offsets = [0, 256], sizes = [2, 128], strides = [1, 1]} : vector<2x384xf32> to vector<2x128xf32>
    %253 = vector.extract_strided_slice %243 {offsets = [0, 384], sizes = [2, 128], strides = [1, 1]} : vector<2x512xf32> to vector<2x128xf32>
    %254 = math.tanh %253 : vector<2x128xf32>
    %255 = arith.mulf %251, %207 : vector<2x128xf32>
    %256 = arith.mulf %250, %254 : vector<2x128xf32>
    %257 = arith.addf %255, %256 : vector<2x128xf32>
    %258 = math.tanh %257 : vector<2x128xf32>
    %259 = arith.mulf %252, %258 : vector<2x128xf32>
    %260 = tpu.concatenate %209, %231 in 1 : vector<2x128xf32>, vector<2x128xf32> -> vector<2x256xf32>
    %c0_87 = arith.constant 0 : index
    %c0_88 = arith.constant 0 : index
    %261 = vector.load %arg9[%c0_87, %c0_88] : memref<256x512xf32, #tpu.memory_space<vmem>>, vector<256x512xf32>
    %cst_89 = arith.constant dense<0.000000e+00> : vector<2x512xf32>
    %262 = tpu.matmul %260, %261, %cst_89 {dimension_numbers = #tpu.dot_dimension_numbers<[1], [0], [0], [1], [0, 0, 1, 1], [], []>} : vector<2x256xf32>, vector<256x512xf32>, vector<2x512xf32> -> vector<2x512xf32>
    %c0_90 = arith.constant 0 : index
    %c0_91 = arith.constant 0 : index
    %263 = vector.load %arg5[%c0_90, %c0_91] : memref<1x512xf32, #tpu.memory_space<vmem>>, vector<1x512xf32>
    %264 = vector.broadcast %263 : vector<1x512xf32> to vector<2x512xf32>
    %265 = arith.addf %262, %264 : vector<2x512xf32>
    %266 = vector.extract_strided_slice %265 {offsets = [0, 0], sizes = [2, 384], strides = [1, 1]} : vector<2x512xf32> to vector<2x384xf32>
    %267 = arith.negf %266 : vector<2x384xf32>
    %268 = math.exp %267 : vector<2x384xf32>
    %cst_92 = arith.constant 1.000000e+00 : f32
    %269 = vector.broadcast %cst_92 : f32 to vector<2x384xf32>
    %270 = arith.addf %269, %268 : vector<2x384xf32>
    %271 = arith.divf %269, %270 : vector<2x384xf32>
    %272 = vector.extract_strided_slice %271 {offsets = [0, 0], sizes = [2, 128], strides = [1, 1]} : vector<2x384xf32> to vector<2x128xf32>
    %273 = vector.extract_strided_slice %271 {offsets = [0, 128], sizes = [2, 128], strides = [1, 1]} : vector<2x384xf32> to vector<2x128xf32>
    %274 = vector.extract_strided_slice %271 {offsets = [0, 256], sizes = [2, 128], strides = [1, 1]} : vector<2x384xf32> to vector<2x128xf32>
    %275 = vector.extract_strided_slice %265 {offsets = [0, 384], sizes = [2, 128], strides = [1, 1]} : vector<2x512xf32> to vector<2x128xf32>
    %276 = math.tanh %275 : vector<2x128xf32>
    %277 = arith.mulf %273, %229 : vector<2x128xf32>
    %278 = arith.mulf %272, %276 : vector<2x128xf32>
    %279 = arith.addf %277, %278 : vector<2x128xf32>
    %280 = math.tanh %279 : vector<2x128xf32>
    %281 = arith.mulf %274, %280 : vector<2x128xf32>
    %c6 = arith.constant 6 : index
    %c0_93 = arith.constant 0 : index
    %c0_94 = arith.constant 0 : index
    %282 = vector.load %arg0[%c6, %c0_93, %c0_94] : memref<8x2x1xf32, #tpu.memory_space<vmem>>, vector<1x2x1xf32>
    %283 = vector.shape_cast %282 : vector<1x2x1xf32> to vector<2x1xf32>
    %c0_95 = arith.constant 0 : index
    %c0_96 = arith.constant 0 : index
    %284 = vector.load %arg1[%c0_95, %c0_96] : memref<1x512xf32, #tpu.memory_space<vmem>>, vector<1x512xf32>
    %285 = vector.broadcast %283 : vector<2x1xf32> to vector<2x512xf32>
    %286 = vector.broadcast %284 : vector<1x512xf32> to vector<2x512xf32>
    %287 = arith.mulf %285, %286 : vector<2x512xf32>
    %c0_97 = arith.constant 0 : index
    %c0_98 = arith.constant 0 : index
    %288 = vector.load %arg3[%c0_97, %c0_98] : memref<1x512xf32, #tpu.memory_space<vmem>>, vector<1x512xf32>
    %289 = vector.broadcast %288 : vector<1x512xf32> to vector<2x512xf32>
    %290 = arith.addf %287, %289 : vector<2x512xf32>
    %c0_99 = arith.constant 0 : index
    %c0_100 = arith.constant 0 : index
    %291 = vector.load %arg2[%c0_99, %c0_100] : memref<128x512xf32, #tpu.memory_space<vmem>>, vector<128x512xf32>
    %cst_101 = arith.constant dense<0.000000e+00> : vector<2x512xf32>
    %292 = tpu.matmul %259, %291, %cst_101 {dimension_numbers = #tpu.dot_dimension_numbers<[1], [0], [0], [1], [0, 0, 1, 1], [], []>} : vector<2x128xf32>, vector<128x512xf32>, vector<2x512xf32> -> vector<2x512xf32>
    %293 = arith.addf %290, %292 : vector<2x512xf32>
    %294 = vector.extract_strided_slice %293 {offsets = [0, 0], sizes = [2, 384], strides = [1, 1]} : vector<2x512xf32> to vector<2x384xf32>
    %295 = arith.negf %294 : vector<2x384xf32>
    %296 = math.exp %295 : vector<2x384xf32>
    %cst_102 = arith.constant 1.000000e+00 : f32
    %297 = vector.broadcast %cst_102 : f32 to vector<2x384xf32>
    %298 = arith.addf %297, %296 : vector<2x384xf32>
    %299 = arith.divf %297, %298 : vector<2x384xf32>
    %300 = vector.extract_strided_slice %299 {offsets = [0, 0], sizes = [2, 128], strides = [1, 1]} : vector<2x384xf32> to vector<2x128xf32>
    %301 = vector.extract_strided_slice %299 {offsets = [0, 128], sizes = [2, 128], strides = [1, 1]} : vector<2x384xf32> to vector<2x128xf32>
    %302 = vector.extract_strided_slice %299 {offsets = [0, 256], sizes = [2, 128], strides = [1, 1]} : vector<2x384xf32> to vector<2x128xf32>
    %303 = vector.extract_strided_slice %293 {offsets = [0, 384], sizes = [2, 128], strides = [1, 1]} : vector<2x512xf32> to vector<2x128xf32>
    %304 = math.tanh %303 : vector<2x128xf32>
    %305 = arith.mulf %301, %257 : vector<2x128xf32>
    %306 = arith.mulf %300, %304 : vector<2x128xf32>
    %307 = arith.addf %305, %306 : vector<2x128xf32>
    %308 = math.tanh %307 : vector<2x128xf32>
    %309 = arith.mulf %302, %308 : vector<2x128xf32>
    %310 = tpu.concatenate %259, %281 in 1 : vector<2x128xf32>, vector<2x128xf32> -> vector<2x256xf32>
    %c0_103 = arith.constant 0 : index
    %c0_104 = arith.constant 0 : index
    %311 = vector.load %arg9[%c0_103, %c0_104] : memref<256x512xf32, #tpu.memory_space<vmem>>, vector<256x512xf32>
    %cst_105 = arith.constant dense<0.000000e+00> : vector<2x512xf32>
    %312 = tpu.matmul %310, %311, %cst_105 {dimension_numbers = #tpu.dot_dimension_numbers<[1], [0], [0], [1], [0, 0, 1, 1], [], []>} : vector<2x256xf32>, vector<256x512xf32>, vector<2x512xf32> -> vector<2x512xf32>
    %c0_106 = arith.constant 0 : index
    %c0_107 = arith.constant 0 : index
    %313 = vector.load %arg5[%c0_106, %c0_107] : memref<1x512xf32, #tpu.memory_space<vmem>>, vector<1x512xf32>
    %314 = vector.broadcast %313 : vector<1x512xf32> to vector<2x512xf32>
    %315 = arith.addf %312, %314 : vector<2x512xf32>
    %316 = vector.extract_strided_slice %315 {offsets = [0, 0], sizes = [2, 384], strides = [1, 1]} : vector<2x512xf32> to vector<2x384xf32>
    %317 = arith.negf %316 : vector<2x384xf32>
    %318 = math.exp %317 : vector<2x384xf32>
    %cst_108 = arith.constant 1.000000e+00 : f32
    %319 = vector.broadcast %cst_108 : f32 to vector<2x384xf32>
    %320 = arith.addf %319, %318 : vector<2x384xf32>
    %321 = arith.divf %319, %320 : vector<2x384xf32>
    %322 = vector.extract_strided_slice %321 {offsets = [0, 0], sizes = [2, 128], strides = [1, 1]} : vector<2x384xf32> to vector<2x128xf32>
    %323 = vector.extract_strided_slice %321 {offsets = [0, 128], sizes = [2, 128], strides = [1, 1]} : vector<2x384xf32> to vector<2x128xf32>
    %324 = vector.extract_strided_slice %321 {offsets = [0, 256], sizes = [2, 128], strides = [1, 1]} : vector<2x384xf32> to vector<2x128xf32>
    %325 = vector.extract_strided_slice %315 {offsets = [0, 384], sizes = [2, 128], strides = [1, 1]} : vector<2x512xf32> to vector<2x128xf32>
    %326 = math.tanh %325 : vector<2x128xf32>
    %327 = arith.mulf %323, %279 : vector<2x128xf32>
    %328 = arith.mulf %322, %326 : vector<2x128xf32>
    %329 = arith.addf %327, %328 : vector<2x128xf32>
    %330 = math.tanh %329 : vector<2x128xf32>
    %331 = arith.mulf %324, %330 : vector<2x128xf32>
    %c7 = arith.constant 7 : index
    %c0_109 = arith.constant 0 : index
    %c0_110 = arith.constant 0 : index
    %332 = vector.load %arg0[%c7, %c0_109, %c0_110] : memref<8x2x1xf32, #tpu.memory_space<vmem>>, vector<1x2x1xf32>
    %333 = vector.shape_cast %332 : vector<1x2x1xf32> to vector<2x1xf32>
    %c0_111 = arith.constant 0 : index
    %c0_112 = arith.constant 0 : index
    %334 = vector.load %arg1[%c0_111, %c0_112] : memref<1x512xf32, #tpu.memory_space<vmem>>, vector<1x512xf32>
    %335 = vector.broadcast %333 : vector<2x1xf32> to vector<2x512xf32>
    %336 = vector.broadcast %334 : vector<1x512xf32> to vector<2x512xf32>
    %337 = arith.mulf %335, %336 : vector<2x512xf32>
    %c0_113 = arith.constant 0 : index
    %c0_114 = arith.constant 0 : index
    %338 = vector.load %arg3[%c0_113, %c0_114] : memref<1x512xf32, #tpu.memory_space<vmem>>, vector<1x512xf32>
    %339 = vector.broadcast %338 : vector<1x512xf32> to vector<2x512xf32>
    %340 = arith.addf %337, %339 : vector<2x512xf32>
    %c0_115 = arith.constant 0 : index
    %c0_116 = arith.constant 0 : index
    %341 = vector.load %arg2[%c0_115, %c0_116] : memref<128x512xf32, #tpu.memory_space<vmem>>, vector<128x512xf32>
    %cst_117 = arith.constant dense<0.000000e+00> : vector<2x512xf32>
    %342 = tpu.matmul %309, %341, %cst_117 {dimension_numbers = #tpu.dot_dimension_numbers<[1], [0], [0], [1], [0, 0, 1, 1], [], []>} : vector<2x128xf32>, vector<128x512xf32>, vector<2x512xf32> -> vector<2x512xf32>
    %343 = arith.addf %340, %342 : vector<2x512xf32>
    %344 = vector.extract_strided_slice %343 {offsets = [0, 0], sizes = [2, 384], strides = [1, 1]} : vector<2x512xf32> to vector<2x384xf32>
    %345 = arith.negf %344 : vector<2x384xf32>
    %346 = math.exp %345 : vector<2x384xf32>
    %cst_118 = arith.constant 1.000000e+00 : f32
    %347 = vector.broadcast %cst_118 : f32 to vector<2x384xf32>
    %348 = arith.addf %347, %346 : vector<2x384xf32>
    %349 = arith.divf %347, %348 : vector<2x384xf32>
    %350 = vector.extract_strided_slice %349 {offsets = [0, 0], sizes = [2, 128], strides = [1, 1]} : vector<2x384xf32> to vector<2x128xf32>
    %351 = vector.extract_strided_slice %349 {offsets = [0, 128], sizes = [2, 128], strides = [1, 1]} : vector<2x384xf32> to vector<2x128xf32>
    %352 = vector.extract_strided_slice %349 {offsets = [0, 256], sizes = [2, 128], strides = [1, 1]} : vector<2x384xf32> to vector<2x128xf32>
    %353 = vector.extract_strided_slice %343 {offsets = [0, 384], sizes = [2, 128], strides = [1, 1]} : vector<2x512xf32> to vector<2x128xf32>
    %354 = math.tanh %353 : vector<2x128xf32>
    %355 = arith.mulf %351, %307 : vector<2x128xf32>
    %356 = arith.mulf %350, %354 : vector<2x128xf32>
    %357 = arith.addf %355, %356 : vector<2x128xf32>
    %358 = math.tanh %357 : vector<2x128xf32>
    %359 = arith.mulf %352, %358 : vector<2x128xf32>
    %360 = tpu.concatenate %309, %331 in 1 : vector<2x128xf32>, vector<2x128xf32> -> vector<2x256xf32>
    %c0_119 = arith.constant 0 : index
    %c0_120 = arith.constant 0 : index
    %361 = vector.load %arg9[%c0_119, %c0_120] : memref<256x512xf32, #tpu.memory_space<vmem>>, vector<256x512xf32>
    %cst_121 = arith.constant dense<0.000000e+00> : vector<2x512xf32>
    %362 = tpu.matmul %360, %361, %cst_121 {dimension_numbers = #tpu.dot_dimension_numbers<[1], [0], [0], [1], [0, 0, 1, 1], [], []>} : vector<2x256xf32>, vector<256x512xf32>, vector<2x512xf32> -> vector<2x512xf32>
    %c0_122 = arith.constant 0 : index
    %c0_123 = arith.constant 0 : index
    %363 = vector.load %arg5[%c0_122, %c0_123] : memref<1x512xf32, #tpu.memory_space<vmem>>, vector<1x512xf32>
    %364 = vector.broadcast %363 : vector<1x512xf32> to vector<2x512xf32>
    %365 = arith.addf %362, %364 : vector<2x512xf32>
    %366 = vector.extract_strided_slice %365 {offsets = [0, 0], sizes = [2, 384], strides = [1, 1]} : vector<2x512xf32> to vector<2x384xf32>
    %367 = arith.negf %366 : vector<2x384xf32>
    %368 = math.exp %367 : vector<2x384xf32>
    %cst_124 = arith.constant 1.000000e+00 : f32
    %369 = vector.broadcast %cst_124 : f32 to vector<2x384xf32>
    %370 = arith.addf %369, %368 : vector<2x384xf32>
    %371 = arith.divf %369, %370 : vector<2x384xf32>
    %372 = vector.extract_strided_slice %371 {offsets = [0, 0], sizes = [2, 128], strides = [1, 1]} : vector<2x384xf32> to vector<2x128xf32>
    %373 = vector.extract_strided_slice %371 {offsets = [0, 128], sizes = [2, 128], strides = [1, 1]} : vector<2x384xf32> to vector<2x128xf32>
    %374 = vector.extract_strided_slice %371 {offsets = [0, 256], sizes = [2, 128], strides = [1, 1]} : vector<2x384xf32> to vector<2x128xf32>
    %375 = vector.extract_strided_slice %365 {offsets = [0, 384], sizes = [2, 128], strides = [1, 1]} : vector<2x512xf32> to vector<2x128xf32>
    %376 = math.tanh %375 : vector<2x128xf32>
    %377 = arith.mulf %373, %329 : vector<2x128xf32>
    %378 = arith.mulf %372, %376 : vector<2x128xf32>
    %379 = arith.addf %377, %378 : vector<2x128xf32>
    %380 = math.tanh %379 : vector<2x128xf32>
    %381 = arith.mulf %374, %380 : vector<2x128xf32>
    %382 = tpu.concatenate %359, %381 in 1 : vector<2x128xf32>, vector<2x128xf32> -> vector<2x256xf32>
    %c0_125 = arith.constant 0 : index
    %c0_126 = arith.constant 0 : index
    %383 = vector.load %arg9[%c0_125, %c0_126] : memref<256x512xf32, #tpu.memory_space<vmem>>, vector<256x512xf32>
    %cst_127 = arith.constant dense<0.000000e+00> : vector<2x512xf32>
    %384 = tpu.matmul %382, %383, %cst_127 {dimension_numbers = #tpu.dot_dimension_numbers<[1], [0], [0], [1], [0, 0, 1, 1], [], []>} : vector<2x256xf32>, vector<256x512xf32>, vector<2x512xf32> -> vector<2x512xf32>
    %c0_128 = arith.constant 0 : index
    %c0_129 = arith.constant 0 : index
    %385 = vector.load %arg5[%c0_128, %c0_129] : memref<1x512xf32, #tpu.memory_space<vmem>>, vector<1x512xf32>
    %386 = vector.broadcast %385 : vector<1x512xf32> to vector<2x512xf32>
    %387 = arith.addf %384, %386 : vector<2x512xf32>
    %388 = vector.extract_strided_slice %387 {offsets = [0, 0], sizes = [2, 384], strides = [1, 1]} : vector<2x512xf32> to vector<2x384xf32>
    %389 = arith.negf %388 : vector<2x384xf32>
    %390 = math.exp %389 : vector<2x384xf32>
    %cst_130 = arith.constant 1.000000e+00 : f32
    %391 = vector.broadcast %cst_130 : f32 to vector<2x384xf32>
    %392 = arith.addf %391, %390 : vector<2x384xf32>
    %393 = arith.divf %391, %392 : vector<2x384xf32>
    %394 = vector.extract_strided_slice %393 {offsets = [0, 0], sizes = [2, 128], strides = [1, 1]} : vector<2x384xf32> to vector<2x128xf32>
    %395 = vector.extract_strided_slice %393 {offsets = [0, 128], sizes = [2, 128], strides = [1, 1]} : vector<2x384xf32> to vector<2x128xf32>
    %396 = vector.extract_strided_slice %393 {offsets = [0, 256], sizes = [2, 128], strides = [1, 1]} : vector<2x384xf32> to vector<2x128xf32>
    %397 = vector.extract_strided_slice %387 {offsets = [0, 384], sizes = [2, 128], strides = [1, 1]} : vector<2x512xf32> to vector<2x128xf32>
    %398 = math.tanh %397 : vector<2x128xf32>
    %399 = arith.mulf %395, %379 : vector<2x128xf32>
    %400 = arith.mulf %394, %398 : vector<2x128xf32>
    %401 = arith.addf %399, %400 : vector<2x128xf32>
    %402 = math.tanh %401 : vector<2x128xf32>
    %403 = arith.mulf %396, %402 : vector<2x128xf32>
    %c0_131 = arith.constant 0 : index
    %c0_132 = arith.constant 0 : index
    %404 = vector.load %arg6[%c0_131, %c0_132] : memref<128x4xf32, #tpu.memory_space<vmem>>, vector<128x4xf32>
    %cst_133 = arith.constant dense<0.000000e+00> : vector<2x4xf32>
    %405 = tpu.matmul %403, %404, %cst_133 {dimension_numbers = #tpu.dot_dimension_numbers<[1], [0], [0], [1], [0, 0, 1, 1], [], []>} : vector<2x128xf32>, vector<128x4xf32>, vector<2x4xf32> -> vector<2x4xf32>
    %c0_134 = arith.constant 0 : index
    %c0_135 = arith.constant 0 : index
    %406 = vector.load %arg7[%c0_134, %c0_135] : memref<1x4xf32, #tpu.memory_space<vmem>>, vector<1x4xf32>
    %407 = vector.broadcast %406 : vector<1x4xf32> to vector<2x4xf32>
    %408 = arith.addf %405, %407 : vector<2x4xf32>
    %c0_136 = arith.constant 0 : index
    %c0_137 = arith.constant 0 : index
    %409 = vector.load %arg8[%c0_136, %c0_137] : memref<2x4xf32, #tpu.memory_space<vmem>>, vector<2x4xf32>
    tpu.vector_store %arg8[%c0_136, %c0_137], %408 {strides = array<i32>} : memref<2x4xf32, #tpu.memory_space<vmem>>, vector<2x4xf32>,
    return
  }
}

</mosaic_0001>

<llo_original>
// kernel: tpu_custom_call.1
$region0: #{tpu_custom_call.1}
  #allocation0 [shape = 'u32[]', space=smem, size = 0x4, offset = 0x4, fixed_abs, tag = 'smem constant byte address 0x4 - core index']
  #allocation1 [shape = 'u32[144,128]{1,0:T(1,128)}', space=vmem, size = 0x12000, scoped, tag = 'internal scratch']
  #allocation2 [shape = 'f32[256,512]{1,0:T(8,128)}', space=vmem, size = 0x80000, scoped, tag = 'scratch operand']
  #allocation3 [shape = 's32[1]{0}', space=sflag, size = 0x4, scoped, tag = 'scratch operand']
  #allocation8 [shape = 's32[]', space=sflag, size = 0x4, offset = 0, fixed_abs, tag = 'sflag constant byte address 0x0 - dummy sync flag']
  #allocation9 [shape = 's32[]', space=sflag, size = 0x4, offset = 0, fixed_abs, tag = 'sflag constant byte address 0x0 - dummy sync flag']
  #allocation10 [shape = 'u32[]', space=smem, size = 0x4, offset = 0x44, fixed_abs, tag = 'smem constant byte address 0x44 - assertion arg 0']
  #allocation11 [shape = 'u32[]', space=smem, size = 0x4, offset = 0x48, fixed_abs, tag = 'smem constant byte address 0x48 - assertion arg 1']
  %s0 = inlined_call_operand.vmem [shape: f32[8,2,1], index: 0, kind: input, shape index: {}]
  %s1 = inlined_call_operand.vmem [shape: f32[1,512], index: 1, kind: input, shape index: {}]
  %s2 = inlined_call_operand.hbm [shape: f32[128,512], index: 2, kind: input, shape index: {}]
  %s3 = inlined_call_operand.vmem [shape: f32[1,512], index: 3, kind: input, shape index: {}]
  %s4 = inlined_call_operand.hbm [shape: f32[256,512], index: 4, kind: input, shape index: {}]
  %s5 = inlined_call_operand.vmem [shape: f32[1,512], index: 5, kind: input, shape index: {}]
  %s6 = inlined_call_operand.vmem [shape: f32[128,4], index: 6, kind: input, shape index: {}]
  %s7 = inlined_call_operand.vmem [shape: f32[1,4], index: 7, kind: input, shape index: {}]
  %s8 = inlined_call_operand.hbm [shape: f32[2,4], index: 8, kind: output, shape index: {}]
  %s9 = sld [smem:[#allocation0]]
  $region46: #{tpu_custom_call.1} parent=0
    _
  %s11 = ssub.s32 1, %s9
  %s12 = scalar_select 0, %s11, %s9
  $region1: #{tpu_custom_call.1} parent=0
    #allocation4 [shape = 'u8[262144]{0}', space=vmem, size = 0x40000, scoped, tag = 'input window, operand 2, single buffered']
    #allocation5 [shape = 's32[1]{0}', space=sflag, size = 0x4, scoped, tag = 'scoped memory for tpu_custom_call.1']
    #allocation6 [shape = 's32[1]{0}', space=sflag, size = 0x4, scoped, tag = 'scoped memory for tpu_custom_call.1']
    #allocation7 [shape = 'u8[1024]{0}', space=vmem, size = 0x400, scoped, tag = 'output window, operand 0, single buffered']
    %13 = vsyncpa [#allocation5], 0
    %14 = vsyncpa [#allocation6], 0
    // Predicated region
    $region2: #{tpu_custom_call.1} parent=1 // pred_check
      _
    $region3: #{tpu_custom_call.1} parent=1 // pred_check_branch
      %16 = sbr.rel (0) target = $region5
    $region4: #{tpu_custom_call.1} parent=1 // pred_region
      _
    $region5: #{tpu_custom_call.1} parent=1 // pred_fallthru
      _
    // Predicated region
    $region6: #{tpu_custom_call.1} parent=1 // pred_check
      _
    $region7: #{tpu_custom_call.1} parent=1 // pred_check_branch
      %18 = sbr.rel (0) target = $region9
    $region8: #{tpu_custom_call.1} parent=1 // pred_region
      _
    $region9: #{tpu_custom_call.1} parent=1 // pred_fallthru
      _
    // Predicated region
    $region10: #{tpu_custom_call.1} parent=1 // pred_check
      _
    $region11: #{tpu_custom_call.1} parent=1 // pred_check_branch
      %20 = sbr.rel (0) target = $region13
    $region12: #{tpu_custom_call.1} parent=1 // pred_region
      %s22 = ssub.s32 8192, 8192
      %23 = vsyncadd [#allocation5], %s22
      %s24 = sshll.u32 [#allocation4], 4
      %s25 = int_to_ptr.vmem [resolvable:$true] %s24
      %30 = dma.hbm_to_vmem [thread:$0]  %s2, 8192, %s25, [#allocation5], 512, 512, 32
    $region13: #{tpu_custom_call.1} parent=1 // pred_fallthru
      _
    // Predicated region
    $region14: #{tpu_custom_call.1} parent=1 // pred_check
      _
    $region15: #{tpu_custom_call.1} parent=1 // pred_check_branch
      %32 = sbr.rel (0) target = $region17
    $region16: #{tpu_custom_call.1} parent=1 // pred_region
      _
    $region17: #{tpu_custom_call.1} parent=1 // pred_fallthru
      _
    // Predicated region
    $region18: #{tpu_custom_call.1} parent=1 // pred_check
      _
    $region19: #{tpu_custom_call.1} parent=1 // pred_check_branch
      %34 = sbr.rel (0) target = $region21
    $region20: #{tpu_custom_call.1} parent=1 // pred_region
      _
    $region21: #{tpu_custom_call.1} parent=1 // pred_fallthru
      _
    // Predicated region
    $region22: #{tpu_custom_call.1} parent=1 // pred_check
      _
    $region23: #{tpu_custom_call.1} parent=1 // pred_check_branch
      %36 = sbr.rel (0) target = $region25
    $region24: #{tpu_custom_call.1} parent=1 // pred_region
      _
    $region25: #{tpu_custom_call.1} parent=1 // pred_fallthru
      _
    // Predicated region
    $region26: #{tpu_custom_call.1} parent=1 // pred_check
      _
    $region27: #{tpu_custom_call.1} parent=1 // pred_check_branch
      %38 = sbr.rel (0) target = $region29
    $region28: #{tpu_custom_call.1} parent=1 // pred_region
      _
    $region29: #{tpu_custom_call.1} parent=1 // pred_fallthru
      _
    // Predicated region
    $region30: #{tpu_custom_call.1} parent=1 // pred_check
      _
    $region31: #{tpu_custom_call.1} parent=1 // pred_check_branch
      %40 = sbr.rel (0) target = $region33
    $region32: #{tpu_custom_call.1} parent=1 // pred_region
      %41 = dma.done [#allocation5], 8192
    $region33: #{tpu_custom_call.1} parent=1 // pred_fallthru
      _
    // Predicated region
    $region34: #{tpu_custom_call.1} parent=1 // pred_check
      _
    $region35: #{tpu_custom_call.1} parent=1 // pred_check_branch
      %43 = sbr.rel target = $region37
    $region36: #{tpu_custom_call.1} parent=1 // pred_region
      %44 = sst [smem:[#allocation10]] [#allocation9]
      %45 = sst [smem:[#allocation11]] [#allocation8]
    $region37: #{tpu_custom_call.1} parent=1 // pred_fallthru
      _
    %47 = shalt.err (0)
    %s49 = sshll.u32 [#allocation2], 4
    %s50 = int_to_ptr.vmem [resolvable:$true] %s49
    %52 = dma.hbm_to_vmem [thread:$0]  %s4, 16384, %s50, [#allocation3]
    %v53 = vld [vmem:[%s0] sm:$0x3]
    %v54 = vld [vmem:[%s1] sm:$0xf]
    %56 = vset.pattern.permute.xlu0 0
    %57 = vperm.xlu0 %56, %v53
    %v58 = vpop.permute.xlu0 %57
    %v61 = vlaneseq
    %v62 = vshrl.u32 %v61, 7
    %v63 = vsub.s32 0, %v62
    %v64 = vrot.slane %v54, %v63
    %v65 = vlaneseq
    %v66 = vshrl.u32 %v65, 7
    %v67 = vsub.s32 1, %v66
    %v68 = vrot.slane %v54, %v67
    %v69 = vlaneseq
    %v70 = vshrl.u32 %v69, 7
    %v71 = vsub.s32 2, %v70
    %v72 = vrot.slane %v54, %v71
    %v73 = vlaneseq
    %v74 = vshrl.u32 %v73, 7
    %v75 = vsub.s32 3, %v74
    %v76 = vrot.slane %v54, %v75
    %v81 = vmul.f32 %v58, %v64
    %v82 = vmul.f32 %v58, %v68
    %v83 = vmul.f32 %v58, %v72
    %v84 = vmul.f32 %v58, %v76
    %v85 = vld [vmem:[%s3] sm:$0xf]
    %v87 = vlaneseq
    %v88 = vshrl.u32 %v87, 7
    %v89 = vsub.s32 0, %v88
    %v90 = vrot.slane %v85, %v89
    %v91 = vlaneseq
    %v92 = vshrl.u32 %v91, 7
    %v93 = vsub.s32 1, %v92
    %v94 = vrot.slane %v85, %v93
    %v95 = vlaneseq
    %v96 = vshrl.u32 %v95, 7
    %v97 = vsub.s32 2, %v96
    %v98 = vrot.slane %v85, %v97
    %v99 = vlaneseq
    %v100 = vshrl.u32 %v99, 7
    %v101 = vsub.s32 3, %v100
    %v102 = vrot.slane %v85, %v101
    %v107 = vadd.f32 %v81, %v90
    %v108 = vadd.f32 %v82, %v94
    %v109 = vadd.f32 %v83, %v98
    %v110 = vadd.f32 %v84, %v102
    %v111 = vld [vmem:[#allocation4] sm:$0xff]
    %v112 = vld [vmem:[#allocation4 + $0x8] sm:$0xff]
    %v113 = vld [vmem:[#allocation4 + $0x10] sm:$0xff]
    %v114 = vld [vmem:[#allocation4 + $0x18] sm:$0xff]
    %v115 = vld [vmem:[#allocation4 + $0x20] sm:$0xff]
    %v116 = vld [vmem:[#allocation4 + $0x28] sm:$0xff]
    %v117 = vld [vmem:[#allocation4 + $0x30] sm:$0xff]
    %v118 = vld [vmem:[#allocation4 + $0x38] sm:$0xff]
    %v119 = vld [vmem:[#allocation4 + $0x40] sm:$0xff]
    %v120 = vld [vmem:[#allocation4 + $0x48] sm:$0xff]
    %v121 = vld [vmem:[#allocation4 + $0x50] sm:$0xff]
    %v122 = vld [vmem:[#allocation4 + $0x58] sm:$0xff]
    %v123 = vld [vmem:[#allocation4 + $0x60] sm:$0xff]
    %v124 = vld [vmem:[#allocation4 + $0x68] sm:$0xff]
    %v125 = vld [vmem:[#allocation4 + $0x70] sm:$0xff]
    %v126 = vld [vmem:[#allocation4 + $0x78] sm:$0xff]
    %v127 = vld [vmem:[#allocation4 + $0x80] sm:$0xff]
    %v128 = vld [vmem:[#allocation4 + $0x88] sm:$0xff]
    %v129 = vld [vmem:[#allocation4 + $0x90] sm:$0xff]
    %v130 = vld [vmem:[#allocation4 + $0x98] sm:$0xff]
    %v131 = vld [vmem:[#allocation4 + $0xa0] sm:$0xff]
    %v132 = vld [vmem:[#allocation4 + $0xa8] sm:$0xff]
    %v133 = vld [vmem:[#allocation4 + $0xb0] sm:$0xff]
    %v134 = vld [vmem:[#allocation4 + $0xb8] sm:$0xff]
    %v135 = vld [vmem:[#allocation4 + $0xc0] sm:$0xff]
    %v136 = vld [vmem:[#allocation4 + $0xc8] sm:$0xff]
    %v137 = vld [vmem:[#allocation4 + $0xd0] sm:$0xff]
    %v138 = vld [vmem:[#allocation4 + $0xd8] sm:$0xff]
    %v139 = vld [vmem:[#allocation4 + $0xe0] sm:$0xff]
    %v140 = vld [vmem:[#allocation4 + $0xe8] sm:$0xff]
    %v141 = vld [vmem:[#allocation4 + $0xf0] sm:$0xff]
    %v142 = vld [vmem:[#allocation4 + $0xf8] sm:$0xff]
    %v143 = vld [vmem:[#allocation4 + $0x100] sm:$0xff]
    %v144 = vld [vmem:[#allocation4 + $0x108] sm:$0xff]
    %v145 = vld [vmem:[#allocation4 + $0x110] sm:$0xff]
    %v146 = vld [vmem:[#allocation4 + $0x118] sm:$0xff]
    %v147 = vld [vmem:[#allocation4 + $0x120] sm:$0xff]
    %v148 = vld [vmem:[#allocation4 + $0x128] sm:$0xff]
    %v149 = vld [vmem:[#allocation4 + $0x130] sm:$0xff]
    %v150 = vld [vmem:[#allocation4 + $0x138] sm:$0xff]
    %v151 = vld [vmem:[#allocation4 + $0x140] sm:$0xff]
    %v152 = vld [vmem:[#allocation4 + $0x148] sm:$0xff]
    %v153 = vld [vmem:[#allocation4 + $0x150] sm:$0xff]
    %v154 = vld [vmem:[#allocation4 + $0x158] sm:$0xff]
    %v155 = vld [vmem:[#allocation4 + $0x160] sm:$0xff]
    %v156 = vld [vmem:[#allocation4 + $0x168] sm:$0xff]
    %v157 = vld [vmem:[#allocation4 + $0x170] sm:$0xff]
    %v158 = vld [vmem:[#allocation4 + $0x178] sm:$0xff]
    %v159 = vld [vmem:[#allocation4 + $0x180] sm:$0xff]
    %v160 = vld [vmem:[#allocation4 + $0x188] sm:$0xff]
    %v161 = vld [vmem:[#allocation4 + $0x190] sm:$0xff]
    %v162 = vld [vmem:[#allocation4 + $0x198] sm:$0xff]
    %v163 = vld [vmem:[#allocation4 + $0x1a0] sm:$0xff]
    %v164 = vld [vmem:[#allocation4 + $0x1a8] sm:$0xff]
    %v165 = vld [vmem:[#allocation4 + $0x1b0] sm:$0xff]
    %v166 = vld [vmem:[#allocation4 + $0x1b8] sm:$0xff]
    %v167 = vld [vmem:[#allocation4 + $0x1c0] sm:$0xff]
    %v168 = vld [vmem:[#allocation4 + $0x1c8] sm:$0xff]
    %v169 = vld [vmem:[#allocation4 + $0x1d0] sm:$0xff]
    %v170 = vld [vmem:[#allocation4 + $0x1d8] sm:$0xff]
    %v171 = vld [vmem:[#allocation4 + $0x1e0] sm:$0xff]
    %v172 = vld [vmem:[#allocation4 + $0x1e8] sm:$0xff]
    %v173 = vld [vmem:[#allocation4 + $0x1f0] sm:$0xff]
    %v174 = vld [vmem:[#allocation4 + $0x1f8] sm:$0xff]
    %175 = vmatprep.subr.mxu0 %v112
    %176 = vmatpush1.msra.mxu0 %v111
    %177 = vmatprep.subr.mxu0 %v116
    %178 = vmatpush1.msra.mxu0 %v115
    %179 = vmatprep.subr.mxu0 %v120
    %180 = vmatpush1.msra.mxu0 %v119
    %181 = vmatprep.subr.mxu0 %v124
    %182 = vmatpush1.msra.mxu0 %v123
    %183 = vmatprep.subr.mxu0 %v128
    %184 = vmatpush1.msra.mxu0 %v127
    %185 = vmatprep.subr.mxu0 %v132
    %186 = vmatpush1.msra.mxu0 %v131
    %187 = vmatprep.subr.mxu0 %v136
    %188 = vmatpush1.msra.mxu0 %v135
    %189 = vmatprep.subr.mxu0 %v140
    %190 = vmatpush1.msra.mxu0 %v139
    %191 = vmatprep.subr.mxu0 %v144
    %192 = vmatpush1.msra.mxu0 %v143
    %193 = vmatprep.subr.mxu0 %v148
    %194 = vmatpush1.msra.mxu0 %v147
    %195 = vmatprep.subr.mxu0 %v152
    %196 = vmatpush1.msra.mxu0 %v151
    %197 = vmatprep.subr.mxu0 %v156
    %198 = vmatpush1.msra.mxu0 %v155
    %199 = vmatprep.subr.mxu0 %v160
    %200 = vmatpush1.msra.mxu0 %v159
    %201 = vmatprep.subr.mxu0 %v164
    %202 = vmatpush1.msra.mxu0 %v163
    %203 = vmatprep.subr.mxu0 %v168
    %204 = vmatpush1.msra.mxu0 %v167
    %205 = vmatprep.subr.mxu0 %v172
    %206 = vmatpush1.msra.mxu0 %v171
    %207 = vmatprep.subr.mxu0 0.0
    %208 = vmatpush1.msra.mxu0 0.0
    %209 = vmatprep.subr.mxu0 0.0
    %210 = vmatpush1.msra.mxu0 0.0
    %211 = vmatprep.subr.mxu0 0.0
    %212 = vmatpush1.msra.mxu0 0.0
    %213 = vmatprep.subr.mxu0 0.0
    %214 = vmatpush1.msra.mxu0 0.0
    %215 = vmatprep.subr.mxu0 0.0
    %216 = vmatpush1.msra.mxu0 0.0
    %217 = vmatprep.subr.mxu0 0.0
    %218 = vmatpush1.msra.mxu0 0.0
    %219 = vmatprep.subr.mxu0 0.0
    %220 = vmatpush1.msra.mxu0 0.0
    %221 = vmatprep.subr.mxu0 0.0
    %222 = vmatpush1.msra.mxu0 0.0
    %223 = vmatprep.subr.mxu0 0.0
    %224 = vmatpush1.msra.mxu0 0.0
    %225 = vmatprep.subr.mxu0 0.0
    %226 = vmatpush1.msra.mxu0 0.0
    %227 = vmatprep.subr.mxu0 0.0
    %228 = vmatpush1.msra.mxu0 0.0
    %229 = vmatprep.subr.mxu0 0.0
    %230 = vmatpush1.msra.mxu0 0.0
    %231 = vmatprep.subr.mxu0 0.0
    %232 = vmatpush1.msra.mxu0 0.0
    %233 = vmatprep.subr.mxu0 0.0
    %234 = vmatpush1.msra.mxu0 0.0
    %235 = vmatprep.subr.mxu0 0.0
    %236 = vmatpush1.msra.mxu0 0.0
    %237 = vmatprep.subr.mxu0 0.0
    %238 = vmatpush1.msra.mxu0 0.0
    %239 = vmatprep.mubr.f32.mxu0 0.0
    %240 = vmatmul.mubr.f32.gmra.mrb[0].mxu0 0.0
    %v241 = vpop.f32.mrb[0].mxu0
    %v242 = vadd.f32 0.0, %v241
    %v243 = vpop.f32.mrb[0].mxu0
    %v244 = vadd.f32 0.0, %v243
    %245 = vdwg.mxu0
    %246 = vmatprep.subr.mxu0 %v114
    %247 = vmatpush1.msra.mxu0 %v113
    %248 = vmatprep.subr.mxu0 %v118
    %249 = vmatpush1.msra.mxu0 %v117
    %250 = vmatprep.subr.mxu0 %v122
    %251 = vmatpush1.msra.mxu0 %v121
    %252 = vmatprep.subr.mxu0 %v126
    %253 = vmatpush1.msra.mxu0 %v125
    %254 = vmatprep.subr.mxu0 %v130
    %255 = vmatpush1.msra.mxu0 %v129
    %256 = vmatprep.subr.mxu0 %v134
    %257 = vmatpush1.msra.mxu0 %v133
    %258 = vmatprep.subr.mxu0 %v138
    %259 = vmatpush1.msra.mxu0 %v137
    %260 = vmatprep.subr.mxu0 %v142
    %261 = vmatpush1.msra.mxu0 %v141
    %262 = vmatprep.subr.mxu0 %v146
    %263 = vmatpush1.msra.mxu0 %v145
    %264 = vmatprep.subr.mxu0 %v150
    %265 = vmatpush1.msra.mxu0 %v149
    %266 = vmatprep.subr.mxu0 %v154
    %267 = vmatpush1.msra.mxu0 %v153
    %268 = vmatprep.subr.mxu0 %v158
    %269 = vmatpush1.msra.mxu0 %v157
    %270 = vmatprep.subr.mxu0 %v162
    %271 = vmatpush1.msra.mxu0 %v161
    %272 = vmatprep.subr.mxu0 %v166
    %273 = vmatpush1.msra.mxu0 %v165
    %274 = vmatprep.subr.mxu0 %v170
    %275 = vmatpush1.msra.mxu0 %v169
    %276 = vmatprep.subr.mxu0 %v174
    %277 = vmatpush1.msra.mxu0 %v173
    %278 = vmatprep.subr.mxu0 0.0
    %279 = vmatpush1.msra.mxu0 0.0
    %280 = vmatprep.subr.mxu0 0.0
    %281 = vmatpush1.msra.mxu0 0.0
    %282 = vmatprep.subr.mxu0 0.0
    %283 = vmatpush1.msra.mxu0 0.0
    %284 = vmatprep.subr.mxu0 0.0
    %285 = vmatpush1.msra.mxu0 0.0
    %286 = vmatprep.subr.mxu0 0.0
    %287 = vmatpush1.msra.mxu0 0.0
    %288 = vmatprep.subr.mxu0 0.0
    %289 = vmatpush1.msra.mxu0 0.0
    %290 = vmatprep.subr.mxu0 0.0
    %291 = vmatpush1.msra.mxu0 0.0
    %292 = vmatprep.subr.mxu0 0.0
    %293 = vmatpush1.msra.mxu0 0.0
    %294 = vmatprep.subr.mxu0 0.0
    %295 = vmatpush1.msra.mxu0 0.0
    %296 = vmatprep.subr.mxu0 0.0
    %297 = vmatpush1.msra.mxu0 0.0
    %298 = vmatprep.subr.mxu0 0.0
    %299 = vmatpush1.msra.mxu0 0.0
    %300 = vmatprep.subr.mxu0 0.0
    %301 = vmatpush1.msra.mxu0 0.0
    %302 = vmatprep.subr.mxu0 0.0
    %303 = vmatpush1.msra.mxu0 0.0
    %304 = vmatprep.subr.mxu0 0.0
    %305 = vmatpush1.msra.mxu0 0.0
    %306 = vmatprep.subr.mxu0 0.0
    %307 = vmatpush1.msra.mxu0 0.0
    %308 = vmatprep.subr.mxu0 0.0
    %309 = vmatpush1.msra.mxu0 0.0
    %310 = vmatprep.mubr.f32.mxu0 0.0
    %311 = vmatmul.mubr.f32.gmra.mrb[0].mxu0 0.0
    %v312 = vpop.f32.mrb[0].mxu0
    %v313 = vadd.f32 0.0, %v312
    %v314 = vpop.f32.mrb[0].mxu0
    %v315 = vadd.f32 0.0, %v314
    %316 = vdwg.mxu0
    %v317 = vadd.f32 %v107, %v242
    %v318 = vadd.f32 %v108, %v244
    %v319 = vadd.f32 %v109, %v313
    %v320 = vadd.f32 %v110, %v315
    %v321 = vxor.u32 %v317, 2147483648
    %v322 = vxor.u32 %v318, 2147483648
    %v323 = vxor.u32 %v319, 2147483648
    %v324 = vmul.f32 %v321, 1.442695
    %v325 = vpow.pop %v324
    %v326 = vmul.f32 %v322, 1.442695
    %v327 = vpow.pop %v326
    %v328 = vmul.f32 %v323, 1.442695
    %v329 = vpow.pop %v328
    %v330 = vadd.f32 %v325, 1.0
    %v331 = vadd.f32 %v327, 1.0
    %v332 = vadd.f32 %v329, 1.0
    %v333 = vrcp.pop %v330
    %v334 = vmul.f32 1.0, %v333
    %v335 = vrcp.pop %v331
    %v336 = vmul.f32 1.0, %v335
    %v337 = vrcp.pop %v332
    %v338 = vmul.f32 1.0, %v337
    %v339 = vtanh.pop %v320
    %v340 = vmul.f32 %v336, 0.0
    %v341 = vmul.f32 %v334, %v339
    %v342 = vadd.f32 %v340, %v341
    %v343 = vtanh.pop %v342
    %v344 = vmul.f32 %v338, %v343
    %s345 = smul.u32 8, 32
    %s346 = smul.u32 %s345, 4
    %s347 = sshll.u32 %s346, 4
    %348 = dma.done [#allocation3], %s347
    %s349 = scalar_lea.vmem %s0, 2
    %v350 = vld [vmem:[%s349] sm:$0x3]
    %v351 = vld [vmem:[%s1] sm:$0xf]
    %353 = vset.pattern.permute.xlu0 0
    %354 = vperm.xlu0 %353, %v350
    %v355 = vpop.permute.xlu0 %354
    %v358 = vlaneseq
    %v359 = vshrl.u32 %v358, 7
    %v360 = vsub.s32 0, %v359
    %v361 = vrot.slane %v351, %v360
    %v362 = vlaneseq
    %v363 = vshrl.u32 %v362, 7
    %v364 = vsub.s32 1, %v363
    %v365 = vrot.slane %v351, %v364
    %v366 = vlaneseq
    %v367 = vshrl.u32 %v366, 7
    %v368 = vsub.s32 2, %v367
    %v369 = vrot.slane %v351, %v368
    %v370 = vlaneseq
    %v371 = vshrl.u32 %v370, 7
    %v372 = vsub.s32 3, %v371
    %v373 = vrot.slane %v351, %v372
    %v378 = vmul.f32 %v355, %v361
    %v379 = vmul.f32 %v355, %v365
    %v380 = vmul.f32 %v355, %v369
    %v381 = vmul.f32 %v355, %v373
    %v382 = vld [vmem:[%s3] sm:$0xf]
    %v384 = vlaneseq
    %v385 = vshrl.u32 %v384, 7
    %v386 = vsub.s32 0, %v385
    %v387 = vrot.slane %v382, %v386
    %v388 = vlaneseq
    %v389 = vshrl.u32 %v388, 7
    %v390 = vsub.s32 1, %v389
    %v391 = vrot.slane %v382, %v390
    %v392 = vlaneseq
    %v393 = vshrl.u32 %v392, 7
    %v394 = vsub.s32 2, %v393
    %v395 = vrot.slane %v382, %v394
    %v396 = vlaneseq
    %v397 = vshrl.u32 %v396, 7
    %v398 = vsub.s32 3, %v397
    %v399 = vrot.slane %v382, %v398
    %v404 = vadd.f32 %v378, %v387
    %v405 = vadd.f32 %v379, %v391
    %v406 = vadd.f32 %v380, %v395
    %v407 = vadd.f32 %v381, %v399
    %v408 = vld [vmem:[#allocation4] sm:$0xff]
    %v409 = vld [vmem:[#allocation4 + $0x8] sm:$0xff]
    %v410 = vld [vmem:[#allocation4 + $0x10] sm:$0xff]
    %v411 = vld [vmem:[#allocation4 + $0x18] sm:$0xff]
    %v412 = vld [vmem:[#allocation4 + $0x20] sm:$0xff]
    %v413 = vld [vmem:[#allocation4 + $0x28] sm:$0xff]
    %v414 = vld [vmem:[#allocation4 + $0x30] sm:$0xff]
    %v415 = vld [vmem:[#allocation4 + $0x38] sm:$0xff]
    %v416 = vld [vmem:[#allocation4 + $0x40] sm:$0xff]
    %v417 = vld [vmem:[#allocation4 + $0x48] sm:$0xff]
    %v418 = vld [vmem:[#allocation4 + $0x50] sm:$0xff]
    %v419 = vld [vmem:[#allocation4 + $0x58] sm:$0xff]
    %v420 = vld [vmem:[#allocation4 + $0x60] sm:$0xff]
    %v421 = vld [vmem:[#allocation4 + $0x68] sm:$0xff]
    %v422 = vld [vmem:[#allocation4 + $0x70] sm:$0xff]
    %v423 = vld [vmem:[#allocation4 + $0x78] sm:$0xff]
    %v424 = vld [vmem:[#allocation4 + $0x80] sm:$0xff]
    %v425 = vld [vmem:[#allocation4 + $0x88] sm:$0xff]
    %v426 = vld [vmem:[#allocation4 + $0x90] sm:$0xff]
    %v427 = vld [vmem:[#allocation4 + $0x98] sm:$0xff]
    %v428 = vld [vmem:[#allocation4 + $0xa0] sm:$0xff]
    %v429 = vld [vmem:[#allocation4 + $0xa8] sm:$0xff]
    %v430 = vld [vmem:[#allocation4 + $0xb0] sm:$0xff]
    %v431 = vld [vmem:[#allocation4 + $0xb8] sm:$0xff]
    %v432 = vld [vmem:[#allocation4 + $0xc0] sm:$0xff]
    %v433 = vld [vmem:[#allocation4 + $0xc8] sm:$0xff]
    %v434 = vld [vmem:[#allocation4 + $0xd0] sm:$0xff]
    %v435 = vld [vmem:[#allocation4 + $0xd8] sm:$0xff]
    %v436 = vld [vmem:[#allocation4 + $0xe0] sm:$0xff]
    %v437 = vld [vmem:[#allocation4 + $0xe8] sm:$0xff]
    %v438 = vld [vmem:[#allocation4 + $0xf0] sm:$0xff]
    %v439 = vld [vmem:[#allocation4 + $0xf8] sm:$0xff]
    %v440 = vld [vmem:[#allocation4 + $0x100] sm:$0xff]
    %v441 = vld [vmem:[#allocation4 + $0x108] sm:$0xff]
    %v442 = vld [vmem:[#allocation4 + $0x110] sm:$0xff]
    %v443 = vld [vmem:[#allocation4 + $0x118] sm:$0xff]
    %v444 = vld [vmem:[#allocation4 + $0x120] sm:$0xff]
    %v445 = vld [vmem:[#allocation4 + $0x128] sm:$0xff]
    %v446 = vld [vmem:[#allocation4 + $0x130] sm:$0xff]
    %v447 = vld [vmem:[#allocation4 + $0x138] sm:$0xff]
    %v448 = vld [vmem:[#allocation4 + $0x140] sm:$0xff]
    %v449 = vld [vmem:[#allocation4 + $0x148] sm:$0xff]
    %v450 = vld [vmem:[#allocation4 + $0x150] sm:$0xff]
    %v451 = vld [vmem:[#allocation4 + $0x158] sm:$0xff]
    %v452 = vld [vmem:[#allocation4 + $0x160] sm:$0xff]
    %v453 = vld [vmem:[#allocation4 + $0x168] sm:$0xff]
    %v454 = vld [vmem:[#allocation4 + $0x170] sm:$0xff]
    %v455 = vld [vmem:[#allocation4 + $0x178] sm:$0xff]
    %v456 = vld [vmem:[#allocation4 + $0x180] sm:$0xff]
    %v457 = vld [vmem:[#allocation4 + $0x188] sm:$0xff]
    %v458 = vld [vmem:[#allocation4 + $0x190] sm:$0xff]
    %v459 = vld [vmem:[#allocation4 + $0x198] sm:$0xff]
    %v460 = vld [vmem:[#allocation4 + $0x1a0] sm:$0xff]
    %v461 = vld [vmem:[#allocation4 + $0x1a8] sm:$0xff]
    %v462 = vld [vmem:[#allocation4 + $0x1b0] sm:$0xff]
    %v463 = vld [vmem:[#allocation4 + $0x1b8] sm:$0xff]
    %v464 = vld [vmem:[#allocation4 + $0x1c0] sm:$0xff]
    %v465 = vld [vmem:[#allocation4 + $0x1c8] sm:$0xff]
    %v466 = vld [vmem:[#allocation4 + $0x1d0] sm:$0xff]
    %v467 = vld [vmem:[#allocation4 + $0x1d8] sm:$0xff]
    %v468 = vld [vmem:[#allocation4 + $0x1e0] sm:$0xff]
    %v469 = vld [vmem:[#allocation4 + $0x1e8] sm:$0xff]
    %v470 = vld [vmem:[#allocation4 + $0x1f0] sm:$0xff]
    %v471 = vld [vmem:[#allocation4 + $0x1f8] sm:$0xff]
    %472 = vmatprep.subr.mxu0 %v409
    %473 = vmatpush1.msra.mxu0 %v408
    %474 = vmatprep.subr.mxu0 %v413
    %475 = vmatpush1.msra.mxu0 %v412
    %476 = vmatprep.subr.mxu0 %v417
    %477 = vmatpush1.msra.mxu0 %v416
    %478 = vmatprep.subr.mxu0 %v421
    %479 = vmatpush1.msra.mxu0 %v420
    %480 = vmatprep.subr.mxu0 %v425
    %481 = vmatpush1.msra.mxu0 %v424
    %482 = vmatprep.subr.mxu0 %v429
    %483 = vmatpush1.msra.mxu0 %v428
    %484 = vmatprep.subr.mxu0 %v433
    %485 = vmatpush1.msra.mxu0 %v432
    %486 = vmatprep.subr.mxu0 %v437
    %487 = vmatpush1.msra.mxu0 %v436
    %488 = vmatprep.subr.mxu0 %v441
    %489 = vmatpush1.msra.mxu0 %v440
    %490 = vmatprep.subr.mxu0 %v445
    %491 = vmatpush1.msra.mxu0 %v444
    %492 = vmatprep.subr.mxu0 %v449
    %493 = vmatpush1.msra.mxu0 %v448
    %494 = vmatprep.subr.mxu0 %v453
    %495 = vmatpush1.msra.mxu0 %v452
    %496 = vmatprep.subr.mxu0 %v457
    %497 = vmatpush1.msra.mxu0 %v456
    %498 = vmatprep.subr.mxu0 %v461
    %499 = vmatpush1.msra.mxu0 %v460
    %500 = vmatprep.subr.mxu0 %v465
    %501 = vmatpush1.msra.mxu0 %v464
    %502 = vmatprep.subr.mxu0 %v469
    %503 = vmatpush1.msra.mxu0 %v468
    %504 = vmatprep.subr.mxu0 0.0
    %505 = vmatpush1.msra.mxu0 0.0
    %506 = vmatprep.subr.mxu0 0.0
    %507 = vmatpush1.msra.mxu0 0.0
    %508 = vmatprep.subr.mxu0 0.0
    %509 = vmatpush1.msra.mxu0 0.0
    %510 = vmatprep.subr.mxu0 0.0
    %511 = vmatpush1.msra.mxu0 0.0
    %512 = vmatprep.subr.mxu0 0.0
    %513 = vmatpush1.msra.mxu0 0.0
    %514 = vmatprep.subr.mxu0 0.0
    %515 = vmatpush1.msra.mxu0 0.0
    %516 = vmatprep.subr.mxu0 0.0
    %517 = vmatpush1.msra.mxu0 0.0
    %518 = vmatprep.subr.mxu0 0.0
    %519 = vmatpush1.msra.mxu0 0.0
    %520 = vmatprep.subr.mxu0 0.0
    %521 = vmatpush1.msra.mxu0 0.0
    %522 = vmatprep.subr.mxu0 0.0
    %523 = vmatpush1.msra.mxu0 0.0
    %524 = vmatprep.subr.mxu0 0.0
    %525 = vmatpush1.msra.mxu0 0.0
    %526 = vmatprep.subr.mxu0 0.0
    %527 = vmatpush1.msra.mxu0 0.0
    %528 = vmatprep.subr.mxu0 0.0
    %529 = vmatpush1.msra.mxu0 0.0
    %530 = vmatprep.subr.mxu0 0.0
    %531 = vmatpush1.msra.mxu0 0.0
    %532 = vmatprep.subr.mxu0 0.0
    %533 = vmatpush1.msra.mxu0 0.0
    %534 = vmatprep.subr.mxu0 0.0
    %535 = vmatpush1.msra.mxu0 0.0
    %536 = vmatprep.mubr.f32.mxu0 0.0
    %537 = vmatmul.mubr.f32.gmra.mrb[0].mxu0 %v344
    %v538 = vpop.f32.mrb[0].mxu0
    %v539 = vadd.f32 0.0, %v538
    %v540 = vpop.f32.mrb[0].mxu0
    %v541 = vadd.f32 0.0, %v540
    %542 = vdwg.mxu0
    %543 = vmatprep.subr.mxu0 %v411
    %544 = vmatpush1.msra.mxu0 %v410
    %545 = vmatprep.subr.mxu0 %v415
    %546 = vmatpush1.msra.mxu0 %v414
    %547 = vmatprep.subr.mxu0 %v419
    %548 = vmatpush1.msra.mxu0 %v418
    %549 = vmatprep.subr.mxu0 %v423
    %550 = vmatpush1.msra.mxu0 %v422
    %551 = vmatprep.subr.mxu0 %v427
    %552 = vmatpush1.msra.mxu0 %v426
    %553 = vmatprep.subr.mxu0 %v431
    %554 = vmatpush1.msra.mxu0 %v430
    %555 = vmatprep.subr.mxu0 %v435
    %556 = vmatpush1.msra.mxu0 %v434
    %557 = vmatprep.subr.mxu0 %v439
    %558 = vmatpush1.msra.mxu0 %v438
    %559 = vmatprep.subr.mxu0 %v443
    %560 = vmatpush1.msra.mxu0 %v442
    %561 = vmatprep.subr.mxu0 %v447
    %562 = vmatpush1.msra.mxu0 %v446
    %563 = vmatprep.subr.mxu0 %v451
    %564 = vmatpush1.msra.mxu0 %v450
    %565 = vmatprep.subr.mxu0 %v455
    %566 = vmatpush1.msra.mxu0 %v454
    %567 = vmatprep.subr.mxu0 %v459
    %568 = vmatpush1.msra.mxu0 %v458
    %569 = vmatprep.subr.mxu0 %v463
    %570 = vmatpush1.msra.mxu0 %v462
    %571 = vmatprep.subr.mxu0 %v467
    %572 = vmatpush1.msra.mxu0 %v466
    %573 = vmatprep.subr.mxu0 %v471
    %574 = vmatpush1.msra.mxu0 %v470
    %575 = vmatprep.subr.mxu0 0.0
    %576 = vmatpush1.msra.mxu0 0.0
    %577 = vmatprep.subr.mxu0 0.0
    %578 = vmatpush1.msra.mxu0 0.0
    %579 = vmatprep.subr.mxu0 0.0
    %580 = vmatpush1.msra.mxu0 0.0
    %581 = vmatprep.subr.mxu0 0.0
    %582 = vmatpush1.msra.mxu0 0.0
    %583 = vmatprep.subr.mxu0 0.0
    %584 = vmatpush1.msra.mxu0 0.0
    %585 = vmatprep.subr.mxu0 0.0
    %586 = vmatpush1.msra.mxu0 0.0
    %587 = vmatprep.subr.mxu0 0.0
    %588 = vmatpush1.msra.mxu0 0.0
    %589 = vmatprep.subr.mxu0 0.0
    %590 = vmatpush1.msra.mxu0 0.0
    %591 = vmatprep.subr.mxu0 0.0
    %592 = vmatpush1.msra.mxu0 0.0
    %593 = vmatprep.subr.mxu0 0.0
    %594 = vmatpush1.msra.mxu0 0.0
    %595 = vmatprep.subr.mxu0 0.0
    %596 = vmatpush1.msra.mxu0 0.0
    %597 = vmatprep.subr.mxu0 0.0
    %598 = vmatpush1.msra.mxu0 0.0
    %599 = vmatprep.subr.mxu0 0.0
    %600 = vmatpush1.msra.mxu0 0.0
    %601 = vmatprep.subr.mxu0 0.0
    %602 = vmatpush1.msra.mxu0 0.0
    %603 = vmatprep.subr.mxu0 0.0
    %604 = vmatpush1.msra.mxu0 0.0
    %605 = vmatprep.subr.mxu0 0.0
    %606 = vmatpush1.msra.mxu0 0.0
    %607 = vmatprep.mubr.f32.mxu0 0.0
    %608 = vmatmul.mubr.f32.gmra.mrb[0].mxu0 %v344
    %v609 = vpop.f32.mrb[0].mxu0
    %v610 = vadd.f32 0.0, %v609
    %v611 = vpop.f32.mrb[0].mxu0
    %v612 = vadd.f32 0.0, %v611
    %613 = vdwg.mxu0
    %v614 = vadd.f32 %v404, %v539
    %v615 = vadd.f32 %v405, %v541
    %v616 = vadd.f32 %v406, %v610
    %v617 = vadd.f32 %v407, %v612
    %v618 = vxor.u32 %v614, 2147483648
    %v619 = vxor.u32 %v615, 2147483648
    %v620 = vxor.u32 %v616, 2147483648
    %v621 = vmul.f32 %v618, 1.442695
    %v622 = vpow.pop %v621
    %v623 = vmul.f32 %v619, 1.442695
    %v624 = vpow.pop %v623
    %v625 = vmul.f32 %v620, 1.442695
    %v626 = vpow.pop %v625
    %v627 = vadd.f32 %v622, 1.0
    %v628 = vadd.f32 %v624, 1.0
    %v629 = vadd.f32 %v626, 1.0
    %v630 = vrcp.pop %v627
    %v631 = vmul.f32 1.0, %v630
    %v632 = vrcp.pop %v628
    %v633 = vmul.f32 1.0, %v632
    %v634 = vrcp.pop %v629
    %v635 = vmul.f32 1.0, %v634
    %v636 = vtanh.pop %v617
    %v637 = vmul.f32 %v633, %v342
    %v638 = vmul.f32 %v631, %v636
    %v639 = vadd.f32 %v637, %v638
    %v640 = vtanh.pop %v639
    %v641 = vmul.f32 %v635, %v640
    %v642 = vld [vmem:[#allocation2] sm:$0xff]
    %v643 = vld [vmem:[#allocation2 + $0x8] sm:$0xff]
    %v644 = vld [vmem:[#allocation2 + $0x10] sm:$0xff]
    %v645 = vld [vmem:[#allocation2 + $0x18] sm:$0xff]
    %v646 = vld [vmem:[#allocation2 + $0x20] sm:$0xff]
    %v647 = vld [vmem:[#allocation2 + $0x28] sm:$0xff]
    %v648 = vld [vmem:[#allocation2 + $0x30] sm:$0xff]
    %v649 = vld [vmem:[#allocation2 + $0x38] sm:$0xff]
    %v650 = vld [vmem:[#allocation2 + $0x40] sm:$0xff]
    %v651 = vld [vmem:[#allocation2 + $0x48] sm:$0xff]
    %v652 = vld [vmem:[#allocation2 + $0x50] sm:$0xff]
    %v653 = vld [vmem:[#allocation2 + $0x58] sm:$0xff]
    %v654 = vld [vmem:[#allocation2 + $0x60] sm:$0xff]
    %v655 = vld [vmem:[#allocation2 + $0x68] sm:$0xff]
    %v656 = vld [vmem:[#allocation2 + $0x70] sm:$0xff]
    %v657 = vld [vmem:[#allocation2 + $0x78] sm:$0xff]
    %v658 = vld [vmem:[#allocation2 + $0x80] sm:$0xff]
    %v659 = vld [vmem:[#allocation2 + $0x88] sm:$0xff]
    %v660 = vld [vmem:[#allocation2 + $0x90] sm:$0xff]
    %v661 = vld [vmem:[#allocation2 + $0x98] sm:$0xff]
    %v662 = vld [vmem:[#allocation2 + $0xa0] sm:$0xff]
    %v663 = vld [vmem:[#allocation2 + $0xa8] sm:$0xff]
    %v664 = vld [vmem:[#allocation2 + $0xb0] sm:$0xff]
    %v665 = vld [vmem:[#allocation2 + $0xb8] sm:$0xff]
    %v666 = vld [vmem:[#allocation2 + $0xc0] sm:$0xff]
    %v667 = vld [vmem:[#allocation2 + $0xc8] sm:$0xff]
    %v668 = vld [vmem:[#allocation2 + $0xd0] sm:$0xff]
    %v669 = vld [vmem:[#allocation2 + $0xd8] sm:$0xff]
    %v670 = vld [vmem:[#allocation2 + $0xe0] sm:$0xff]
    %v671 = vld [vmem:[#allocation2 + $0xe8] sm:$0xff]
    %v672 = vld [vmem:[#allocation2 + $0xf0] sm:$0xff]
    %v673 = vld [vmem:[#allocation2 + $0xf8] sm:$0xff]
    %v674 = vld [vmem:[#allocation2 + $0x100] sm:$0xff]
    %v675 = vld [vmem:[#allocation2 + $0x108] sm:$0xff]
    %v676 = vld [vmem:[#allocation2 + $0x110] sm:$0xff]
    %v677 = vld [vmem:[#allocation2 + $0x118] sm:$0xff]
    %v678 = vld [vmem:[#allocation2 + $0x120] sm:$0xff]
    %v679 = vld [vmem:[#allocation2 + $0x128] sm:$0xff]
    %v680 = vld [vmem:[#allocation2 + $0x130] sm:$0xff]
    %v681 = vld [vmem:[#allocation2 + $0x138] sm:$0xff]
    %v682 = vld [vmem:[#allocation2 + $0x140] sm:$0xff]
    %v683 = vld [vmem:[#allocation2 + $0x148] sm:$0xff]
    %v684 = vld [vmem:[#allocation2 + $0x150] sm:$0xff]
    %v685 = vld [vmem:[#allocation2 + $0x158] sm:$0xff]
    %v686 = vld [vmem:[#allocation2 + $0x160] sm:$0xff]
    %v687 = vld [vmem:[#allocation2 + $0x168] sm:$0xff]
    %v688 = vld [vmem:[#allocation2 + $0x170] sm:$0xff]
    %v689 = vld [vmem:[#allocation2 + $0x178] sm:$0xff]
    %v690 = vld [vmem:[#allocation2 + $0x180] sm:$0xff]
    %v691 = vld [vmem:[#allocation2 + $0x188] sm:$0xff]
    %v692 = vld [vmem:[#allocation2 + $0x190] sm:$0xff]
    %v693 = vld [vmem:[#allocation2 + $0x198] sm:$0xff]
    %v694 = vld [vmem:[#allocation2 + $0x1a0] sm:$0xff]
    %v695 = vld [vmem:[#allocation2 + $0x1a8] sm:$0xff]
    %v696 = vld [vmem:[#allocation2 + $0x1b0] sm:$0xff]
    %v697 = vld [vmem:[#allocation2 + $0x1b8] sm:$0xff]
    %v698 = vld [vmem:[#allocation2 + $0x1c0] sm:$0xff]
    %v699 = vld [vmem:[#allocation2 + $0x1c8] sm:$0xff]
    %v700 = vld [vmem:[#allocation2 + $0x1d0] sm:$0xff]
    %v701 = vld [vmem:[#allocation2 + $0x1d8] sm:$0xff]
    %v702 = vld [vmem:[#allocation2 + $0x1e0] sm:$0xff]
    %v703 = vld [vmem:[#allocation2 + $0x1e8] sm:$0xff]
    %v704 = vld [vmem:[#allocation2 + $0x1f0] sm:$0xff]
    %v705 = vld [vmem:[#allocation2 + $0x1f8] sm:$0xff]
    %v706 = vld [vmem:[#allocation2 + $0x200] sm:$0xff]
    %v707 = vld [vmem:[#allocation2 + $0x208] sm:$0xff]
    %v708 = vld [vmem:[#allocation2 + $0x210] sm:$0xff]
    %v709 = vld [vmem:[#allocation2 + $0x218] sm:$0xff]
    %v710 = vld [vmem:[#allocation2 + $0x220] sm:$0xff]
    %v711 = vld [vmem:[#allocation2 + $0x228] sm:$0xff]
    %v712 = vld [vmem:[#allocation2 + $0x230] sm:$0xff]
    %v713 = vld [vmem:[#allocation2 + $0x238] sm:$0xff]
    %v714 = vld [vmem:[#allocation2 + $0x240] sm:$0xff]
    %v715 = vld [vmem:[#allocation2 + $0x248] sm:$0xff]
    %v716 = vld [vmem:[#allocation2 + $0x250] sm:$0xff]
    %v717 = vld [vmem:[#allocation2 + $0x258] sm:$0xff]
    %v718 = vld [vmem:[#allocation2 + $0x260] sm:$0xff]
    %v719 = vld [vmem:[#allocation2 + $0x268] sm:$0xff]
    %v720 = vld [vmem:[#allocation2 + $0x270] sm:$0xff]
    %v721 = vld [vmem:[#allocation2 + $0x278] sm:$0xff]
    %v722 = vld [vmem:[#allocation2 + $0x280] sm:$0xff]
    %v723 = vld [vmem:[#allocation2 + $0x288] sm:$0xff]
    %v724 = vld [vmem:[#allocation2 + $0x290] sm:$0xff]
    %v725 = vld [vmem:[#allocation2 + $0x298] sm:$0xff]
    %v726 = vld [vmem:[#allocation2 + $0x2a0] sm:$0xff]
    %v727 = vld [vmem:[#allocation2 + $0x2a8] sm:$0xff]
    %v728 = vld [vmem:[#allocation2 + $0x2b0] sm:$0xff]
    %v729 = vld [vmem:[#allocation2 + $0x2b8] sm:$0xff]
    %v730 = vld [vmem:[#allocation2 + $0x2c0] sm:$0xff]
    %v731 = vld [vmem:[#allocation2 + $0x2c8] sm:$0xff]
    %v732 = vld [vmem:[#allocation2 + $0x2d0] sm:$0xff]
    %v733 = vld [vmem:[#allocation2 + $0x2d8] sm:$0xff]
    %v734 = vld [vmem:[#allocation2 + $0x2e0] sm:$0xff]
    %v735 = vld [vmem:[#allocation2 + $0x2e8] sm:$0xff]
    %v736 = vld [vmem:[#allocation2 + $0x2f0] sm:$0xff]
    %v737 = vld [vmem:[#allocation2 + $0x2f8] sm:$0xff]
    %v738 = vld [vmem:[#allocation2 + $0x300] sm:$0xff]
    %v739 = vld [vmem:[#allocation2 + $0x308] sm:$0xff]
    %v740 = vld [vmem:[#allocation2 + $0x310] sm:$0xff]
    %v741 = vld [vmem:[#allocation2 + $0x318] sm:$0xff]
    %v742 = vld [vmem:[#allocation2 + $0x320] sm:$0xff]
    %v743 = vld [vmem:[#allocation2 + $0x328] sm:$0xff]
    %v744 = vld [vmem:[#allocation2 + $0x330] sm:$0xff]
    %v745 = vld [vmem:[#allocation2 + $0x338] sm:$0xff]
    %v746 = vld [vmem:[#allocation2 + $0x340] sm:$0xff]
    %v747 = vld [vmem:[#allocation2 + $0x348] sm:$0xff]
    %v748 = vld [vmem:[#allocation2 + $0x350] sm:$0xff]
    %v749 = vld [vmem:[#allocation2 + $0x358] sm:$0xff]
    %v750 = vld [vmem:[#allocation2 + $0x360] sm:$0xff]
    %v751 = vld [vmem:[#allocation2 + $0x368] sm:$0xff]
    %v752 = vld [vmem:[#allocation2 + $0x370] sm:$0xff]
    %v753 = vld [vmem:[#allocation2 + $0x378] sm:$0xff]
    %v754 = vld [vmem:[#allocation2 + $0x380] sm:$0xff]
    %v755 = vld [vmem:[#allocation2 + $0x388] sm:$0xff]
    %v756 = vld [vmem:[#allocation2 + $0x390] sm:$0xff]
    %v757 = vld [vmem:[#allocation2 + $0x398] sm:$0xff]
    %v758 = vld [vmem:[#allocation2 + $0x3a0] sm:$0xff]
    %v759 = vld [vmem:[#allocation2 + $0x3a8] sm:$0xff]
    %v760 = vld [vmem:[#allocation2 + $0x3b0] sm:$0xff]
    %v761 = vld [vmem:[#allocation2 + $0x3b8] sm:$0xff]
    %v762 = vld [vmem:[#allocation2 + $0x3c0] sm:$0xff]
    %v763 = vld [vmem:[#allocation2 + $0x3c8] sm:$0xff]
    %v764 = vld [vmem:[#allocation2 + $0x3d0] sm:$0xff]
    %v765 = vld [vmem:[#allocation2 + $0x3d8] sm:$0xff]
    %v766 = vld [vmem:[#allocation2 + $0x3e0] sm:$0xff]
    %v767 = vld [vmem:[#allocation2 + $0x3e8] sm:$0xff]
    %v768 = vld [vmem:[#allocation2 + $0x3f0] sm:$0xff]
    %v769 = vld [vmem:[#allocation2 + $0x3f8] sm:$0xff]
    %v770 = vld [vmem:[%s5] sm:$0xf]
    %v772 = vlaneseq
    %v773 = vshrl.u32 %v772, 7
    %v774 = vsub.s32 0, %v773
    %v775 = vrot.slane %v770, %v774
    %v776 = vlaneseq
    %v777 = vshrl.u32 %v776, 7
    %v778 = vsub.s32 1, %v777
    %v779 = vrot.slane %v770, %v778
    %v780 = vlaneseq
    %v781 = vshrl.u32 %v780, 7
    %v782 = vsub.s32 2, %v781
    %v783 = vrot.slane %v770, %v782
    %v784 = vlaneseq
    %v785 = vshrl.u32 %v784, 7
    %v786 = vsub.s32 3, %v785
    %v787 = vrot.slane %v770, %v786
    %792 = vmatprep.subr.mxu0 %v643
    %793 = vmatpush1.msra.mxu0 %v642
    %794 = vmatprep.subr.mxu0 %v647
    %795 = vmatpush1.msra.mxu0 %v646
    %796 = vmatprep.subr.mxu0 %v651
    %797 = vmatpush1.msra.mxu0 %v650
    %798 = vmatprep.subr.mxu0 %v655
    %799 = vmatpush1.msra.mxu0 %v654
    %800 = vmatprep.subr.mxu0 %v659
    %801 = vmatpush1.msra.mxu0 %v658
    %802 = vmatprep.subr.mxu0 %v663
    %803 = vmatpush1.msra.mxu0 %v662
    %804 = vmatprep.subr.mxu0 %v667
    %805 = vmatpush1.msra.mxu0 %v666
    %806 = vmatprep.subr.mxu0 %v671
    %807 = vmatpush1.msra.mxu0 %v670
    %808 = vmatprep.subr.mxu0 %v675
    %809 = vmatpush1.msra.mxu0 %v674
    %810 = vmatprep.subr.mxu0 %v679
    %811 = vmatpush1.msra.mxu0 %v678
    %812 = vmatprep.subr.mxu0 %v683
    %813 = vmatpush1.msra.mxu0 %v682
    %814 = vmatprep.subr.mxu0 %v687
    %815 = vmatpush1.msra.mxu0 %v686
    %816 = vmatprep.subr.mxu0 %v691
    %817 = vmatpush1.msra.mxu0 %v690
    %818 = vmatprep.subr.mxu0 %v695
    %819 = vmatpush1.msra.mxu0 %v694
    %820 = vmatprep.subr.mxu0 %v699
    %821 = vmatpush1.msra.mxu0 %v698
    %822 = vmatprep.subr.mxu0 %v703
    %823 = vmatpush1.msra.mxu0 %v702
    %824 = vmatprep.subr.mxu0 %v707
    %825 = vmatpush1.msra.mxu0 %v706
    %826 = vmatprep.subr.mxu0 %v711
    %827 = vmatpush1.msra.mxu0 %v710
    %828 = vmatprep.subr.mxu0 %v715
    %829 = vmatpush1.msra.mxu0 %v714
    %830 = vmatprep.subr.mxu0 %v719
    %831 = vmatpush1.msra.mxu0 %v718
    %832 = vmatprep.subr.mxu0 %v723
    %833 = vmatpush1.msra.mxu0 %v722
    %834 = vmatprep.subr.mxu0 %v727
    %835 = vmatpush1.msra.mxu0 %v726
    %836 = vmatprep.subr.mxu0 %v731
    %837 = vmatpush1.msra.mxu0 %v730
    %838 = vmatprep.subr.mxu0 %v735
    %839 = vmatpush1.msra.mxu0 %v734
    %840 = vmatprep.subr.mxu0 %v739
    %841 = vmatpush1.msra.mxu0 %v738
    %842 = vmatprep.subr.mxu0 %v743
    %843 = vmatpush1.msra.mxu0 %v742
    %844 = vmatprep.subr.mxu0 %v747
    %845 = vmatpush1.msra.mxu0 %v746
    %846 = vmatprep.subr.mxu0 %v751
    %847 = vmatpush1.msra.mxu0 %v750
    %848 = vmatprep.subr.mxu0 %v755
    %849 = vmatpush1.msra.mxu0 %v754
    %850 = vmatprep.subr.mxu0 %v759
    %851 = vmatpush1.msra.mxu0 %v758
    %852 = vmatprep.subr.mxu0 %v763
    %853 = vmatpush1.msra.mxu0 %v762
    %854 = vmatprep.subr.mxu0 %v767
    %855 = vmatpush1.msra.mxu0 %v766
    %856 = vmatprep.mubr.f32.mxu0 0.0
    %857 = vmatmul.mubr.f32.gmra.mrb[0].mxu0 %v344
    %v858 = vpop.f32.mrb[0].mxu0
    %v859 = vadd.f32 %v775, %v858
    %v860 = vpop.f32.mrb[0].mxu0
    %v861 = vadd.f32 %v779, %v860
    %862 = vdwg.mxu0
    %863 = vmatprep.subr.mxu0 %v645
    %864 = vmatpush1.msra.mxu0 %v644
    %865 = vmatprep.subr.mxu0 %v649
    %866 = vmatpush1.msra.mxu0 %v648
    %867 = vmatprep.subr.mxu0 %v653
    %868 = vmatpush1.msra.mxu0 %v652
    %869 = vmatprep.subr.mxu0 %v657
    %870 = vmatpush1.msra.mxu0 %v656
    %871 = vmatprep.subr.mxu0 %v661
    %872 = vmatpush1.msra.mxu0 %v660
    %873 = vmatprep.subr.mxu0 %v665
    %874 = vmatpush1.msra.mxu0 %v664
    %875 = vmatprep.subr.mxu0 %v669
    %876 = vmatpush1.msra.mxu0 %v668
    %877 = vmatprep.subr.mxu0 %v673
    %878 = vmatpush1.msra.mxu0 %v672
    %879 = vmatprep.subr.mxu0 %v677
    %880 = vmatpush1.msra.mxu0 %v676
    %881 = vmatprep.subr.mxu0 %v681
    %882 = vmatpush1.msra.mxu0 %v680
    %883 = vmatprep.subr.mxu0 %v685
    %884 = vmatpush1.msra.mxu0 %v684
    %885 = vmatprep.subr.mxu0 %v689
    %886 = vmatpush1.msra.mxu0 %v688
    %887 = vmatprep.subr.mxu0 %v693
    %888 = vmatpush1.msra.mxu0 %v692
    %889 = vmatprep.subr.mxu0 %v697
    %890 = vmatpush1.msra.mxu0 %v696
    %891 = vmatprep.subr.mxu0 %v701
    %892 = vmatpush1.msra.mxu0 %v700
    %893 = vmatprep.subr.mxu0 %v705
    %894 = vmatpush1.msra.mxu0 %v704
    %895 = vmatprep.subr.mxu0 %v709
    %896 = vmatpush1.msra.mxu0 %v708
    %897 = vmatprep.subr.mxu0 %v713
    %898 = vmatpush1.msra.mxu0 %v712
    %899 = vmatprep.subr.mxu0 %v717
    %900 = vmatpush1.msra.mxu0 %v716
    %901 = vmatprep.subr.mxu0 %v721
    %902 = vmatpush1.msra.mxu0 %v720
    %903 = vmatprep.subr.mxu0 %v725
    %904 = vmatpush1.msra.mxu0 %v724
    %905 = vmatprep.subr.mxu0 %v729
    %906 = vmatpush1.msra.mxu0 %v728
    %907 = vmatprep.subr.mxu0 %v733
    %908 = vmatpush1.msra.mxu0 %v732
    %909 = vmatprep.subr.mxu0 %v737
    %910 = vmatpush1.msra.mxu0 %v736
    %911 = vmatprep.subr.mxu0 %v741
    %912 = vmatpush1.msra.mxu0 %v740
    %913 = vmatprep.subr.mxu0 %v745
    %914 = vmatpush1.msra.mxu0 %v744
    %915 = vmatprep.subr.mxu0 %v749
    %916 = vmatpush1.msra.mxu0 %v748
    %917 = vmatprep.subr.mxu0 %v753
    %918 = vmatpush1.msra.mxu0 %v752
    %919 = vmatprep.subr.mxu0 %v757
    %920 = vmatpush1.msra.mxu0 %v756
    %921 = vmatprep.subr.mxu0 %v761
    %922 = vmatpush1.msra.mxu0 %v760
    %923 = vmatprep.subr.mxu0 %v765
    %924 = vmatpush1.msra.mxu0 %v764
    %925 = vmatprep.subr.mxu0 %v769
    %926 = vmatpush1.msra.mxu0 %v768
    %927 = vmatprep.mubr.f32.mxu0 0.0
    %928 = vmatmul.mubr.f32.gmra.mrb[0].mxu0 %v344
    %v929 = vpop.f32.mrb[0].mxu0
    %v930 = vadd.f32 %v783, %v929
    %v931 = vpop.f32.mrb[0].mxu0
    %v932 = vadd.f32 %v787, %v931
    %933 = vdwg.mxu0
    %v934 = vxor.u32 %v859, 2147483648
    %v935 = vxor.u32 %v861, 2147483648
    %v936 = vxor.u32 %v930, 2147483648
    %v937 = vmul.f32 %v934, 1.442695
    %v938 = vpow.pop %v937
    %v939 = vmul.f32 %v935, 1.442695
    %v940 = vpow.pop %v939
    %v941 = vmul.f32 %v936, 1.442695
    %v942 = vpow.pop %v941
    %v943 = vadd.f32 %v938, 1.0
    %v944 = vadd.f32 %v940, 1.0
    %v945 = vadd.f32 %v942, 1.0
    %v946 = vrcp.pop %v943
    %v947 = vmul.f32 1.0, %v946
    %v948 = vrcp.pop %v944
    %v949 = vmul.f32 1.0, %v948
    %v950 = vrcp.pop %v945
    %v951 = vmul.f32 1.0, %v950
    %v952 = vtanh.pop %v932
    %v953 = vmul.f32 %v949, 0.0
    %v954 = vmul.f32 %v947, %v952
    %v955 = vadd.f32 %v953, %v954
    %v956 = vtanh.pop %v955
    %v957 = vmul.f32 %v951, %v956
    %s958 = scalar_lea.vmem %s0, 4
    %v959 = vld [vmem:[%s958] sm:$0x3]
    %961 = vset.pattern.permute.xlu0 0
    %962 = vperm.xlu0 %961, %v959
    %v963 = vpop.permute.xlu0 %962
    %v965 = vmul.f32 %v963, %v361
    %v966 = vmul.f32 %v963, %v365
    %v967 = vmul.f32 %v963, %v369
    %v968 = vmul.f32 %v963, %v373
    %v969 = vadd.f32 %v965, %v387
    %v970 = vadd.f32 %v966, %v391
    %v971 = vadd.f32 %v967, %v395
    %v972 = vadd.f32 %v968, %v399
    %973 = vmatprep.subr.mxu0 %v409
    %974 = vmatpush1.msra.mxu0 %v408
    %975 = vmatprep.subr.mxu0 %v413
    %976 = vmatpush1.msra.mxu0 %v412
    %977 = vmatprep.subr.mxu0 %v417
    %978 = vmatpush1.msra.mxu0 %v416
    %979 = vmatprep.subr.mxu0 %v421
    %980 = vmatpush1.msra.mxu0 %v420
    %981 = vmatprep.subr.mxu0 %v425
    %982 = vmatpush1.msra.mxu0 %v424
    %983 = vmatprep.subr.mxu0 %v429
    %984 = vmatpush1.msra.mxu0 %v428
    %985 = vmatprep.subr.mxu0 %v433
    %986 = vmatpush1.msra.mxu0 %v432
    %987 = vmatprep.subr.mxu0 %v437
    %988 = vmatpush1.msra.mxu0 %v436
    %989 = vmatprep.subr.mxu0 %v441
    %990 = vmatpush1.msra.mxu0 %v440
    %991 = vmatprep.subr.mxu0 %v445
    %992 = vmatpush1.msra.mxu0 %v444
    %993 = vmatprep.subr.mxu0 %v449
    %994 = vmatpush1.msra.mxu0 %v448
    %995 = vmatprep.subr.mxu0 %v453
    %996 = vmatpush1.msra.mxu0 %v452
    %997 = vmatprep.subr.mxu0 %v457
    %998 = vmatpush1.msra.mxu0 %v456
    %999 = vmatprep.subr.mxu0 %v461
    %1000 = vmatpush1.msra.mxu0 %v460
    %1001 = vmatprep.subr.mxu0 %v465
    %1002 = vmatpush1.msra.mxu0 %v464
    %1003 = vmatprep.subr.mxu0 %v469
    %1004 = vmatpush1.msra.mxu0 %v468
    %1005 = vmatprep.subr.mxu0 0.0
    %1006 = vmatpush1.msra.mxu0 0.0
    %1007 = vmatprep.subr.mxu0 0.0
    %1008 = vmatpush1.msra.mxu0 0.0
    %1009 = vmatprep.subr.mxu0 0.0
    %1010 = vmatpush1.msra.mxu0 0.0
    %1011 = vmatprep.subr.mxu0 0.0
    %1012 = vmatpush1.msra.mxu0 0.0
    %1013 = vmatprep.subr.mxu0 0.0
    %1014 = vmatpush1.msra.mxu0 0.0
    %1015 = vmatprep.subr.mxu0 0.0
    %1016 = vmatpush1.msra.mxu0 0.0
    %1017 = vmatprep.subr.mxu0 0.0
    %1018 = vmatpush1.msra.mxu0 0.0
    %1019 = vmatprep.subr.mxu0 0.0
    %1020 = vmatpush1.msra.mxu0 0.0
    %1021 = vmatprep.subr.mxu0 0.0
    %1022 = vmatpush1.msra.mxu0 0.0
    %1023 = vmatprep.subr.mxu0 0.0
    %1024 = vmatpush1.msra.mxu0 0.0
    %1025 = vmatprep.subr.mxu0 0.0
    %1026 = vmatpush1.msra.mxu0 0.0
    %1027 = vmatprep.subr.mxu0 0.0
    %1028 = vmatpush1.msra.mxu0 0.0
    %1029 = vmatprep.subr.mxu0 0.0
    %1030 = vmatpush1.msra.mxu0 0.0
    %1031 = vmatprep.subr.mxu0 0.0
    %1032 = vmatpush1.msra.mxu0 0.0
    %1033 = vmatprep.subr.mxu0 0.0
    %1034 = vmatpush1.msra.mxu0 0.0
    %1035 = vmatprep.subr.mxu0 0.0
    %1036 = vmatpush1.msra.mxu0 0.0
    %1037 = vmatprep.mubr.f32.mxu0 0.0
    %1038 = vmatmul.mubr.f32.gmra.mrb[0].mxu0 %v641
    %v1039 = vpop.f32.mrb[0].mxu0
    %v1040 = vadd.f32 0.0, %v1039
    %v1041 = vpop.f32.mrb[0].mxu0
    %v1042 = vadd.f32 0.0, %v1041
    %1043 = vdwg.mxu0
    %1044 = vmatprep.subr.mxu0 %v411
    %1045 = vmatpush1.msra.mxu0 %v410
    %1046 = vmatprep.subr.mxu0 %v415
    %1047 = vmatpush1.msra.mxu0 %v414
    %1048 = vmatprep.subr.mxu0 %v419
    %1049 = vmatpush1.msra.mxu0 %v418
    %1050 = vmatprep.subr.mxu0 %v423
    %1051 = vmatpush1.msra.mxu0 %v422
    %1052 = vmatprep.subr.mxu0 %v427
    %1053 = vmatpush1.msra.mxu0 %v426
    %1054 = vmatprep.subr.mxu0 %v431
    %1055 = vmatpush1.msra.mxu0 %v430
    %1056 = vmatprep.subr.mxu0 %v435
    %1057 = vmatpush1.msra.mxu0 %v434
    %1058 = vmatprep.subr.mxu0 %v439
    %1059 = vmatpush1.msra.mxu0 %v438
    %1060 = vmatprep.subr.mxu0 %v443
    %1061 = vmatpush1.msra.mxu0 %v442
    %1062 = vmatprep.subr.mxu0 %v447
    %1063 = vmatpush1.msra.mxu0 %v446
    %1064 = vmatprep.subr.mxu0 %v451
    %1065 = vmatpush1.msra.mxu0 %v450
    %1066 = vmatprep.subr.mxu0 %v455
    %1067 = vmatpush1.msra.mxu0 %v454
    %1068 = vmatprep.subr.mxu0 %v459
    %1069 = vmatpush1.msra.mxu0 %v458
    %1070 = vmatprep.subr.mxu0 %v463
    %1071 = vmatpush1.msra.mxu0 %v462
    %1072 = vmatprep.subr.mxu0 %v467
    %1073 = vmatpush1.msra.mxu0 %v466
    %1074 = vmatprep.subr.mxu0 %v471
    %1075 = vmatpush1.msra.mxu0 %v470
    %1076 = vmatprep.subr.mxu0 0.0
    %1077 = vmatpush1.msra.mxu0 0.0
    %1078 = vmatprep.subr.mxu0 0.0
    %1079 = vmatpush1.msra.mxu0 0.0
    %1080 = vmatprep.subr.mxu0 0.0
    %1081 = vmatpush1.msra.mxu0 0.0
    %1082 = vmatprep.subr.mxu0 0.0
    %1083 = vmatpush1.msra.mxu0 0.0
    %1084 = vmatprep.subr.mxu0 0.0
    %1085 = vmatpush1.msra.mxu0 0.0
    %1086 = vmatprep.subr.mxu0 0.0
    %1087 = vmatpush1.msra.mxu0 0.0
    %1088 = vmatprep.subr.mxu0 0.0
    %1089 = vmatpush1.msra.mxu0 0.0
    %1090 = vmatprep.subr.mxu0 0.0
    %1091 = vmatpush1.msra.mxu0 0.0
    %1092 = vmatprep.subr.mxu0 0.0
    %1093 = vmatpush1.msra.mxu0 0.0
    %1094 = vmatprep.subr.mxu0 0.0
    %1095 = vmatpush1.msra.mxu0 0.0
    %1096 = vmatprep.subr.mxu0 0.0
    %1097 = vmatpush1.msra.mxu0 0.0
    %1098 = vmatprep.subr.mxu0 0.0
    %1099 = vmatpush1.msra.mxu0 0.0
    %1100 = vmatprep.subr.mxu0 0.0
    %1101 = vmatpush1.msra.mxu0 0.0
    %1102 = vmatprep.subr.mxu0 0.0
    %1103 = vmatpush1.msra.mxu0 0.0
    %1104 = vmatprep.subr.mxu0 0.0
    %1105 = vmatpush1.msra.mxu0 0.0
    %1106 = vmatprep.subr.mxu0 0.0
    %1107 = vmatpush1.msra.mxu0 0.0
    %1108 = vmatprep.mubr.f32.mxu0 0.0
    %1109 = vmatmul.mubr.f32.gmra.mrb[0].mxu0 %v641
    %v1110 = vpop.f32.mrb[0].mxu0
    %v1111 = vadd.f32 0.0, %v1110
    %v1112 = vpop.f32.mrb[0].mxu0
    %v1113 = vadd.f32 0.0, %v1112
    %1114 = vdwg.mxu0
    %v1115 = vadd.f32 %v969, %v1040
    %v1116 = vadd.f32 %v970, %v1042
    %v1117 = vadd.f32 %v971, %v1111
    %v1118 = vadd.f32 %v972, %v1113
    %v1119 = vxor.u32 %v1115, 2147483648
    %v1120 = vxor.u32 %v1116, 2147483648
    %v1121 = vxor.u32 %v1117, 2147483648
    %v1122 = vmul.f32 %v1119, 1.442695
    %v1123 = vpow.pop %v1122
    %v1124 = vmul.f32 %v1120, 1.442695
    %v1125 = vpow.pop %v1124
    %v1126 = vmul.f32 %v1121, 1.442695
    %v1127 = vpow.pop %v1126
    %v1128 = vadd.f32 %v1123, 1.0
    %v1129 = vadd.f32 %v1125, 1.0
    %v1130 = vadd.f32 %v1127, 1.0
    %v1131 = vrcp.pop %v1128
    %v1132 = vmul.f32 1.0, %v1131
    %v1133 = vrcp.pop %v1129
    %v1134 = vmul.f32 1.0, %v1133
    %v1135 = vrcp.pop %v1130
    %v1136 = vmul.f32 1.0, %v1135
    %v1137 = vtanh.pop %v1118
    %v1138 = vmul.f32 %v1134, %v639
    %v1139 = vmul.f32 %v1132, %v1137
    %v1140 = vadd.f32 %v1138, %v1139
    %v1141 = vtanh.pop %v1140
    %v1142 = vmul.f32 %v1136, %v1141
    %1143 = vmatprep.subr.mxu0 %v643
    %1144 = vmatpush1.msra.mxu0 %v642
    %1145 = vmatprep.subr.mxu0 %v647
    %1146 = vmatpush1.msra.mxu0 %v646
    %1147 = vmatprep.subr.mxu0 %v651
    %1148 = vmatpush1.msra.mxu0 %v650
    %1149 = vmatprep.subr.mxu0 %v655
    %1150 = vmatpush1.msra.mxu0 %v654
    %1151 = vmatprep.subr.mxu0 %v659
    %1152 = vmatpush1.msra.mxu0 %v658
    %1153 = vmatprep.subr.mxu0 %v663
    %1154 = vmatpush1.msra.mxu0 %v662
    %1155 = vmatprep.subr.mxu0 %v667
    %1156 = vmatpush1.msra.mxu0 %v666
    %1157 = vmatprep.subr.mxu0 %v671
    %1158 = vmatpush1.msra.mxu0 %v670
    %1159 = vmatprep.subr.mxu0 %v675
    %1160 = vmatpush1.msra.mxu0 %v674
    %1161 = vmatprep.subr.mxu0 %v679
    %1162 = vmatpush1.msra.mxu0 %v678
    %1163 = vmatprep.subr.mxu0 %v683
    %1164 = vmatpush1.msra.mxu0 %v682
    %1165 = vmatprep.subr.mxu0 %v687
    %1166 = vmatpush1.msra.mxu0 %v686
    %1167 = vmatprep.subr.mxu0 %v691
    %1168 = vmatpush1.msra.mxu0 %v690
    %1169 = vmatprep.subr.mxu0 %v695
    %1170 = vmatpush1.msra.mxu0 %v694
    %1171 = vmatprep.subr.mxu0 %v699
    %1172 = vmatpush1.msra.mxu0 %v698
    %1173 = vmatprep.subr.mxu0 %v703
    %1174 = vmatpush1.msra.mxu0 %v702
    %1175 = vmatprep.subr.mxu0 %v707
    %1176 = vmatpush1.msra.mxu0 %v706
    %1177 = vmatprep.subr.mxu0 %v711
    %1178 = vmatpush1.msra.mxu0 %v710
    %1179 = vmatprep.subr.mxu0 %v715
    %1180 = vmatpush1.msra.mxu0 %v714
    %1181 = vmatprep.subr.mxu0 %v719
    %1182 = vmatpush1.msra.mxu0 %v718
    %1183 = vmatprep.subr.mxu0 %v723
    %1184 = vmatpush1.msra.mxu0 %v722
    %1185 = vmatprep.subr.mxu0 %v727
    %1186 = vmatpush1.msra.mxu0 %v726
    %1187 = vmatprep.subr.mxu0 %v731
    %1188 = vmatpush1.msra.mxu0 %v730
    %1189 = vmatprep.subr.mxu0 %v735
    %1190 = vmatpush1.msra.mxu0 %v734
    %1191 = vmatprep.subr.mxu0 %v739
    %1192 = vmatpush1.msra.mxu0 %v738
    %1193 = vmatprep.subr.mxu0 %v743
    %1194 = vmatpush1.msra.mxu0 %v742
    %1195 = vmatprep.subr.mxu0 %v747
    %1196 = vmatpush1.msra.mxu0 %v746
    %1197 = vmatprep.subr.mxu0 %v751
    %1198 = vmatpush1.msra.mxu0 %v750
    %1199 = vmatprep.subr.mxu0 %v755
    %1200 = vmatpush1.msra.mxu0 %v754
    %1201 = vmatprep.subr.mxu0 %v759
    %1202 = vmatpush1.msra.mxu0 %v758
    %1203 = vmatprep.subr.mxu0 %v763
    %1204 = vmatpush1.msra.mxu0 %v762
    %1205 = vmatprep.subr.mxu0 %v767
    %1206 = vmatpush1.msra.mxu0 %v766
    %1207 = vmatprep.mubr.f32.mxu0 %v957
    %1208 = vmatmul.mubr.f32.gmra.mrb[0].mxu0 %v641
    %v1209 = vpop.f32.mrb[0].mxu0
    %v1210 = vadd.f32 %v775, %v1209
    %v1211 = vpop.f32.mrb[0].mxu0
    %v1212 = vadd.f32 %v779, %v1211
    %1213 = vdwg.mxu0
    %1214 = vmatprep.subr.mxu0 %v645
    %1215 = vmatpush1.msra.mxu0 %v644
    %1216 = vmatprep.subr.mxu0 %v649
    %1217 = vmatpush1.msra.mxu0 %v648
    %1218 = vmatprep.subr.mxu0 %v653
    %1219 = vmatpush1.msra.mxu0 %v652
    %1220 = vmatprep.subr.mxu0 %v657
    %1221 = vmatpush1.msra.mxu0 %v656
    %1222 = vmatprep.subr.mxu0 %v661
    %1223 = vmatpush1.msra.mxu0 %v660
    %1224 = vmatprep.subr.mxu0 %v665
    %1225 = vmatpush1.msra.mxu0 %v664
    %1226 = vmatprep.subr.mxu0 %v669
    %1227 = vmatpush1.msra.mxu0 %v668
    %1228 = vmatprep.subr.mxu0 %v673
    %1229 = vmatpush1.msra.mxu0 %v672
    %1230 = vmatprep.subr.mxu0 %v677
    %1231 = vmatpush1.msra.mxu0 %v676
    %1232 = vmatprep.subr.mxu0 %v681
    %1233 = vmatpush1.msra.mxu0 %v680
    %1234 = vmatprep.subr.mxu0 %v685
    %1235 = vmatpush1.msra.mxu0 %v684
    %1236 = vmatprep.subr.mxu0 %v689
    %1237 = vmatpush1.msra.mxu0 %v688
    %1238 = vmatprep.subr.mxu0 %v693
    %1239 = vmatpush1.msra.mxu0 %v692
    %1240 = vmatprep.subr.mxu0 %v697
    %1241 = vmatpush1.msra.mxu0 %v696
    %1242 = vmatprep.subr.mxu0 %v701
    %1243 = vmatpush1.msra.mxu0 %v700
    %1244 = vmatprep.subr.mxu0 %v705
    %1245 = vmatpush1.msra.mxu0 %v704
    %1246 = vmatprep.subr.mxu0 %v709
    %1247 = vmatpush1.msra.mxu0 %v708
    %1248 = vmatprep.subr.mxu0 %v713
    %1249 = vmatpush1.msra.mxu0 %v712
    %1250 = vmatprep.subr.mxu0 %v717
    %1251 = vmatpush1.msra.mxu0 %v716
    %1252 = vmatprep.subr.mxu0 %v721
    %1253 = vmatpush1.msra.mxu0 %v720
    %1254 = vmatprep.subr.mxu0 %v725
    %1255 = vmatpush1.msra.mxu0 %v724
    %1256 = vmatprep.subr.mxu0 %v729
    %1257 = vmatpush1.msra.mxu0 %v728
    %1258 = vmatprep.subr.mxu0 %v733
    %1259 = vmatpush1.msra.mxu0 %v732
    %1260 = vmatprep.subr.mxu0 %v737
    %1261 = vmatpush1.msra.mxu0 %v736
    %1262 = vmatprep.subr.mxu0 %v741
    %1263 = vmatpush1.msra.mxu0 %v740
    %1264 = vmatprep.subr.mxu0 %v745
    %1265 = vmatpush1.msra.mxu0 %v744
    %1266 = vmatprep.subr.mxu0 %v749
    %1267 = vmatpush1.msra.mxu0 %v748
    %1268 = vmatprep.subr.mxu0 %v753
    %1269 = vmatpush1.msra.mxu0 %v752
    %1270 = vmatprep.subr.mxu0 %v757
    %1271 = vmatpush1.msra.mxu0 %v756
    %1272 = vmatprep.subr.mxu0 %v761
    %1273 = vmatpush1.msra.mxu0 %v760
    %1274 = vmatprep.subr.mxu0 %v765
    %1275 = vmatpush1.msra.mxu0 %v764
    %1276 = vmatprep.subr.mxu0 %v769
    %1277 = vmatpush1.msra.mxu0 %v768
    %1278 = vmatprep.mubr.f32.mxu0 %v957
    %1279 = vmatmul.mubr.f32.gmra.mrb[0].mxu0 %v641
    %v1280 = vpop.f32.mrb[0].mxu0
    %v1281 = vadd.f32 %v783, %v1280
    %v1282 = vpop.f32.mrb[0].mxu0
    %v1283 = vadd.f32 %v787, %v1282
    %1284 = vdwg.mxu0
    %v1285 = vxor.u32 %v1210, 2147483648
    %v1286 = vxor.u32 %v1212, 2147483648
    %v1287 = vxor.u32 %v1281, 2147483648
    %v1288 = vmul.f32 %v1285, 1.442695
    %v1289 = vpow.pop %v1288
    %v1290 = vmul.f32 %v1286, 1.442695
    %v1291 = vpow.pop %v1290
    %v1292 = vmul.f32 %v1287, 1.442695
    %v1293 = vpow.pop %v1292
    %v1294 = vadd.f32 %v1289, 1.0
    %v1295 = vadd.f32 %v1291, 1.0
    %v1296 = vadd.f32 %v1293, 1.0
    %v1297 = vrcp.pop %v1294
    %v1298 = vmul.f32 1.0, %v1297
    %v1299 = vrcp.pop %v1295
    %v1300 = vmul.f32 1.0, %v1299
    %v1301 = vrcp.pop %v1296
    %v1302 = vmul.f32 1.0, %v1301
    %v1303 = vtanh.pop %v1283
    %v1304 = vmul.f32 %v1300, %v955
    %v1305 = vmul.f32 %v1298, %v1303
    %v1306 = vadd.f32 %v1304, %v1305
    %v1307 = vtanh.pop %v1306
    %v1308 = vmul.f32 %v1302, %v1307
    %s1309 = scalar_lea.vmem %s0, 6
    %v1310 = vld [vmem:[%s1309] sm:$0x3]
    %1312 = vset.pattern.permute.xlu0 0
    %1313 = vperm.xlu0 %1312, %v1310
    %v1314 = vpop.permute.xlu0 %1313
    %v1316 = vmul.f32 %v1314, %v361
    %v1317 = vmul.f32 %v1314, %v365
    %v1318 = vmul.f32 %v1314, %v369
    %v1319 = vmul.f32 %v1314, %v373
    %v1320 = vadd.f32 %v1316, %v387
    %v1321 = vadd.f32 %v1317, %v391
    %v1322 = vadd.f32 %v1318, %v395
    %v1323 = vadd.f32 %v1319, %v399
    %1324 = vmatprep.subr.mxu0 %v409
    %1325 = vmatpush1.msra.mxu0 %v408
    %1326 = vmatprep.subr.mxu0 %v413
    %1327 = vmatpush1.msra.mxu0 %v412
    %1328 = vmatprep.subr.mxu0 %v417
    %1329 = vmatpush1.msra.mxu0 %v416
    %1330 = vmatprep.subr.mxu0 %v421
    %1331 = vmatpush1.msra.mxu0 %v420
    %1332 = vmatprep.subr.mxu0 %v425
    %1333 = vmatpush1.msra.mxu0 %v424
    %1334 = vmatprep.subr.mxu0 %v429
    %1335 = vmatpush1.msra.mxu0 %v428
    %1336 = vmatprep.subr.mxu0 %v433
    %1337 = vmatpush1.msra.mxu0 %v432
    %1338 = vmatprep.subr.mxu0 %v437
    %1339 = vmatpush1.msra.mxu0 %v436
    %1340 = vmatprep.subr.mxu0 %v441
    %1341 = vmatpush1.msra.mxu0 %v440
    %1342 = vmatprep.subr.mxu0 %v445
    %1343 = vmatpush1.msra.mxu0 %v444
    %1344 = vmatprep.subr.mxu0 %v449
    %1345 = vmatpush1.msra.mxu0 %v448
    %1346 = vmatprep.subr.mxu0 %v453
    %1347 = vmatpush1.msra.mxu0 %v452
    %1348 = vmatprep.subr.mxu0 %v457
    %1349 = vmatpush1.msra.mxu0 %v456
    %1350 = vmatprep.subr.mxu0 %v461
    %1351 = vmatpush1.msra.mxu0 %v460
    %1352 = vmatprep.subr.mxu0 %v465
    %1353 = vmatpush1.msra.mxu0 %v464
    %1354 = vmatprep.subr.mxu0 %v469
    %1355 = vmatpush1.msra.mxu0 %v468
    %1356 = vmatprep.subr.mxu0 0.0
    %1357 = vmatpush1.msra.mxu0 0.0
    %1358 = vmatprep.subr.mxu0 0.0
    %1359 = vmatpush1.msra.mxu0 0.0
    %1360 = vmatprep.subr.mxu0 0.0
    %1361 = vmatpush1.msra.mxu0 0.0
    %1362 = vmatprep.subr.mxu0 0.0
    %1363 = vmatpush1.msra.mxu0 0.0
    %1364 = vmatprep.subr.mxu0 0.0
    %1365 = vmatpush1.msra.mxu0 0.0
    %1366 = vmatprep.subr.mxu0 0.0
    %1367 = vmatpush1.msra.mxu0 0.0
    %1368 = vmatprep.subr.mxu0 0.0
    %1369 = vmatpush1.msra.mxu0 0.0
    %1370 = vmatprep.subr.mxu0 0.0
    %1371 = vmatpush1.msra.mxu0 0.0
    %1372 = vmatprep.subr.mxu0 0.0
    %1373 = vmatpush1.msra.mxu0 0.0
    %1374 = vmatprep.subr.mxu0 0.0
    %1375 = vmatpush1.msra.mxu0 0.0
    %1376 = vmatprep.subr.mxu0 0.0
    %1377 = vmatpush1.msra.mxu0 0.0
    %1378 = vmatprep.subr.mxu0 0.0
    %1379 = vmatpush1.msra.mxu0 0.0
    %1380 = vmatprep.subr.mxu0 0.0
    %1381 = vmatpush1.msra.mxu0 0.0
    %1382 = vmatprep.subr.mxu0 0.0
    %1383 = vmatpush1.msra.mxu0 0.0
    %1384 = vmatprep.subr.mxu0 0.0
    %1385 = vmatpush1.msra.mxu0 0.0
    %1386 = vmatprep.subr.mxu0 0.0
    %1387 = vmatpush1.msra.mxu0 0.0
    %1388 = vmatprep.mubr.f32.mxu0 0.0
    %1389 = vmatmul.mubr.f32.gmra.mrb[0].mxu0 %v1142
    %v1390 = vpop.f32.mrb[0].mxu0
    %v1391 = vadd.f32 0.0, %v1390
    %v1392 = vpop.f32.mrb[0].mxu0
    %v1393 = vadd.f32 0.0, %v1392
    %1394 = vdwg.mxu0
    %1395 = vmatprep.subr.mxu0 %v411
    %1396 = vmatpush1.msra.mxu0 %v410
    %1397 = vmatprep.subr.mxu0 %v415
    %1398 = vmatpush1.msra.mxu0 %v414
    %1399 = vmatprep.subr.mxu0 %v419
    %1400 = vmatpush1.msra.mxu0 %v418
    %1401 = vmatprep.subr.mxu0 %v423
    %1402 = vmatpush1.msra.mxu0 %v422
    %1403 = vmatprep.subr.mxu0 %v427
    %1404 = vmatpush1.msra.mxu0 %v426
    %1405 = vmatprep.subr.mxu0 %v431
    %1406 = vmatpush1.msra.mxu0 %v430
    %1407 = vmatprep.subr.mxu0 %v435
    %1408 = vmatpush1.msra.mxu0 %v434
    %1409 = vmatprep.subr.mxu0 %v439
    %1410 = vmatpush1.msra.mxu0 %v438
    %1411 = vmatprep.subr.mxu0 %v443
    %1412 = vmatpush1.msra.mxu0 %v442
    %1413 = vmatprep.subr.mxu0 %v447
    %1414 = vmatpush1.msra.mxu0 %v446
    %1415 = vmatprep.subr.mxu0 %v451
    %1416 = vmatpush1.msra.mxu0 %v450
    %1417 = vmatprep.subr.mxu0 %v455
    %1418 = vmatpush1.msra.mxu0 %v454
    %1419 = vmatprep.subr.mxu0 %v459
    %1420 = vmatpush1.msra.mxu0 %v458
    %1421 = vmatprep.subr.mxu0 %v463
    %1422 = vmatpush1.msra.mxu0 %v462
    %1423 = vmatprep.subr.mxu0 %v467
    %1424 = vmatpush1.msra.mxu0 %v466
    %1425 = vmatprep.subr.mxu0 %v471
    %1426 = vmatpush1.msra.mxu0 %v470
    %1427 = vmatprep.subr.mxu0 0.0
    %1428 = vmatpush1.msra.mxu0 0.0
    %1429 = vmatprep.subr.mxu0 0.0
    %1430 = vmatpush1.msra.mxu0 0.0
    %1431 = vmatprep.subr.mxu0 0.0
    %1432 = vmatpush1.msra.mxu0 0.0
    %1433 = vmatprep.subr.mxu0 0.0
    %1434 = vmatpush1.msra.mxu0 0.0
    %1435 = vmatprep.subr.mxu0 0.0
    %1436 = vmatpush1.msra.mxu0 0.0
    %1437 = vmatprep.subr.mxu0 0.0
    %1438 = vmatpush1.msra.mxu0 0.0
    %1439 = vmatprep.subr.mxu0 0.0
    %1440 = vmatpush1.msra.mxu0 0.0
    %1441 = vmatprep.subr.mxu0 0.0
    %1442 = vmatpush1.msra.mxu0 0.0
    %1443 = vmatprep.subr.mxu0 0.0
    %1444 = vmatpush1.msra.mxu0 0.0
    %1445 = vmatprep.subr.mxu0 0.0
    %1446 = vmatpush1.msra.mxu0 0.0
    %1447 = vmatprep.subr.mxu0 0.0
    %1448 = vmatpush1.msra.mxu0 0.0
    %1449 = vmatprep.subr.mxu0 0.0
    %1450 = vmatpush1.msra.mxu0 0.0
    %1451 = vmatprep.subr.mxu0 0.0
    %1452 = vmatpush1.msra.mxu0 0.0
    %1453 = vmatprep.subr.mxu0 0.0
    %1454 = vmatpush1.msra.mxu0 0.0
    %1455 = vmatprep.subr.mxu0 0.0
    %1456 = vmatpush1.msra.mxu0 0.0
    %1457 = vmatprep.subr.mxu0 0.0
    %1458 = vmatpush1.msra.mxu0 0.0
    %1459 = vmatprep.mubr.f32.mxu0 0.0
    %1460 = vmatmul.mubr.f32.gmra.mrb[0].mxu0 %v1142
    %v1461 = vpop.f32.mrb[0].mxu0
    %v1462 = vadd.f32 0.0, %v1461
    %v1463 = vpop.f32.mrb[0].mxu0
    %v1464 = vadd.f32 0.0, %v1463
    %1465 = vdwg.mxu0
    %v1466 = vadd.f32 %v1320, %v1391
    %v1467 = vadd.f32 %v1321, %v1393
    %v1468 = vadd.f32 %v1322, %v1462
    %v1469 = vadd.f32 %v1323, %v1464
    %v1470 = vxor.u32 %v1466, 2147483648
    %v1471 = vxor.u32 %v1467, 2147483648
    %v1472 = vxor.u32 %v1468, 2147483648
    %v1473 = vmul.f32 %v1470, 1.442695
    %v1474 = vpow.pop %v1473
    %v1475 = vmul.f32 %v1471, 1.442695
    %v1476 = vpow.pop %v1475
    %v1477 = vmul.f32 %v1472, 1.442695
    %v1478 = vpow.pop %v1477
    %v1479 = vadd.f32 %v1474, 1.0
    %v1480 = vadd.f32 %v1476, 1.0
    %v1481 = vadd.f32 %v1478, 1.0
    %v1482 = vrcp.pop %v1479
    %v1483 = vmul.f32 1.0, %v1482
    %v1484 = vrcp.pop %v1480
    %v1485 = vmul.f32 1.0, %v1484
    %v1486 = vrcp.pop %v1481
    %v1487 = vmul.f32 1.0, %v1486
    %v1488 = vtanh.pop %v1469
    %v1489 = vmul.f32 %v1485, %v1140
    %v1490 = vmul.f32 %v1483, %v1488
    %v1491 = vadd.f32 %v1489, %v1490
    %v1492 = vtanh.pop %v1491
    %v1493 = vmul.f32 %v1487, %v1492
    %1494 = vmatprep.subr.mxu0 %v643
    %1495 = vmatpush1.msra.mxu0 %v642
    %1496 = vmatprep.subr.mxu0 %v647
    %1497 = vmatpush1.msra.mxu0 %v646
    %1498 = vmatprep.subr.mxu0 %v651
    %1499 = vmatpush1.msra.mxu0 %v650
    %1500 = vmatprep.subr.mxu0 %v655
    %1501 = vmatpush1.msra.mxu0 %v654
    %1502 = vmatprep.subr.mxu0 %v659
    %1503 = vmatpush1.msra.mxu0 %v658
    %1504 = vmatprep.subr.mxu0 %v663
    %1505 = vmatpush1.msra.mxu0 %v662
    %1506 = vmatprep.subr.mxu0 %v667
    %1507 = vmatpush1.msra.mxu0 %v666
    %1508 = vmatprep.subr.mxu0 %v671
    %1509 = vmatpush1.msra.mxu0 %v670
    %1510 = vmatprep.subr.mxu0 %v675
    %1511 = vmatpush1.msra.mxu0 %v674
    %1512 = vmatprep.subr.mxu0 %v679
    %1513 = vmatpush1.msra.mxu0 %v678
    %1514 = vmatprep.subr.mxu0 %v683
    %1515 = vmatpush1.msra.mxu0 %v682
    %1516 = vmatprep.subr.mxu0 %v687
    %1517 = vmatpush1.msra.mxu0 %v686
    %1518 = vmatprep.subr.mxu0 %v691
    %1519 = vmatpush1.msra.mxu0 %v690
    %1520 = vmatprep.subr.mxu0 %v695
    %1521 = vmatpush1.msra.mxu0 %v694
    %1522 = vmatprep.subr.mxu0 %v699
    %1523 = vmatpush1.msra.mxu0 %v698
    %1524 = vmatprep.subr.mxu0 %v703
    %1525 = vmatpush1.msra.mxu0 %v702
    %1526 = vmatprep.subr.mxu0 %v707
    %1527 = vmatpush1.msra.mxu0 %v706
    %1528 = vmatprep.subr.mxu0 %v711
    %1529 = vmatpush1.msra.mxu0 %v710
    %1530 = vmatprep.subr.mxu0 %v715
    %1531 = vmatpush1.msra.mxu0 %v714
    %1532 = vmatprep.subr.mxu0 %v719
    %1533 = vmatpush1.msra.mxu0 %v718
    %1534 = vmatprep.subr.mxu0 %v723
    %1535 = vmatpush1.msra.mxu0 %v722
    %1536 = vmatprep.subr.mxu0 %v727
    %1537 = vmatpush1.msra.mxu0 %v726
    %1538 = vmatprep.subr.mxu0 %v731
    %1539 = vmatpush1.msra.mxu0 %v730
    %1540 = vmatprep.subr.mxu0 %v735
    %1541 = vmatpush1.msra.mxu0 %v734
    %1542 = vmatprep.subr.mxu0 %v739
    %1543 = vmatpush1.msra.mxu0 %v738
    %1544 = vmatprep.subr.mxu0 %v743
    %1545 = vmatpush1.msra.mxu0 %v742
    %1546 = vmatprep.subr.mxu0 %v747
    %1547 = vmatpush1.msra.mxu0 %v746
    %1548 = vmatprep.subr.mxu0 %v751
    %1549 = vmatpush1.msra.mxu0 %v750
    %1550 = vmatprep.subr.mxu0 %v755
    %1551 = vmatpush1.msra.mxu0 %v754
    %1552 = vmatprep.subr.mxu0 %v759
    %1553 = vmatpush1.msra.mxu0 %v758
    %1554 = vmatprep.subr.mxu0 %v763
    %1555 = vmatpush1.msra.mxu0 %v762
    %1556 = vmatprep.subr.mxu0 %v767
    %1557 = vmatpush1.msra.mxu0 %v766
    %1558 = vmatprep.mubr.f32.mxu0 %v1308
    %1559 = vmatmul.mubr.f32.gmra.mrb[0].mxu0 %v1142
    %v1560 = vpop.f32.mrb[0].mxu0
    %v1561 = vadd.f32 %v775, %v1560
    %v1562 = vpop.f32.mrb[0].mxu0
    %v1563 = vadd.f32 %v779, %v1562
    %1564 = vdwg.mxu0
    %1565 = vmatprep.subr.mxu0 %v645
    %1566 = vmatpush1.msra.mxu0 %v644
    %1567 = vmatprep.subr.mxu0 %v649
    %1568 = vmatpush1.msra.mxu0 %v648
    %1569 = vmatprep.subr.mxu0 %v653
    %1570 = vmatpush1.msra.mxu0 %v652
    %1571 = vmatprep.subr.mxu0 %v657
    %1572 = vmatpush1.msra.mxu0 %v656
    %1573 = vmatprep.subr.mxu0 %v661
    %1574 = vmatpush1.msra.mxu0 %v660
    %1575 = vmatprep.subr.mxu0 %v665
    %1576 = vmatpush1.msra.mxu0 %v664
    %1577 = vmatprep.subr.mxu0 %v669
    %1578 = vmatpush1.msra.mxu0 %v668
    %1579 = vmatprep.subr.mxu0 %v673
    %1580 = vmatpush1.msra.mxu0 %v672
    %1581 = vmatprep.subr.mxu0 %v677
    %1582 = vmatpush1.msra.mxu0 %v676
    %1583 = vmatprep.subr.mxu0 %v681
    %1584 = vmatpush1.msra.mxu0 %v680
    %1585 = vmatprep.subr.mxu0 %v685
    %1586 = vmatpush1.msra.mxu0 %v684
    %1587 = vmatprep.subr.mxu0 %v689
    %1588 = vmatpush1.msra.mxu0 %v688
    %1589 = vmatprep.subr.mxu0 %v693
    %1590 = vmatpush1.msra.mxu0 %v692
    %1591 = vmatprep.subr.mxu0 %v697
    %1592 = vmatpush1.msra.mxu0 %v696
    %1593 = vmatprep.subr.mxu0 %v701
    %1594 = vmatpush1.msra.mxu0 %v700
    %1595 = vmatprep.subr.mxu0 %v705
    %1596 = vmatpush1.msra.mxu0 %v704
    %1597 = vmatprep.subr.mxu0 %v709
    %1598 = vmatpush1.msra.mxu0 %v708
    %1599 = vmatprep.subr.mxu0 %v713
    %1600 = vmatpush1.msra.mxu0 %v712
    %1601 = vmatprep.subr.mxu0 %v717
    %1602 = vmatpush1.msra.mxu0 %v716
    %1603 = vmatprep.subr.mxu0 %v721
    %1604 = vmatpush1.msra.mxu0 %v720
    %1605 = vmatprep.subr.mxu0 %v725
    %1606 = vmatpush1.msra.mxu0 %v724
    %1607 = vmatprep.subr.mxu0 %v729
    %1608 = vmatpush1.msra.mxu0 %v728
    %1609 = vmatprep.subr.mxu0 %v733
    %1610 = vmatpush1.msra.mxu0 %v732
    %1611 = vmatprep.subr.mxu0 %v737
    %1612 = vmatpush1.msra.mxu0 %v736
    %1613 = vmatprep.subr.mxu0 %v741
    %1614 = vmatpush1.msra.mxu0 %v740
    %1615 = vmatprep.subr.mxu0 %v745
    %1616 = vmatpush1.msra.mxu0 %v744
    %1617 = vmatprep.subr.mxu0 %v749
    %1618 = vmatpush1.msra.mxu0 %v748
    %1619 = vmatprep.subr.mxu0 %v753
    %1620 = vmatpush1.msra.mxu0 %v752
    %1621 = vmatprep.subr.mxu0 %v757
    %1622 = vmatpush1.msra.mxu0 %v756
    %1623 = vmatprep.subr.mxu0 %v761
    %1624 = vmatpush1.msra.mxu0 %v760
    %1625 = vmatprep.subr.mxu0 %v765
    %1626 = vmatpush1.msra.mxu0 %v764
    %1627 = vmatprep.subr.mxu0 %v769
    %1628 = vmatpush1.msra.mxu0 %v768
    %1629 = vmatprep.mubr.f32.mxu0 %v1308
    %1630 = vmatmul.mubr.f32.gmra.mrb[0].mxu0 %v1142
    %v1631 = vpop.f32.mrb[0].mxu0
    %v1632 = vadd.f32 %v783, %v1631
    %v1633 = vpop.f32.mrb[0].mxu0
    %v1634 = vadd.f32 %v787, %v1633
    %1635 = vdwg.mxu0
    %v1636 = vxor.u32 %v1561, 2147483648
    %v1637 = vxor.u32 %v1563, 2147483648
    %v1638 = vxor.u32 %v1632, 2147483648
    %v1639 = vmul.f32 %v1636, 1.442695
    %v1640 = vpow.pop %v1639
    %v1641 = vmul.f32 %v1637, 1.442695
    %v1642 = vpow.pop %v1641
    %v1643 = vmul.f32 %v1638, 1.442695
    %v1644 = vpow.pop %v1643
    %v1645 = vadd.f32 %v1640, 1.0
    %v1646 = vadd.f32 %v1642, 1.0
    %v1647 = vadd.f32 %v1644, 1.0
    %v1648 = vrcp.pop %v1645
    %v1649 = vmul.f32 1.0, %v1648
    %v1650 = vrcp.pop %v1646
    %v1651 = vmul.f32 1.0, %v1650
    %v1652 = vrcp.pop %v1647
    %v1653 = vmul.f32 1.0, %v1652
    %v1654 = vtanh.pop %v1634
    %v1655 = vmul.f32 %v1651, %v1306
    %v1656 = vmul.f32 %v1649, %v1654
    %v1657 = vadd.f32 %v1655, %v1656
    %v1658 = vtanh.pop %v1657
    %v1659 = vmul.f32 %v1653, %v1658
    %s1660 = scalar_lea.vmem %s0, 8
    %v1661 = vld [vmem:[%s1660] sm:$0x3]
    %1663 = vset.pattern.permute.xlu0 0
    %1664 = vperm.xlu0 %1663, %v1661
    %v1665 = vpop.permute.xlu0 %1664
    %v1667 = vmul.f32 %v1665, %v361
    %v1668 = vmul.f32 %v1665, %v365
    %v1669 = vmul.f32 %v1665, %v369
    %v1670 = vmul.f32 %v1665, %v373
    %v1671 = vadd.f32 %v1667, %v387
    %v1672 = vadd.f32 %v1668, %v391
    %v1673 = vadd.f32 %v1669, %v395
    %v1674 = vadd.f32 %v1670, %v399
    %1675 = vmatprep.subr.mxu0 %v409
    %1676 = vmatpush1.msra.mxu0 %v408
    %1677 = vmatprep.subr.mxu0 %v413
    %1678 = vmatpush1.msra.mxu0 %v412
    %1679 = vmatprep.subr.mxu0 %v417
    %1680 = vmatpush1.msra.mxu0 %v416
    %1681 = vmatprep.subr.mxu0 %v421
    %1682 = vmatpush1.msra.mxu0 %v420
    %1683 = vmatprep.subr.mxu0 %v425
    %1684 = vmatpush1.msra.mxu0 %v424
    %1685 = vmatprep.subr.mxu0 %v429
    %1686 = vmatpush1.msra.mxu0 %v428
    %1687 = vmatprep.subr.mxu0 %v433
    %1688 = vmatpush1.msra.mxu0 %v432
    %1689 = vmatprep.subr.mxu0 %v437
    %1690 = vmatpush1.msra.mxu0 %v436
    %1691 = vmatprep.subr.mxu0 %v441
    %1692 = vmatpush1.msra.mxu0 %v440
    %1693 = vmatprep.subr.mxu0 %v445
    %1694 = vmatpush1.msra.mxu0 %v444
    %1695 = vmatprep.subr.mxu0 %v449
    %1696 = vmatpush1.msra.mxu0 %v448
    %1697 = vmatprep.subr.mxu0 %v453
    %1698 = vmatpush1.msra.mxu0 %v452
    %1699 = vmatprep.subr.mxu0 %v457
    %1700 = vmatpush1.msra.mxu0 %v456
    %1701 = vmatprep.subr.mxu0 %v461
    %1702 = vmatpush1.msra.mxu0 %v460
    %1703 = vmatprep.subr.mxu0 %v465
    %1704 = vmatpush1.msra.mxu0 %v464
    %1705 = vmatprep.subr.mxu0 %v469
    %1706 = vmatpush1.msra.mxu0 %v468
    %1707 = vmatprep.subr.mxu0 0.0
    %1708 = vmatpush1.msra.mxu0 0.0
    %1709 = vmatprep.subr.mxu0 0.0
    %1710 = vmatpush1.msra.mxu0 0.0
    %1711 = vmatprep.subr.mxu0 0.0
    %1712 = vmatpush1.msra.mxu0 0.0
    %1713 = vmatprep.subr.mxu0 0.0
    %1714 = vmatpush1.msra.mxu0 0.0
    %1715 = vmatprep.subr.mxu0 0.0
    %1716 = vmatpush1.msra.mxu0 0.0
    %1717 = vmatprep.subr.mxu0 0.0
    %1718 = vmatpush1.msra.mxu0 0.0
    %1719 = vmatprep.subr.mxu0 0.0
    %1720 = vmatpush1.msra.mxu0 0.0
    %1721 = vmatprep.subr.mxu0 0.0
    %1722 = vmatpush1.msra.mxu0 0.0
    %1723 = vmatprep.subr.mxu0 0.0
    %1724 = vmatpush1.msra.mxu0 0.0
    %1725 = vmatprep.subr.mxu0 0.0
    %1726 = vmatpush1.msra.mxu0 0.0
    %1727 = vmatprep.subr.mxu0 0.0
    %1728 = vmatpush1.msra.mxu0 0.0
    %1729 = vmatprep.subr.mxu0 0.0
    %1730 = vmatpush1.msra.mxu0 0.0
    %1731 = vmatprep.subr.mxu0 0.0
    %1732 = vmatpush1.msra.mxu0 0.0
    %1733 = vmatprep.subr.mxu0 0.0
    %1734 = vmatpush1.msra.mxu0 0.0
    %1735 = vmatprep.subr.mxu0 0.0
    %1736 = vmatpush1.msra.mxu0 0.0
    %1737 = vmatprep.subr.mxu0 0.0
    %1738 = vmatpush1.msra.mxu0 0.0
    %1739 = vmatprep.mubr.f32.mxu0 0.0
    %1740 = vmatmul.mubr.f32.gmra.mrb[0].mxu0 %v1493
    %v1741 = vpop.f32.mrb[0].mxu0
    %v1742 = vadd.f32 0.0, %v1741
    %v1743 = vpop.f32.mrb[0].mxu0
    %v1744 = vadd.f32 0.0, %v1743
    %1745 = vdwg.mxu0
    %1746 = vmatprep.subr.mxu0 %v411
    %1747 = vmatpush1.msra.mxu0 %v410
    %1748 = vmatprep.subr.mxu0 %v415
    %1749 = vmatpush1.msra.mxu0 %v414
    %1750 = vmatprep.subr.mxu0 %v419
    %1751 = vmatpush1.msra.mxu0 %v418
    %1752 = vmatprep.subr.mxu0 %v423
    %1753 = vmatpush1.msra.mxu0 %v422
    %1754 = vmatprep.subr.mxu0 %v427
    %1755 = vmatpush1.msra.mxu0 %v426
    %1756 = vmatprep.subr.mxu0 %v431
    %1757 = vmatpush1.msra.mxu0 %v430
    %1758 = vmatprep.subr.mxu0 %v435
    %1759 = vmatpush1.msra.mxu0 %v434
    %1760 = vmatprep.subr.mxu0 %v439
    %1761 = vmatpush1.msra.mxu0 %v438
    %1762 = vmatprep.subr.mxu0 %v443
    %1763 = vmatpush1.msra.mxu0 %v442
    %1764 = vmatprep.subr.mxu0 %v447
    %1765 = vmatpush1.msra.mxu0 %v446
    %1766 = vmatprep.subr.mxu0 %v451
    %1767 = vmatpush1.msra.mxu0 %v450
    %1768 = vmatprep.subr.mxu0 %v455
    %1769 = vmatpush1.msra.mxu0 %v454
    %1770 = vmatprep.subr.mxu0 %v459
    %1771 = vmatpush1.msra.mxu0 %v458
    %1772 = vmatprep.subr.mxu0 %v463
    %1773 = vmatpush1.msra.mxu0 %v462
    %1774 = vmatprep.subr.mxu0 %v467
    %1775 = vmatpush1.msra.mxu0 %v466
    %1776 = vmatprep.subr.mxu0 %v471
    %1777 = vmatpush1.msra.mxu0 %v470
    %1778 = vmatprep.subr.mxu0 0.0
    %1779 = vmatpush1.msra.mxu0 0.0
    %1780 = vmatprep.subr.mxu0 0.0
    %1781 = vmatpush1.msra.mxu0 0.0
    %1782 = vmatprep.subr.mxu0 0.0
    %1783 = vmatpush1.msra.mxu0 0.0
    %1784 = vmatprep.subr.mxu0 0.0
    %1785 = vmatpush1.msra.mxu0 0.0
    %1786 = vmatprep.subr.mxu0 0.0
    %1787 = vmatpush1.msra.mxu0 0.0
    %1788 = vmatprep.subr.mxu0 0.0
    %1789 = vmatpush1.msra.mxu0 0.0
    %1790 = vmatprep.subr.mxu0 0.0
    %1791 = vmatpush1.msra.mxu0 0.0
    %1792 = vmatprep.subr.mxu0 0.0
    %1793 = vmatpush1.msra.mxu0 0.0
    %1794 = vmatprep.subr.mxu0 0.0
    %1795 = vmatpush1.msra.mxu0 0.0
    %1796 = vmatprep.subr.mxu0 0.0
    %1797 = vmatpush1.msra.mxu0 0.0
    %1798 = vmatprep.subr.mxu0 0.0
    %1799 = vmatpush1.msra.mxu0 0.0
    %1800 = vmatprep.subr.mxu0 0.0
    %1801 = vmatpush1.msra.mxu0 0.0
    %1802 = vmatprep.subr.mxu0 0.0
    %1803 = vmatpush1.msra.mxu0 0.0
    %1804 = vmatprep.subr.mxu0 0.0
    %1805 = vmatpush1.msra.mxu0 0.0
    %1806 = vmatprep.subr.mxu0 0.0
    %1807 = vmatpush1.msra.mxu0 0.0
    %1808 = vmatprep.subr.mxu0 0.0
    %1809 = vmatpush1.msra.mxu0 0.0
    %1810 = vmatprep.mubr.f32.mxu0 0.0
    %1811 = vmatmul.mubr.f32.gmra.mrb[0].mxu0 %v1493
    %v1812 = vpop.f32.mrb[0].mxu0
    %v1813 = vadd.f32 0.0, %v1812
    %v1814 = vpop.f32.mrb[0].mxu0
    %v1815 = vadd.f32 0.0, %v1814
    %1816 = vdwg.mxu0
    %v1817 = vadd.f32 %v1671, %v1742
    %v1818 = vadd.f32 %v1672, %v1744
    %v1819 = vadd.f32 %v1673, %v1813
    %v1820 = vadd.f32 %v1674, %v1815
    %v1821 = vxor.u32 %v1817, 2147483648
    %v1822 = vxor.u32 %v1818, 2147483648
    %v1823 = vxor.u32 %v1819, 2147483648
    %v1824 = vmul.f32 %v1821, 1.442695
    %v1825 = vpow.pop %v1824
    %v1826 = vmul.f32 %v1822, 1.442695
    %v1827 = vpow.pop %v1826
    %v1828 = vmul.f32 %v1823, 1.442695
    %v1829 = vpow.pop %v1828
    %v1830 = vadd.f32 %v1825, 1.0
    %v1831 = vadd.f32 %v1827, 1.0
    %v1832 = vadd.f32 %v1829, 1.0
    %v1833 = vrcp.pop %v1830
    %v1834 = vmul.f32 1.0, %v1833
    %v1835 = vrcp.pop %v1831
    %v1836 = vmul.f32 1.0, %v1835
    %v1837 = vrcp.pop %v1832
    %v1838 = vmul.f32 1.0, %v1837
    %v1839 = vtanh.pop %v1820
    %v1840 = vmul.f32 %v1836, %v1491
    %v1841 = vmul.f32 %v1834, %v1839
    %v1842 = vadd.f32 %v1840, %v1841
    %v1843 = vtanh.pop %v1842
    %v1844 = vmul.f32 %v1838, %v1843
    %1845 = vmatprep.subr.mxu0 %v643
    %1846 = vmatpush1.msra.mxu0 %v642
    %1847 = vmatprep.subr.mxu0 %v647
    %1848 = vmatpush1.msra.mxu0 %v646
    %1849 = vmatprep.subr.mxu0 %v651
    %1850 = vmatpush1.msra.mxu0 %v650
    %1851 = vmatprep.subr.mxu0 %v655
    %1852 = vmatpush1.msra.mxu0 %v654
    %1853 = vmatprep.subr.mxu0 %v659
    %1854 = vmatpush1.msra.mxu0 %v658
    %1855 = vmatprep.subr.mxu0 %v663
    %1856 = vmatpush1.msra.mxu0 %v662
    %1857 = vmatprep.subr.mxu0 %v667
    %1858 = vmatpush1.msra.mxu0 %v666
    %1859 = vmatprep.subr.mxu0 %v671
    %1860 = vmatpush1.msra.mxu0 %v670
    %1861 = vmatprep.subr.mxu0 %v675
    %1862 = vmatpush1.msra.mxu0 %v674
    %1863 = vmatprep.subr.mxu0 %v679
    %1864 = vmatpush1.msra.mxu0 %v678
    %1865 = vmatprep.subr.mxu0 %v683
    %1866 = vmatpush1.msra.mxu0 %v682
    %1867 = vmatprep.subr.mxu0 %v687
    %1868 = vmatpush1.msra.mxu0 %v686
    %1869 = vmatprep.subr.mxu0 %v691
    %1870 = vmatpush1.msra.mxu0 %v690
    %1871 = vmatprep.subr.mxu0 %v695
    %1872 = vmatpush1.msra.mxu0 %v694
    %1873 = vmatprep.subr.mxu0 %v699
    %1874 = vmatpush1.msra.mxu0 %v698
    %1875 = vmatprep.subr.mxu0 %v703
    %1876 = vmatpush1.msra.mxu0 %v702
    %1877 = vmatprep.subr.mxu0 %v707
    %1878 = vmatpush1.msra.mxu0 %v706
    %1879 = vmatprep.subr.mxu0 %v711
    %1880 = vmatpush1.msra.mxu0 %v710
    %1881 = vmatprep.subr.mxu0 %v715
    %1882 = vmatpush1.msra.mxu0 %v714
    %1883 = vmatprep.subr.mxu0 %v719
    %1884 = vmatpush1.msra.mxu0 %v718
    %1885 = vmatprep.subr.mxu0 %v723
    %1886 = vmatpush1.msra.mxu0 %v722
    %1887 = vmatprep.subr.mxu0 %v727
    %1888 = vmatpush1.msra.mxu0 %v726
    %1889 = vmatprep.subr.mxu0 %v731
    %1890 = vmatpush1.msra.mxu0 %v730
    %1891 = vmatprep.subr.mxu0 %v735
    %1892 = vmatpush1.msra.mxu0 %v734
    %1893 = vmatprep.subr.mxu0 %v739
    %1894 = vmatpush1.msra.mxu0 %v738
    %1895 = vmatprep.subr.mxu0 %v743
    %1896 = vmatpush1.msra.mxu0 %v742
    %1897 = vmatprep.subr.mxu0 %v747
    %1898 = vmatpush1.msra.mxu0 %v746
    %1899 = vmatprep.subr.mxu0 %v751
    %1900 = vmatpush1.msra.mxu0 %v750
    %1901 = vmatprep.subr.mxu0 %v755
    %1902 = vmatpush1.msra.mxu0 %v754
    %1903 = vmatprep.subr.mxu0 %v759
    %1904 = vmatpush1.msra.mxu0 %v758
    %1905 = vmatprep.subr.mxu0 %v763
    %1906 = vmatpush1.msra.mxu0 %v762
    %1907 = vmatprep.subr.mxu0 %v767
    %1908 = vmatpush1.msra.mxu0 %v766
    %1909 = vmatprep.mubr.f32.mxu0 %v1659
    %1910 = vmatmul.mubr.f32.gmra.mrb[0].mxu0 %v1493
    %v1911 = vpop.f32.mrb[0].mxu0
    %v1912 = vadd.f32 %v775, %v1911
    %v1913 = vpop.f32.mrb[0].mxu0
    %v1914 = vadd.f32 %v779, %v1913
    %1915 = vdwg.mxu0
    %1916 = vmatprep.subr.mxu0 %v645
    %1917 = vmatpush1.msra.mxu0 %v644
    %1918 = vmatprep.subr.mxu0 %v649
    %1919 = vmatpush1.msra.mxu0 %v648
    %1920 = vmatprep.subr.mxu0 %v653
    %1921 = vmatpush1.msra.mxu0 %v652
    %1922 = vmatprep.subr.mxu0 %v657
    %1923 = vmatpush1.msra.mxu0 %v656
    %1924 = vmatprep.subr.mxu0 %v661
    %1925 = vmatpush1.msra.mxu0 %v660
    %1926 = vmatprep.subr.mxu0 %v665
    %1927 = vmatpush1.msra.mxu0 %v664
    %1928 = vmatprep.subr.mxu0 %v669
    %1929 = vmatpush1.msra.mxu0 %v668
    %1930 = vmatprep.subr.mxu0 %v673
    %1931 = vmatpush1.msra.mxu0 %v672
    %1932 = vmatprep.subr.mxu0 %v677
    %1933 = vmatpush1.msra.mxu0 %v676
    %1934 = vmatprep.subr.mxu0 %v681
    %1935 = vmatpush1.msra.mxu0 %v680
    %1936 = vmatprep.subr.mxu0 %v685
    %1937 = vmatpush1.msra.mxu0 %v684
    %1938 = vmatprep.subr.mxu0 %v689
    %1939 = vmatpush1.msra.mxu0 %v688
    %1940 = vmatprep.subr.mxu0 %v693
    %1941 = vmatpush1.msra.mxu0 %v692
    %1942 = vmatprep.subr.mxu0 %v697
    %1943 = vmatpush1.msra.mxu0 %v696
    %1944 = vmatprep.subr.mxu0 %v701
    %1945 = vmatpush1.msra.mxu0 %v700
    %1946 = vmatprep.subr.mxu0 %v705
    %1947 = vmatpush1.msra.mxu0 %v704
    %1948 = vmatprep.subr.mxu0 %v709
    %1949 = vmatpush1.msra.mxu0 %v708
    %1950 = vmatprep.subr.mxu0 %v713
    %1951 = vmatpush1.msra.mxu0 %v712
    %1952 = vmatprep.subr.mxu0 %v717
    %1953 = vmatpush1.msra.mxu0 %v716
    %1954 = vmatprep.subr.mxu0 %v721
    %1955 = vmatpush1.msra.mxu0 %v720
    %1956 = vmatprep.subr.mxu0 %v725
    %1957 = vmatpush1.msra.mxu0 %v724
    %1958 = vmatprep.subr.mxu0 %v729
    %1959 = vmatpush1.msra.mxu0 %v728
    %1960 = vmatprep.subr.mxu0 %v733
    %1961 = vmatpush1.msra.mxu0 %v732
    %1962 = vmatprep.subr.mxu0 %v737
    %1963 = vmatpush1.msra.mxu0 %v736
    %1964 = vmatprep.subr.mxu0 %v741
    %1965 = vmatpush1.msra.mxu0 %v740
    %1966 = vmatprep.subr.mxu0 %v745
    %1967 = vmatpush1.msra.mxu0 %v744
    %1968 = vmatprep.subr.mxu0 %v749
    %1969 = vmatpush1.msra.mxu0 %v748
    %1970 = vmatprep.subr.mxu0 %v753
    %1971 = vmatpush1.msra.mxu0 %v752
    %1972 = vmatprep.subr.mxu0 %v757
    %1973 = vmatpush1.msra.mxu0 %v756
    %1974 = vmatprep.subr.mxu0 %v761
    %1975 = vmatpush1.msra.mxu0 %v760
    %1976 = vmatprep.subr.mxu0 %v765
    %1977 = vmatpush1.msra.mxu0 %v764
    %1978 = vmatprep.subr.mxu0 %v769
    %1979 = vmatpush1.msra.mxu0 %v768
    %1980 = vmatprep.mubr.f32.mxu0 %v1659
    %1981 = vmatmul.mubr.f32.gmra.mrb[0].mxu0 %v1493
    %v1982 = vpop.f32.mrb[0].mxu0
    %v1983 = vadd.f32 %v783, %v1982
    %v1984 = vpop.f32.mrb[0].mxu0
    %v1985 = vadd.f32 %v787, %v1984
    %1986 = vdwg.mxu0
    %v1987 = vxor.u32 %v1912, 2147483648
    %v1988 = vxor.u32 %v1914, 2147483648
    %v1989 = vxor.u32 %v1983, 2147483648
    %v1990 = vmul.f32 %v1987, 1.442695
    %v1991 = vpow.pop %v1990
    %v1992 = vmul.f32 %v1988, 1.442695
    %v1993 = vpow.pop %v1992
    %v1994 = vmul.f32 %v1989, 1.442695
    %v1995 = vpow.pop %v1994
    %v1996 = vadd.f32 %v1991, 1.0
    %v1997 = vadd.f32 %v1993, 1.0
    %v1998 = vadd.f32 %v1995, 1.0
    %v1999 = vrcp.pop %v1996
    %v2000 = vmul.f32 1.0, %v1999
    %v2001 = vrcp.pop %v1997
    %v2002 = vmul.f32 1.0, %v2001
    %v2003 = vrcp.pop %v1998
    %v2004 = vmul.f32 1.0, %v2003
    %v2005 = vtanh.pop %v1985
    %v2006 = vmul.f32 %v2002, %v1657
    %v2007 = vmul.f32 %v2000, %v2005
    %v2008 = vadd.f32 %v2006, %v2007
    %v2009 = vtanh.pop %v2008
    %v2010 = vmul.f32 %v2004, %v2009
    %s2011 = scalar_lea.vmem %s0, 10
    %v2012 = vld [vmem:[%s2011] sm:$0x3]
    %2014 = vset.pattern.permute.xlu0 0
    %2015 = vperm.xlu0 %2014, %v2012
    %v2016 = vpop.permute.xlu0 %2015
    %v2018 = vmul.f32 %v2016, %v361
    %v2019 = vmul.f32 %v2016, %v365
    %v2020 = vmul.f32 %v2016, %v369
    %v2021 = vmul.f32 %v2016, %v373
    %v2022 = vadd.f32 %v2018, %v387
    %v2023 = vadd.f32 %v2019, %v391
    %v2024 = vadd.f32 %v2020, %v395
    %v2025 = vadd.f32 %v2021, %v399
    %2026 = vmatprep.subr.mxu0 %v409
    %2027 = vmatpush1.msra.mxu0 %v408
    %2028 = vmatprep.subr.mxu0 %v413
    %2029 = vmatpush1.msra.mxu0 %v412
    %2030 = vmatprep.subr.mxu0 %v417
    %2031 = vmatpush1.msra.mxu0 %v416
    %2032 = vmatprep.subr.mxu0 %v421
    %2033 = vmatpush1.msra.mxu0 %v420
    %2034 = vmatprep.subr.mxu0 %v425
    %2035 = vmatpush1.msra.mxu0 %v424
    %2036 = vmatprep.subr.mxu0 %v429
    %2037 = vmatpush1.msra.mxu0 %v428
    %2038 = vmatprep.subr.mxu0 %v433
    %2039 = vmatpush1.msra.mxu0 %v432
    %2040 = vmatprep.subr.mxu0 %v437
    %2041 = vmatpush1.msra.mxu0 %v436
    %2042 = vmatprep.subr.mxu0 %v441
    %2043 = vmatpush1.msra.mxu0 %v440
    %2044 = vmatprep.subr.mxu0 %v445
    %2045 = vmatpush1.msra.mxu0 %v444
    %2046 = vmatprep.subr.mxu0 %v449
    %2047 = vmatpush1.msra.mxu0 %v448
    %2048 = vmatprep.subr.mxu0 %v453
    %2049 = vmatpush1.msra.mxu0 %v452
    %2050 = vmatprep.subr.mxu0 %v457
    %2051 = vmatpush1.msra.mxu0 %v456
    %2052 = vmatprep.subr.mxu0 %v461
    %2053 = vmatpush1.msra.mxu0 %v460
    %2054 = vmatprep.subr.mxu0 %v465
    %2055 = vmatpush1.msra.mxu0 %v464
    %2056 = vmatprep.subr.mxu0 %v469
    %2057 = vmatpush1.msra.mxu0 %v468
    %2058 = vmatprep.subr.mxu0 0.0
    %2059 = vmatpush1.msra.mxu0 0.0
    %2060 = vmatprep.subr.mxu0 0.0
    %2061 = vmatpush1.msra.mxu0 0.0
    %2062 = vmatprep.subr.mxu0 0.0
    %2063 = vmatpush1.msra.mxu0 0.0
    %2064 = vmatprep.subr.mxu0 0.0
    %2065 = vmatpush1.msra.mxu0 0.0
    %2066 = vmatprep.subr.mxu0 0.0
    %2067 = vmatpush1.msra.mxu0 0.0
    %2068 = vmatprep.subr.mxu0 0.0
    %2069 = vmatpush1.msra.mxu0 0.0
    %2070 = vmatprep.subr.mxu0 0.0
    %2071 = vmatpush1.msra.mxu0 0.0
    %2072 = vmatprep.subr.mxu0 0.0
    %2073 = vmatpush1.msra.mxu0 0.0
    %2074 = vmatprep.subr.mxu0 0.0
    %2075 = vmatpush1.msra.mxu0 0.0
    %2076 = vmatprep.subr.mxu0 0.0
    %2077 = vmatpush1.msra.mxu0 0.0
    %2078 = vmatprep.subr.mxu0 0.0
    %2079 = vmatpush1.msra.mxu0 0.0
    %2080 = vmatprep.subr.mxu0 0.0
    %2081 = vmatpush1.msra.mxu0 0.0
    %2082 = vmatprep.subr.mxu0 0.0
    %2083 = vmatpush1.msra.mxu0 0.0
    %2084 = vmatprep.subr.mxu0 0.0
    %2085 = vmatpush1.msra.mxu0 0.0
    %2086 = vmatprep.subr.mxu0 0.0
    %2087 = vmatpush1.msra.mxu0 0.0
    %2088 = vmatprep.subr.mxu0 0.0
    %2089 = vmatpush1.msra.mxu0 0.0
    %2090 = vmatprep.mubr.f32.mxu0 0.0
    %2091 = vmatmul.mubr.f32.gmra.mrb[0].mxu0 %v1844
    %v2092 = vpop.f32.mrb[0].mxu0
    %v2093 = vadd.f32 0.0, %v2092
    %v2094 = vpop.f32.mrb[0].mxu0
    %v2095 = vadd.f32 0.0, %v2094
    %2096 = vdwg.mxu0
    %2097 = vmatprep.subr.mxu0 %v411
    %2098 = vmatpush1.msra.mxu0 %v410
    %2099 = vmatprep.subr.mxu0 %v415
    %2100 = vmatpush1.msra.mxu0 %v414
    %2101 = vmatprep.subr.mxu0 %v419
    %2102 = vmatpush1.msra.mxu0 %v418
    %2103 = vmatprep.subr.mxu0 %v423
    %2104 = vmatpush1.msra.mxu0 %v422
    %2105 = vmatprep.subr.mxu0 %v427
    %2106 = vmatpush1.msra.mxu0 %v426
    %2107 = vmatprep.subr.mxu0 %v431
    %2108 = vmatpush1.msra.mxu0 %v430
    %2109 = vmatprep.subr.mxu0 %v435
    %2110 = vmatpush1.msra.mxu0 %v434
    %2111 = vmatprep.subr.mxu0 %v439
    %2112 = vmatpush1.msra.mxu0 %v438
    %2113 = vmatprep.subr.mxu0 %v443
    %2114 = vmatpush1.msra.mxu0 %v442
    %2115 = vmatprep.subr.mxu0 %v447
    %2116 = vmatpush1.msra.mxu0 %v446
    %2117 = vmatprep.subr.mxu0 %v451
    %2118 = vmatpush1.msra.mxu0 %v450
    %2119 = vmatprep.subr.mxu0 %v455
    %2120 = vmatpush1.msra.mxu0 %v454
    %2121 = vmatprep.subr.mxu0 %v459
    %2122 = vmatpush1.msra.mxu0 %v458
    %2123 = vmatprep.subr.mxu0 %v463
    %2124 = vmatpush1.msra.mxu0 %v462
    %2125 = vmatprep.subr.mxu0 %v467
    %2126 = vmatpush1.msra.mxu0 %v466
    %2127 = vmatprep.subr.mxu0 %v471
    %2128 = vmatpush1.msra.mxu0 %v470
    %2129 = vmatprep.subr.mxu0 0.0
    %2130 = vmatpush1.msra.mxu0 0.0
    %2131 = vmatprep.subr.mxu0 0.0
    %2132 = vmatpush1.msra.mxu0 0.0
    %2133 = vmatprep.subr.mxu0 0.0
    %2134 = vmatpush1.msra.mxu0 0.0
    %2135 = vmatprep.subr.mxu0 0.0
    %2136 = vmatpush1.msra.mxu0 0.0
    %2137 = vmatprep.subr.mxu0 0.0
    %2138 = vmatpush1.msra.mxu0 0.0
    %2139 = vmatprep.subr.mxu0 0.0
    %2140 = vmatpush1.msra.mxu0 0.0
    %2141 = vmatprep.subr.mxu0 0.0
    %2142 = vmatpush1.msra.mxu0 0.0
    %2143 = vmatprep.subr.mxu0 0.0
    %2144 = vmatpush1.msra.mxu0 0.0
    %2145 = vmatprep.subr.mxu0 0.0
    %2146 = vmatpush1.msra.mxu0 0.0
    %2147 = vmatprep.subr.mxu0 0.0
    %2148 = vmatpush1.msra.mxu0 0.0
    %2149 = vmatprep.subr.mxu0 0.0
    %2150 = vmatpush1.msra.mxu0 0.0
    %2151 = vmatprep.subr.mxu0 0.0
    %2152 = vmatpush1.msra.mxu0 0.0
    %2153 = vmatprep.subr.mxu0 0.0
    %2154 = vmatpush1.msra.mxu0 0.0
    %2155 = vmatprep.subr.mxu0 0.0
    %2156 = vmatpush1.msra.mxu0 0.0
    %2157 = vmatprep.subr.mxu0 0.0
    %2158 = vmatpush1.msra.mxu0 0.0
    %2159 = vmatprep.subr.mxu0 0.0
    %2160 = vmatpush1.msra.mxu0 0.0
    %2161 = vmatprep.mubr.f32.mxu0 0.0
    %2162 = vmatmul.mubr.f32.gmra.mrb[0].mxu0 %v1844
    %v2163 = vpop.f32.mrb[0].mxu0
    %v2164 = vadd.f32 0.0, %v2163
    %v2165 = vpop.f32.mrb[0].mxu0
    %v2166 = vadd.f32 0.0, %v2165
    %2167 = vdwg.mxu0
    %v2168 = vadd.f32 %v2022, %v2093
    %v2169 = vadd.f32 %v2023, %v2095
    %v2170 = vadd.f32 %v2024, %v2164
    %v2171 = vadd.f32 %v2025, %v2166
    %v2172 = vxor.u32 %v2168, 2147483648
    %v2173 = vxor.u32 %v2169, 2147483648
    %v2174 = vxor.u32 %v2170, 2147483648
    %v2175 = vmul.f32 %v2172, 1.442695
    %v2176 = vpow.pop %v2175
    %v2177 = vmul.f32 %v2173, 1.442695
    %v2178 = vpow.pop %v2177
    %v2179 = vmul.f32 %v2174, 1.442695
    %v2180 = vpow.pop %v2179
    %v2181 = vadd.f32 %v2176, 1.0
    %v2182 = vadd.f32 %v2178, 1.0
    %v2183 = vadd.f32 %v2180, 1.0
    %v2184 = vrcp.pop %v2181
    %v2185 = vmul.f32 1.0, %v2184
    %v2186 = vrcp.pop %v2182
    %v2187 = vmul.f32 1.0, %v2186
    %v2188 = vrcp.pop %v2183
    %v2189 = vmul.f32 1.0, %v2188
    %v2190 = vtanh.pop %v2171
    %v2191 = vmul.f32 %v2187, %v1842
    %v2192 = vmul.f32 %v2185, %v2190
    %v2193 = vadd.f32 %v2191, %v2192
    %v2194 = vtanh.pop %v2193
    %v2195 = vmul.f32 %v2189, %v2194
    %2196 = vmatprep.subr.mxu0 %v643
    %2197 = vmatpush1.msra.mxu0 %v642
    %2198 = vmatprep.subr.mxu0 %v647
    %2199 = vmatpush1.msra.mxu0 %v646
    %2200 = vmatprep.subr.mxu0 %v651
    %2201 = vmatpush1.msra.mxu0 %v650
    %2202 = vmatprep.subr.mxu0 %v655
    %2203 = vmatpush1.msra.mxu0 %v654
    %2204 = vmatprep.subr.mxu0 %v659
    %2205 = vmatpush1.msra.mxu0 %v658
    %2206 = vmatprep.subr.mxu0 %v663
    %2207 = vmatpush1.msra.mxu0 %v662
    %2208 = vmatprep.subr.mxu0 %v667
    %2209 = vmatpush1.msra.mxu0 %v666
    %2210 = vmatprep.subr.mxu0 %v671
    %2211 = vmatpush1.msra.mxu0 %v670
    %2212 = vmatprep.subr.mxu0 %v675
    %2213 = vmatpush1.msra.mxu0 %v674
    %2214 = vmatprep.subr.mxu0 %v679
    %2215 = vmatpush1.msra.mxu0 %v678
    %2216 = vmatprep.subr.mxu0 %v683
    %2217 = vmatpush1.msra.mxu0 %v682
    %2218 = vmatprep.subr.mxu0 %v687
    %2219 = vmatpush1.msra.mxu0 %v686
    %2220 = vmatprep.subr.mxu0 %v691
    %2221 = vmatpush1.msra.mxu0 %v690
    %2222 = vmatprep.subr.mxu0 %v695
    %2223 = vmatpush1.msra.mxu0 %v694
    %2224 = vmatprep.subr.mxu0 %v699
    %2225 = vmatpush1.msra.mxu0 %v698
    %2226 = vmatprep.subr.mxu0 %v703
    %2227 = vmatpush1.msra.mxu0 %v702
    %2228 = vmatprep.subr.mxu0 %v707
    %2229 = vmatpush1.msra.mxu0 %v706
    %2230 = vmatprep.subr.mxu0 %v711
    %2231 = vmatpush1.msra.mxu0 %v710
    %2232 = vmatprep.subr.mxu0 %v715
    %2233 = vmatpush1.msra.mxu0 %v714
    %2234 = vmatprep.subr.mxu0 %v719
    %2235 = vmatpush1.msra.mxu0 %v718
    %2236 = vmatprep.subr.mxu0 %v723
    %2237 = vmatpush1.msra.mxu0 %v722
    %2238 = vmatprep.subr.mxu0 %v727
    %2239 = vmatpush1.msra.mxu0 %v726
    %2240 = vmatprep.subr.mxu0 %v731
    %2241 = vmatpush1.msra.mxu0 %v730
    %2242 = vmatprep.subr.mxu0 %v735
    %2243 = vmatpush1.msra.mxu0 %v734
    %2244 = vmatprep.subr.mxu0 %v739
    %2245 = vmatpush1.msra.mxu0 %v738
    %2246 = vmatprep.subr.mxu0 %v743
    %2247 = vmatpush1.msra.mxu0 %v742
    %2248 = vmatprep.subr.mxu0 %v747
    %2249 = vmatpush1.msra.mxu0 %v746
    %2250 = vmatprep.subr.mxu0 %v751
    %2251 = vmatpush1.msra.mxu0 %v750
    %2252 = vmatprep.subr.mxu0 %v755
    %2253 = vmatpush1.msra.mxu0 %v754
    %2254 = vmatprep.subr.mxu0 %v759
    %2255 = vmatpush1.msra.mxu0 %v758
    %2256 = vmatprep.subr.mxu0 %v763
    %2257 = vmatpush1.msra.mxu0 %v762
    %2258 = vmatprep.subr.mxu0 %v767
    %2259 = vmatpush1.msra.mxu0 %v766
    %2260 = vmatprep.mubr.f32.mxu0 %v2010
    %2261 = vmatmul.mubr.f32.gmra.mrb[0].mxu0 %v1844
    %v2262 = vpop.f32.mrb[0].mxu0
    %v2263 = vadd.f32 %v775, %v2262
    %v2264 = vpop.f32.mrb[0].mxu0
    %v2265 = vadd.f32 %v779, %v2264
    %2266 = vdwg.mxu0
    %2267 = vmatprep.subr.mxu0 %v645
    %2268 = vmatpush1.msra.mxu0 %v644
    %2269 = vmatprep.subr.mxu0 %v649
    %2270 = vmatpush1.msra.mxu0 %v648
    %2271 = vmatprep.subr.mxu0 %v653
    %2272 = vmatpush1.msra.mxu0 %v652
    %2273 = vmatprep.subr.mxu0 %v657
    %2274 = vmatpush1.msra.mxu0 %v656
    %2275 = vmatprep.subr.mxu0 %v661
    %2276 = vmatpush1.msra.mxu0 %v660
    %2277 = vmatprep.subr.mxu0 %v665
    %2278 = vmatpush1.msra.mxu0 %v664
    %2279 = vmatprep.subr.mxu0 %v669
    %2280 = vmatpush1.msra.mxu0 %v668
    %2281 = vmatprep.subr.mxu0 %v673
    %2282 = vmatpush1.msra.mxu0 %v672
    %2283 = vmatprep.subr.mxu0 %v677
    %2284 = vmatpush1.msra.mxu0 %v676
    %2285 = vmatprep.subr.mxu0 %v681
    %2286 = vmatpush1.msra.mxu0 %v680
    %2287 = vmatprep.subr.mxu0 %v685
    %2288 = vmatpush1.msra.mxu0 %v684
    %2289 = vmatprep.subr.mxu0 %v689
    %2290 = vmatpush1.msra.mxu0 %v688
    %2291 = vmatprep.subr.mxu0 %v693
    %2292 = vmatpush1.msra.mxu0 %v692
    %2293 = vmatprep.subr.mxu0 %v697
    %2294 = vmatpush1.msra.mxu0 %v696
    %2295 = vmatprep.subr.mxu0 %v701
    %2296 = vmatpush1.msra.mxu0 %v700
    %2297 = vmatprep.subr.mxu0 %v705
    %2298 = vmatpush1.msra.mxu0 %v704
    %2299 = vmatprep.subr.mxu0 %v709
    %2300 = vmatpush1.msra.mxu0 %v708
    %2301 = vmatprep.subr.mxu0 %v713
    %2302 = vmatpush1.msra.mxu0 %v712
    %2303 = vmatprep.subr.mxu0 %v717
    %2304 = vmatpush1.msra.mxu0 %v716
    %2305 = vmatprep.subr.mxu0 %v721
    %2306 = vmatpush1.msra.mxu0 %v720
    %2307 = vmatprep.subr.mxu0 %v725
    %2308 = vmatpush1.msra.mxu0 %v724
    %2309 = vmatprep.subr.mxu0 %v729
    %2310 = vmatpush1.msra.mxu0 %v728
    %2311 = vmatprep.subr.mxu0 %v733
    %2312 = vmatpush1.msra.mxu0 %v732
    %2313 = vmatprep.subr.mxu0 %v737
    %2314 = vmatpush1.msra.mxu0 %v736
    %2315 = vmatprep.subr.mxu0 %v741
    %2316 = vmatpush1.msra.mxu0 %v740
    %2317 = vmatprep.subr.mxu0 %v745
    %2318 = vmatpush1.msra.mxu0 %v744
    %2319 = vmatprep.subr.mxu0 %v749
    %2320 = vmatpush1.msra.mxu0 %v748
    %2321 = vmatprep.subr.mxu0 %v753
    %2322 = vmatpush1.msra.mxu0 %v752
    %2323 = vmatprep.subr.mxu0 %v757
    %2324 = vmatpush1.msra.mxu0 %v756
    %2325 = vmatprep.subr.mxu0 %v761
    %2326 = vmatpush1.msra.mxu0 %v760
    %2327 = vmatprep.subr.mxu0 %v765
    %2328 = vmatpush1.msra.mxu0 %v764
    %2329 = vmatprep.subr.mxu0 %v769
    %2330 = vmatpush1.msra.mxu0 %v768
    %2331 = vmatprep.mubr.f32.mxu0 %v2010
    %2332 = vmatmul.mubr.f32.gmra.mrb[0].mxu0 %v1844
    %v2333 = vpop.f32.mrb[0].mxu0
    %v2334 = vadd.f32 %v783, %v2333
    %v2335 = vpop.f32.mrb[0].mxu0
    %v2336 = vadd.f32 %v787, %v2335
    %2337 = vdwg.mxu0
    %v2338 = vxor.u32 %v2263, 2147483648
    %v2339 = vxor.u32 %v2265, 2147483648
    %v2340 = vxor.u32 %v2334, 2147483648
    %v2341 = vmul.f32 %v2338, 1.442695
    %v2342 = vpow.pop %v2341
    %v2343 = vmul.f32 %v2339, 1.442695
    %v2344 = vpow.pop %v2343
    %v2345 = vmul.f32 %v2340, 1.442695
    %v2346 = vpow.pop %v2345
    %v2347 = vadd.f32 %v2342, 1.0
    %v2348 = vadd.f32 %v2344, 1.0
    %v2349 = vadd.f32 %v2346, 1.0
    %v2350 = vrcp.pop %v2347
    %v2351 = vmul.f32 1.0, %v2350
    %v2352 = vrcp.pop %v2348
    %v2353 = vmul.f32 1.0, %v2352
    %v2354 = vrcp.pop %v2349
    %v2355 = vmul.f32 1.0, %v2354
    %v2356 = vtanh.pop %v2336
    %v2357 = vmul.f32 %v2353, %v2008
    %v2358 = vmul.f32 %v2351, %v2356
    %v2359 = vadd.f32 %v2357, %v2358
    %v2360 = vtanh.pop %v2359
    %v2361 = vmul.f32 %v2355, %v2360
    %s2362 = scalar_lea.vmem %s0, 12
    %v2363 = vld [vmem:[%s2362] sm:$0x3]
    %2365 = vset.pattern.permute.xlu0 0
    %2366 = vperm.xlu0 %2365, %v2363
    %v2367 = vpop.permute.xlu0 %2366
    %v2369 = vmul.f32 %v2367, %v361
    %v2370 = vmul.f32 %v2367, %v365
    %v2371 = vmul.f32 %v2367, %v369
    %v2372 = vmul.f32 %v2367, %v373
    %v2373 = vadd.f32 %v2369, %v387
    %v2374 = vadd.f32 %v2370, %v391
    %v2375 = vadd.f32 %v2371, %v395
    %v2376 = vadd.f32 %v2372, %v399
    %2377 = vmatprep.subr.mxu0 %v409
    %2378 = vmatpush1.msra.mxu0 %v408
    %2379 = vmatprep.subr.mxu0 %v413
    %2380 = vmatpush1.msra.mxu0 %v412
    %2381 = vmatprep.subr.mxu0 %v417
    %2382 = vmatpush1.msra.mxu0 %v416
    %2383 = vmatprep.subr.mxu0 %v421
    %2384 = vmatpush1.msra.mxu0 %v420
    %2385 = vmatprep.subr.mxu0 %v425
    %2386 = vmatpush1.msra.mxu0 %v424
    %2387 = vmatprep.subr.mxu0 %v429
    %2388 = vmatpush1.msra.mxu0 %v428
    %2389 = vmatprep.subr.mxu0 %v433
    %2390 = vmatpush1.msra.mxu0 %v432
    %2391 = vmatprep.subr.mxu0 %v437
    %2392 = vmatpush1.msra.mxu0 %v436
    %2393 = vmatprep.subr.mxu0 %v441
    %2394 = vmatpush1.msra.mxu0 %v440
    %2395 = vmatprep.subr.mxu0 %v445
    %2396 = vmatpush1.msra.mxu0 %v444
    %2397 = vmatprep.subr.mxu0 %v449
    %2398 = vmatpush1.msra.mxu0 %v448
    %2399 = vmatprep.subr.mxu0 %v453
    %2400 = vmatpush1.msra.mxu0 %v452
    %2401 = vmatprep.subr.mxu0 %v457
    %2402 = vmatpush1.msra.mxu0 %v456
    %2403 = vmatprep.subr.mxu0 %v461
    %2404 = vmatpush1.msra.mxu0 %v460
    %2405 = vmatprep.subr.mxu0 %v465
    %2406 = vmatpush1.msra.mxu0 %v464
    %2407 = vmatprep.subr.mxu0 %v469
    %2408 = vmatpush1.msra.mxu0 %v468
    %2409 = vmatprep.subr.mxu0 0.0
    %2410 = vmatpush1.msra.mxu0 0.0
    %2411 = vmatprep.subr.mxu0 0.0
    %2412 = vmatpush1.msra.mxu0 0.0
    %2413 = vmatprep.subr.mxu0 0.0
    %2414 = vmatpush1.msra.mxu0 0.0
    %2415 = vmatprep.subr.mxu0 0.0
    %2416 = vmatpush1.msra.mxu0 0.0
    %2417 = vmatprep.subr.mxu0 0.0
    %2418 = vmatpush1.msra.mxu0 0.0
    %2419 = vmatprep.subr.mxu0 0.0
    %2420 = vmatpush1.msra.mxu0 0.0
    %2421 = vmatprep.subr.mxu0 0.0
    %2422 = vmatpush1.msra.mxu0 0.0
    %2423 = vmatprep.subr.mxu0 0.0
    %2424 = vmatpush1.msra.mxu0 0.0
    %2425 = vmatprep.subr.mxu0 0.0
    %2426 = vmatpush1.msra.mxu0 0.0
    %2427 = vmatprep.subr.mxu0 0.0
    %2428 = vmatpush1.msra.mxu0 0.0
    %2429 = vmatprep.subr.mxu0 0.0
    %2430 = vmatpush1.msra.mxu0 0.0
    %2431 = vmatprep.subr.mxu0 0.0
    %2432 = vmatpush1.msra.mxu0 0.0
    %2433 = vmatprep.subr.mxu0 0.0
    %2434 = vmatpush1.msra.mxu0 0.0
    %2435 = vmatprep.subr.mxu0 0.0
    %2436 = vmatpush1.msra.mxu0 0.0
    %2437 = vmatprep.subr.mxu0 0.0
    %2438 = vmatpush1.msra.mxu0 0.0
    %2439 = vmatprep.subr.mxu0 0.0
    %2440 = vmatpush1.msra.mxu0 0.0
    %2441 = vmatprep.mubr.f32.mxu0 0.0
    %2442 = vmatmul.mubr.f32.gmra.mrb[0].mxu0 %v2195
    %v2443 = vpop.f32.mrb[0].mxu0
    %v2444 = vadd.f32 0.0, %v2443
    %v2445 = vpop.f32.mrb[0].mxu0
    %v2446 = vadd.f32 0.0, %v2445
    %2447 = vdwg.mxu0
    %2448 = vmatprep.subr.mxu0 %v411
    %2449 = vmatpush1.msra.mxu0 %v410
    %2450 = vmatprep.subr.mxu0 %v415
    %2451 = vmatpush1.msra.mxu0 %v414
    %2452 = vmatprep.subr.mxu0 %v419
    %2453 = vmatpush1.msra.mxu0 %v418
    %2454 = vmatprep.subr.mxu0 %v423
    %2455 = vmatpush1.msra.mxu0 %v422
    %2456 = vmatprep.subr.mxu0 %v427
    %2457 = vmatpush1.msra.mxu0 %v426
    %2458 = vmatprep.subr.mxu0 %v431
    %2459 = vmatpush1.msra.mxu0 %v430
    %2460 = vmatprep.subr.mxu0 %v435
    %2461 = vmatpush1.msra.mxu0 %v434
    %2462 = vmatprep.subr.mxu0 %v439
    %2463 = vmatpush1.msra.mxu0 %v438
    %2464 = vmatprep.subr.mxu0 %v443
    %2465 = vmatpush1.msra.mxu0 %v442
    %2466 = vmatprep.subr.mxu0 %v447
    %2467 = vmatpush1.msra.mxu0 %v446
    %2468 = vmatprep.subr.mxu0 %v451
    %2469 = vmatpush1.msra.mxu0 %v450
    %2470 = vmatprep.subr.mxu0 %v455
    %2471 = vmatpush1.msra.mxu0 %v454
    %2472 = vmatprep.subr.mxu0 %v459
    %2473 = vmatpush1.msra.mxu0 %v458
    %2474 = vmatprep.subr.mxu0 %v463
    %2475 = vmatpush1.msra.mxu0 %v462
    %2476 = vmatprep.subr.mxu0 %v467
    %2477 = vmatpush1.msra.mxu0 %v466
    %2478 = vmatprep.subr.mxu0 %v471
    %2479 = vmatpush1.msra.mxu0 %v470
    %2480 = vmatprep.subr.mxu0 0.0
    %2481 = vmatpush1.msra.mxu0 0.0
    %2482 = vmatprep.subr.mxu0 0.0
    %2483 = vmatpush1.msra.mxu0 0.0
    %2484 = vmatprep.subr.mxu0 0.0
    %2485 = vmatpush1.msra.mxu0 0.0
    %2486 = vmatprep.subr.mxu0 0.0
    %2487 = vmatpush1.msra.mxu0 0.0
    %2488 = vmatprep.subr.mxu0 0.0
    %2489 = vmatpush1.msra.mxu0 0.0
    %2490 = vmatprep.subr.mxu0 0.0
    %2491 = vmatpush1.msra.mxu0 0.0
    %2492 = vmatprep.subr.mxu0 0.0
    %2493 = vmatpush1.msra.mxu0 0.0
    %2494 = vmatprep.subr.mxu0 0.0
    %2495 = vmatpush1.msra.mxu0 0.0
    %2496 = vmatprep.subr.mxu0 0.0
    %2497 = vmatpush1.msra.mxu0 0.0
    %2498 = vmatprep.subr.mxu0 0.0
    %2499 = vmatpush1.msra.mxu0 0.0
    %2500 = vmatprep.subr.mxu0 0.0
    %2501 = vmatpush1.msra.mxu0 0.0
    %2502 = vmatprep.subr.mxu0 0.0
    %2503 = vmatpush1.msra.mxu0 0.0
    %2504 = vmatprep.subr.mxu0 0.0
    %2505 = vmatpush1.msra.mxu0 0.0
    %2506 = vmatprep.subr.mxu0 0.0
    %2507 = vmatpush1.msra.mxu0 0.0
    %2508 = vmatprep.subr.mxu0 0.0
    %2509 = vmatpush1.msra.mxu0 0.0
    %2510 = vmatprep.subr.mxu0 0.0
    %2511 = vmatpush1.msra.mxu0 0.0
    %2512 = vmatprep.mubr.f32.mxu0 0.0
    %2513 = vmatmul.mubr.f32.gmra.mrb[0].mxu0 %v2195
    %v2514 = vpop.f32.mrb[0].mxu0
    %v2515 = vadd.f32 0.0, %v2514
    %v2516 = vpop.f32.mrb[0].mxu0
    %v2517 = vadd.f32 0.0, %v2516
    %2518 = vdwg.mxu0
    %v2519 = vadd.f32 %v2373, %v2444
    %v2520 = vadd.f32 %v2374, %v2446
    %v2521 = vadd.f32 %v2375, %v2515
    %v2522 = vadd.f32 %v2376, %v2517
    %v2523 = vxor.u32 %v2519, 2147483648
    %v2524 = vxor.u32 %v2520, 2147483648
    %v2525 = vxor.u32 %v2521, 2147483648
    %v2526 = vmul.f32 %v2523, 1.442695
    %v2527 = vpow.pop %v2526
    %v2528 = vmul.f32 %v2524, 1.442695
    %v2529 = vpow.pop %v2528
    %v2530 = vmul.f32 %v2525, 1.442695
    %v2531 = vpow.pop %v2530
    %v2532 = vadd.f32 %v2527, 1.0
    %v2533 = vadd.f32 %v2529, 1.0
    %v2534 = vadd.f32 %v2531, 1.0
    %v2535 = vrcp.pop %v2532
    %v2536 = vmul.f32 1.0, %v2535
    %v2537 = vrcp.pop %v2533
    %v2538 = vmul.f32 1.0, %v2537
    %v2539 = vrcp.pop %v2534
    %v2540 = vmul.f32 1.0, %v2539
    %v2541 = vtanh.pop %v2522
    %v2542 = vmul.f32 %v2538, %v2193
    %v2543 = vmul.f32 %v2536, %v2541
    %v2544 = vadd.f32 %v2542, %v2543
    %v2545 = vtanh.pop %v2544
    %v2546 = vmul.f32 %v2540, %v2545
    %2547 = vmatprep.subr.mxu0 %v643
    %2548 = vmatpush1.msra.mxu0 %v642
    %2549 = vmatprep.subr.mxu0 %v647
    %2550 = vmatpush1.msra.mxu0 %v646
    %2551 = vmatprep.subr.mxu0 %v651
    %2552 = vmatpush1.msra.mxu0 %v650
    %2553 = vmatprep.subr.mxu0 %v655
    %2554 = vmatpush1.msra.mxu0 %v654
    %2555 = vmatprep.subr.mxu0 %v659
    %2556 = vmatpush1.msra.mxu0 %v658
    %2557 = vmatprep.subr.mxu0 %v663
    %2558 = vmatpush1.msra.mxu0 %v662
    %2559 = vmatprep.subr.mxu0 %v667
    %2560 = vmatpush1.msra.mxu0 %v666
    %2561 = vmatprep.subr.mxu0 %v671
    %2562 = vmatpush1.msra.mxu0 %v670
    %2563 = vmatprep.subr.mxu0 %v675
    %2564 = vmatpush1.msra.mxu0 %v674
    %2565 = vmatprep.subr.mxu0 %v679
    %2566 = vmatpush1.msra.mxu0 %v678
    %2567 = vmatprep.subr.mxu0 %v683
    %2568 = vmatpush1.msra.mxu0 %v682
    %2569 = vmatprep.subr.mxu0 %v687
    %2570 = vmatpush1.msra.mxu0 %v686
    %2571 = vmatprep.subr.mxu0 %v691
    %2572 = vmatpush1.msra.mxu0 %v690
    %2573 = vmatprep.subr.mxu0 %v695
    %2574 = vmatpush1.msra.mxu0 %v694
    %2575 = vmatprep.subr.mxu0 %v699
    %2576 = vmatpush1.msra.mxu0 %v698
    %2577 = vmatprep.subr.mxu0 %v703
    %2578 = vmatpush1.msra.mxu0 %v702
    %2579 = vmatprep.subr.mxu0 %v707
    %2580 = vmatpush1.msra.mxu0 %v706
    %2581 = vmatprep.subr.mxu0 %v711
    %2582 = vmatpush1.msra.mxu0 %v710
    %2583 = vmatprep.subr.mxu0 %v715
    %2584 = vmatpush1.msra.mxu0 %v714
    %2585 = vmatprep.subr.mxu0 %v719
    %2586 = vmatpush1.msra.mxu0 %v718
    %2587 = vmatprep.subr.mxu0 %v723
    %2588 = vmatpush1.msra.mxu0 %v722
    %2589 = vmatprep.subr.mxu0 %v727
    %2590 = vmatpush1.msra.mxu0 %v726
    %2591 = vmatprep.subr.mxu0 %v731
    %2592 = vmatpush1.msra.mxu0 %v730
    %2593 = vmatprep.subr.mxu0 %v735
    %2594 = vmatpush1.msra.mxu0 %v734
    %2595 = vmatprep.subr.mxu0 %v739
    %2596 = vmatpush1.msra.mxu0 %v738
    %2597 = vmatprep.subr.mxu0 %v743
    %2598 = vmatpush1.msra.mxu0 %v742
    %2599 = vmatprep.subr.mxu0 %v747
    %2600 = vmatpush1.msra.mxu0 %v746
    %2601 = vmatprep.subr.mxu0 %v751
    %2602 = vmatpush1.msra.mxu0 %v750
    %2603 = vmatprep.subr.mxu0 %v755
    %2604 = vmatpush1.msra.mxu0 %v754
    %2605 = vmatprep.subr.mxu0 %v759
    %2606 = vmatpush1.msra.mxu0 %v758
    %2607 = vmatprep.subr.mxu0 %v763
    %2608 = vmatpush1.msra.mxu0 %v762
    %2609 = vmatprep.subr.mxu0 %v767
    %2610 = vmatpush1.msra.mxu0 %v766
    %2611 = vmatprep.mubr.f32.mxu0 %v2361
    %2612 = vmatmul.mubr.f32.gmra.mrb[0].mxu0 %v2195
    %v2613 = vpop.f32.mrb[0].mxu0
    %v2614 = vadd.f32 %v775, %v2613
    %v2615 = vpop.f32.mrb[0].mxu0
    %v2616 = vadd.f32 %v779, %v2615
    %2617 = vdwg.mxu0
    %2618 = vmatprep.subr.mxu0 %v645
    %2619 = vmatpush1.msra.mxu0 %v644
    %2620 = vmatprep.subr.mxu0 %v649
    %2621 = vmatpush1.msra.mxu0 %v648
    %2622 = vmatprep.subr.mxu0 %v653
    %2623 = vmatpush1.msra.mxu0 %v652
    %2624 = vmatprep.subr.mxu0 %v657
    %2625 = vmatpush1.msra.mxu0 %v656
    %2626 = vmatprep.subr.mxu0 %v661
    %2627 = vmatpush1.msra.mxu0 %v660
    %2628 = vmatprep.subr.mxu0 %v665
    %2629 = vmatpush1.msra.mxu0 %v664
    %2630 = vmatprep.subr.mxu0 %v669
    %2631 = vmatpush1.msra.mxu0 %v668
    %2632 = vmatprep.subr.mxu0 %v673
    %2633 = vmatpush1.msra.mxu0 %v672
    %2634 = vmatprep.subr.mxu0 %v677
    %2635 = vmatpush1.msra.mxu0 %v676
    %2636 = vmatprep.subr.mxu0 %v681
    %2637 = vmatpush1.msra.mxu0 %v680
    %2638 = vmatprep.subr.mxu0 %v685
    %2639 = vmatpush1.msra.mxu0 %v684
    %2640 = vmatprep.subr.mxu0 %v689
    %2641 = vmatpush1.msra.mxu0 %v688
    %2642 = vmatprep.subr.mxu0 %v693
    %2643 = vmatpush1.msra.mxu0 %v692
    %2644 = vmatprep.subr.mxu0 %v697
    %2645 = vmatpush1.msra.mxu0 %v696
    %2646 = vmatprep.subr.mxu0 %v701
    %2647 = vmatpush1.msra.mxu0 %v700
    %2648 = vmatprep.subr.mxu0 %v705
    %2649 = vmatpush1.msra.mxu0 %v704
    %2650 = vmatprep.subr.mxu0 %v709
    %2651 = vmatpush1.msra.mxu0 %v708
    %2652 = vmatprep.subr.mxu0 %v713
    %2653 = vmatpush1.msra.mxu0 %v712
    %2654 = vmatprep.subr.mxu0 %v717
    %2655 = vmatpush1.msra.mxu0 %v716
    %2656 = vmatprep.subr.mxu0 %v721
    %2657 = vmatpush1.msra.mxu0 %v720
    %2658 = vmatprep.subr.mxu0 %v725
    %2659 = vmatpush1.msra.mxu0 %v724
    %2660 = vmatprep.subr.mxu0 %v729
    %2661 = vmatpush1.msra.mxu0 %v728
    %2662 = vmatprep.subr.mxu0 %v733
    %2663 = vmatpush1.msra.mxu0 %v732
    %2664 = vmatprep.subr.mxu0 %v737
    %2665 = vmatpush1.msra.mxu0 %v736
    %2666 = vmatprep.subr.mxu0 %v741
    %2667 = vmatpush1.msra.mxu0 %v740
    %2668 = vmatprep.subr.mxu0 %v745
    %2669 = vmatpush1.msra.mxu0 %v744
    %2670 = vmatprep.subr.mxu0 %v749
    %2671 = vmatpush1.msra.mxu0 %v748
    %2672 = vmatprep.subr.mxu0 %v753
    %2673 = vmatpush1.msra.mxu0 %v752
    %2674 = vmatprep.subr.mxu0 %v757
    %2675 = vmatpush1.msra.mxu0 %v756
    %2676 = vmatprep.subr.mxu0 %v761
    %2677 = vmatpush1.msra.mxu0 %v760
    %2678 = vmatprep.subr.mxu0 %v765
    %2679 = vmatpush1.msra.mxu0 %v764
    %2680 = vmatprep.subr.mxu0 %v769
    %2681 = vmatpush1.msra.mxu0 %v768
    %2682 = vmatprep.mubr.f32.mxu0 %v2361
    %2683 = vmatmul.mubr.f32.gmra.mrb[0].mxu0 %v2195
    %v2684 = vpop.f32.mrb[0].mxu0
    %v2685 = vadd.f32 %v783, %v2684
    %v2686 = vpop.f32.mrb[0].mxu0
    %v2687 = vadd.f32 %v787, %v2686
    %2688 = vdwg.mxu0
    %v2689 = vxor.u32 %v2614, 2147483648
    %v2690 = vxor.u32 %v2616, 2147483648
    %v2691 = vxor.u32 %v2685, 2147483648
    %v2692 = vmul.f32 %v2689, 1.442695
    %v2693 = vpow.pop %v2692
    %v2694 = vmul.f32 %v2690, 1.442695
    %v2695 = vpow.pop %v2694
    %v2696 = vmul.f32 %v2691, 1.442695
    %v2697 = vpow.pop %v2696
    %v2698 = vadd.f32 %v2693, 1.0
    %v2699 = vadd.f32 %v2695, 1.0
    %v2700 = vadd.f32 %v2697, 1.0
    %v2701 = vrcp.pop %v2698
    %v2702 = vmul.f32 1.0, %v2701
    %v2703 = vrcp.pop %v2699
    %v2704 = vmul.f32 1.0, %v2703
    %v2705 = vrcp.pop %v2700
    %v2706 = vmul.f32 1.0, %v2705
    %v2707 = vtanh.pop %v2687
    %v2708 = vmul.f32 %v2704, %v2359
    %v2709 = vmul.f32 %v2702, %v2707
    %v2710 = vadd.f32 %v2708, %v2709
    %v2711 = vtanh.pop %v2710
    %v2712 = vmul.f32 %v2706, %v2711
    %s2713 = scalar_lea.vmem %s0, 14
    %v2714 = vld [vmem:[%s2713] sm:$0x3]
    %2716 = vset.pattern.permute.xlu0 0
    %2717 = vperm.xlu0 %2716, %v2714
    %v2718 = vpop.permute.xlu0 %2717
    %v2720 = vmul.f32 %v2718, %v361
    %v2721 = vmul.f32 %v2718, %v365
    %v2722 = vmul.f32 %v2718, %v369
    %v2723 = vmul.f32 %v2718, %v373
    %v2724 = vadd.f32 %v2720, %v387
    %v2725 = vadd.f32 %v2721, %v391
    %v2726 = vadd.f32 %v2722, %v395
    %v2727 = vadd.f32 %v2723, %v399
    %2728 = vmatprep.subr.mxu0 %v409
    %2729 = vmatpush1.msra.mxu0 %v408
    %2730 = vmatprep.subr.mxu0 %v413
    %2731 = vmatpush1.msra.mxu0 %v412
    %2732 = vmatprep.subr.mxu0 %v417
    %2733 = vmatpush1.msra.mxu0 %v416
    %2734 = vmatprep.subr.mxu0 %v421
    %2735 = vmatpush1.msra.mxu0 %v420
    %2736 = vmatprep.subr.mxu0 %v425
    %2737 = vmatpush1.msra.mxu0 %v424
    %2738 = vmatprep.subr.mxu0 %v429
    %2739 = vmatpush1.msra.mxu0 %v428
    %2740 = vmatprep.subr.mxu0 %v433
    %2741 = vmatpush1.msra.mxu0 %v432
    %2742 = vmatprep.subr.mxu0 %v437
    %2743 = vmatpush1.msra.mxu0 %v436
    %2744 = vmatprep.subr.mxu0 %v441
    %2745 = vmatpush1.msra.mxu0 %v440
    %2746 = vmatprep.subr.mxu0 %v445
    %2747 = vmatpush1.msra.mxu0 %v444
    %2748 = vmatprep.subr.mxu0 %v449
    %2749 = vmatpush1.msra.mxu0 %v448
    %2750 = vmatprep.subr.mxu0 %v453
    %2751 = vmatpush1.msra.mxu0 %v452
    %2752 = vmatprep.subr.mxu0 %v457
    %2753 = vmatpush1.msra.mxu0 %v456
    %2754 = vmatprep.subr.mxu0 %v461
    %2755 = vmatpush1.msra.mxu0 %v460
    %2756 = vmatprep.subr.mxu0 %v465
    %2757 = vmatpush1.msra.mxu0 %v464
    %2758 = vmatprep.subr.mxu0 %v469
    %2759 = vmatpush1.msra.mxu0 %v468
    %2760 = vmatprep.subr.mxu0 0.0
    %2761 = vmatpush1.msra.mxu0 0.0
    %2762 = vmatprep.subr.mxu0 0.0
    %2763 = vmatpush1.msra.mxu0 0.0
    %2764 = vmatprep.subr.mxu0 0.0
    %2765 = vmatpush1.msra.mxu0 0.0
    %2766 = vmatprep.subr.mxu0 0.0
    %2767 = vmatpush1.msra.mxu0 0.0
    %2768 = vmatprep.subr.mxu0 0.0
    %2769 = vmatpush1.msra.mxu0 0.0
    %2770 = vmatprep.subr.mxu0 0.0
    %2771 = vmatpush1.msra.mxu0 0.0
    %2772 = vmatprep.subr.mxu0 0.0
    %2773 = vmatpush1.msra.mxu0 0.0
    %2774 = vmatprep.subr.mxu0 0.0
    %2775 = vmatpush1.msra.mxu0 0.0
    %2776 = vmatprep.subr.mxu0 0.0
    %2777 = vmatpush1.msra.mxu0 0.0
    %2778 = vmatprep.subr.mxu0 0.0
    %2779 = vmatpush1.msra.mxu0 0.0
    %2780 = vmatprep.subr.mxu0 0.0
    %2781 = vmatpush1.msra.mxu0 0.0
    %2782 = vmatprep.subr.mxu0 0.0
    %2783 = vmatpush1.msra.mxu0 0.0
    %2784 = vmatprep.subr.mxu0 0.0
    %2785 = vmatpush1.msra.mxu0 0.0
    %2786 = vmatprep.subr.mxu0 0.0
    %2787 = vmatpush1.msra.mxu0 0.0
    %2788 = vmatprep.subr.mxu0 0.0
    %2789 = vmatpush1.msra.mxu0 0.0
    %2790 = vmatprep.subr.mxu0 0.0
    %2791 = vmatpush1.msra.mxu0 0.0
    %2792 = vmatprep.mubr.f32.mxu0 0.0
    %2793 = vmatmul.mubr.f32.gmra.mrb[0].mxu0 %v2546
    %v2794 = vpop.f32.mrb[0].mxu0
    %v2795 = vadd.f32 0.0, %v2794
    %v2796 = vpop.f32.mrb[0].mxu0
    %v2797 = vadd.f32 0.0, %v2796
    %2798 = vdwg.mxu0
    %2799 = vmatprep.subr.mxu0 %v411
    %2800 = vmatpush1.msra.mxu0 %v410
    %2801 = vmatprep.subr.mxu0 %v415
    %2802 = vmatpush1.msra.mxu0 %v414
    %2803 = vmatprep.subr.mxu0 %v419
    %2804 = vmatpush1.msra.mxu0 %v418
    %2805 = vmatprep.subr.mxu0 %v423
    %2806 = vmatpush1.msra.mxu0 %v422
    %2807 = vmatprep.subr.mxu0 %v427
    %2808 = vmatpush1.msra.mxu0 %v426
    %2809 = vmatprep.subr.mxu0 %v431
    %2810 = vmatpush1.msra.mxu0 %v430
    %2811 = vmatprep.subr.mxu0 %v435
    %2812 = vmatpush1.msra.mxu0 %v434
    %2813 = vmatprep.subr.mxu0 %v439
    %2814 = vmatpush1.msra.mxu0 %v438
    %2815 = vmatprep.subr.mxu0 %v443
    %2816 = vmatpush1.msra.mxu0 %v442
    %2817 = vmatprep.subr.mxu0 %v447
    %2818 = vmatpush1.msra.mxu0 %v446
    %2819 = vmatprep.subr.mxu0 %v451
    %2820 = vmatpush1.msra.mxu0 %v450
    %2821 = vmatprep.subr.mxu0 %v455
    %2822 = vmatpush1.msra.mxu0 %v454
    %2823 = vmatprep.subr.mxu0 %v459
    %2824 = vmatpush1.msra.mxu0 %v458
    %2825 = vmatprep.subr.mxu0 %v463
    %2826 = vmatpush1.msra.mxu0 %v462
    %2827 = vmatprep.subr.mxu0 %v467
    %2828 = vmatpush1.msra.mxu0 %v466
    %2829 = vmatprep.subr.mxu0 %v471
    %2830 = vmatpush1.msra.mxu0 %v470
    %2831 = vmatprep.subr.mxu0 0.0
    %2832 = vmatpush1.msra.mxu0 0.0
    %2833 = vmatprep.subr.mxu0 0.0
    %2834 = vmatpush1.msra.mxu0 0.0
    %2835 = vmatprep.subr.mxu0 0.0
    %2836 = vmatpush1.msra.mxu0 0.0
    %2837 = vmatprep.subr.mxu0 0.0
    %2838 = vmatpush1.msra.mxu0 0.0
    %2839 = vmatprep.subr.mxu0 0.0
    %2840 = vmatpush1.msra.mxu0 0.0
    %2841 = vmatprep.subr.mxu0 0.0
    %2842 = vmatpush1.msra.mxu0 0.0
    %2843 = vmatprep.subr.mxu0 0.0
    %2844 = vmatpush1.msra.mxu0 0.0
    %2845 = vmatprep.subr.mxu0 0.0
    %2846 = vmatpush1.msra.mxu0 0.0
    %2847 = vmatprep.subr.mxu0 0.0
    %2848 = vmatpush1.msra.mxu0 0.0
    %2849 = vmatprep.subr.mxu0 0.0
    %2850 = vmatpush1.msra.mxu0 0.0
    %2851 = vmatprep.subr.mxu0 0.0
    %2852 = vmatpush1.msra.mxu0 0.0
    %2853 = vmatprep.subr.mxu0 0.0
    %2854 = vmatpush1.msra.mxu0 0.0
    %2855 = vmatprep.subr.mxu0 0.0
    %2856 = vmatpush1.msra.mxu0 0.0
    %2857 = vmatprep.subr.mxu0 0.0
    %2858 = vmatpush1.msra.mxu0 0.0
    %2859 = vmatprep.subr.mxu0 0.0
    %2860 = vmatpush1.msra.mxu0 0.0
    %2861 = vmatprep.subr.mxu0 0.0
    %2862 = vmatpush1.msra.mxu0 0.0
    %2863 = vmatprep.mubr.f32.mxu0 0.0
    %2864 = vmatmul.mubr.f32.gmra.mrb[0].mxu0 %v2546
    %v2865 = vpop.f32.mrb[0].mxu0
    %v2866 = vadd.f32 0.0, %v2865
    %v2867 = vpop.f32.mrb[0].mxu0
    %v2868 = vadd.f32 0.0, %v2867
    %2869 = vdwg.mxu0
    %v2870 = vadd.f32 %v2724, %v2795
    %v2871 = vadd.f32 %v2725, %v2797
    %v2872 = vadd.f32 %v2726, %v2866
    %v2873 = vadd.f32 %v2727, %v2868
    %v2874 = vxor.u32 %v2870, 2147483648
    %v2875 = vxor.u32 %v2871, 2147483648
    %v2876 = vxor.u32 %v2872, 2147483648
    %v2877 = vmul.f32 %v2874, 1.442695
    %v2878 = vpow.pop %v2877
    %v2879 = vmul.f32 %v2875, 1.442695
    %v2880 = vpow.pop %v2879
    %v2881 = vmul.f32 %v2876, 1.442695
    %v2882 = vpow.pop %v2881
    %v2883 = vadd.f32 %v2878, 1.0
    %v2884 = vadd.f32 %v2880, 1.0
    %v2885 = vadd.f32 %v2882, 1.0
    %v2886 = vrcp.pop %v2883
    %v2887 = vmul.f32 1.0, %v2886
    %v2888 = vrcp.pop %v2884
    %v2889 = vmul.f32 1.0, %v2888
    %v2890 = vrcp.pop %v2885
    %v2891 = vmul.f32 1.0, %v2890
    %v2892 = vtanh.pop %v2873
    %v2893 = vmul.f32 %v2889, %v2544
    %v2894 = vmul.f32 %v2887, %v2892
    %v2895 = vadd.f32 %v2893, %v2894
    %v2896 = vtanh.pop %v2895
    %v2897 = vmul.f32 %v2891, %v2896
    %2898 = vmatprep.subr.mxu0 %v643
    %2899 = vmatpush1.msra.mxu0 %v642
    %2900 = vmatprep.subr.mxu0 %v647
    %2901 = vmatpush1.msra.mxu0 %v646
    %2902 = vmatprep.subr.mxu0 %v651
    %2903 = vmatpush1.msra.mxu0 %v650
    %2904 = vmatprep.subr.mxu0 %v655
    %2905 = vmatpush1.msra.mxu0 %v654
    %2906 = vmatprep.subr.mxu0 %v659
    %2907 = vmatpush1.msra.mxu0 %v658
    %2908 = vmatprep.subr.mxu0 %v663
    %2909 = vmatpush1.msra.mxu0 %v662
    %2910 = vmatprep.subr.mxu0 %v667
    %2911 = vmatpush1.msra.mxu0 %v666
    %2912 = vmatprep.subr.mxu0 %v671
    %2913 = vmatpush1.msra.mxu0 %v670
    %2914 = vmatprep.subr.mxu0 %v675
    %2915 = vmatpush1.msra.mxu0 %v674
    %2916 = vmatprep.subr.mxu0 %v679
    %2917 = vmatpush1.msra.mxu0 %v678
    %2918 = vmatprep.subr.mxu0 %v683
    %2919 = vmatpush1.msra.mxu0 %v682
    %2920 = vmatprep.subr.mxu0 %v687
    %2921 = vmatpush1.msra.mxu0 %v686
    %2922 = vmatprep.subr.mxu0 %v691
    %2923 = vmatpush1.msra.mxu0 %v690
    %2924 = vmatprep.subr.mxu0 %v695
    %2925 = vmatpush1.msra.mxu0 %v694
    %2926 = vmatprep.subr.mxu0 %v699
    %2927 = vmatpush1.msra.mxu0 %v698
    %2928 = vmatprep.subr.mxu0 %v703
    %2929 = vmatpush1.msra.mxu0 %v702
    %2930 = vmatprep.subr.mxu0 %v707
    %2931 = vmatpush1.msra.mxu0 %v706
    %2932 = vmatprep.subr.mxu0 %v711
    %2933 = vmatpush1.msra.mxu0 %v710
    %2934 = vmatprep.subr.mxu0 %v715
    %2935 = vmatpush1.msra.mxu0 %v714
    %2936 = vmatprep.subr.mxu0 %v719
    %2937 = vmatpush1.msra.mxu0 %v718
    %2938 = vmatprep.subr.mxu0 %v723
    %2939 = vmatpush1.msra.mxu0 %v722
    %2940 = vmatprep.subr.mxu0 %v727
    %2941 = vmatpush1.msra.mxu0 %v726
    %2942 = vmatprep.subr.mxu0 %v731
    %2943 = vmatpush1.msra.mxu0 %v730
    %2944 = vmatprep.subr.mxu0 %v735
    %2945 = vmatpush1.msra.mxu0 %v734
    %2946 = vmatprep.subr.mxu0 %v739
    %2947 = vmatpush1.msra.mxu0 %v738
    %2948 = vmatprep.subr.mxu0 %v743
    %2949 = vmatpush1.msra.mxu0 %v742
    %2950 = vmatprep.subr.mxu0 %v747
    %2951 = vmatpush1.msra.mxu0 %v746
    %2952 = vmatprep.subr.mxu0 %v751
    %2953 = vmatpush1.msra.mxu0 %v750
    %2954 = vmatprep.subr.mxu0 %v755
    %2955 = vmatpush1.msra.mxu0 %v754
    %2956 = vmatprep.subr.mxu0 %v759
    %2957 = vmatpush1.msra.mxu0 %v758
    %2958 = vmatprep.subr.mxu0 %v763
    %2959 = vmatpush1.msra.mxu0 %v762
    %2960 = vmatprep.subr.mxu0 %v767
    %2961 = vmatpush1.msra.mxu0 %v766
    %2962 = vmatprep.mubr.f32.mxu0 %v2712
    %2963 = vmatmul.mubr.f32.gmra.mrb[0].mxu0 %v2546
    %v2964 = vpop.f32.mrb[0].mxu0
    %v2965 = vadd.f32 %v775, %v2964
    %v2966 = vpop.f32.mrb[0].mxu0
    %v2967 = vadd.f32 %v779, %v2966
    %2968 = vdwg.mxu0
    %2969 = vmatprep.subr.mxu0 %v645
    %2970 = vmatpush1.msra.mxu0 %v644
    %2971 = vmatprep.subr.mxu0 %v649
    %2972 = vmatpush1.msra.mxu0 %v648
    %2973 = vmatprep.subr.mxu0 %v653
    %2974 = vmatpush1.msra.mxu0 %v652
    %2975 = vmatprep.subr.mxu0 %v657
    %2976 = vmatpush1.msra.mxu0 %v656
    %2977 = vmatprep.subr.mxu0 %v661
    %2978 = vmatpush1.msra.mxu0 %v660
    %2979 = vmatprep.subr.mxu0 %v665
    %2980 = vmatpush1.msra.mxu0 %v664
    %2981 = vmatprep.subr.mxu0 %v669
    %2982 = vmatpush1.msra.mxu0 %v668
    %2983 = vmatprep.subr.mxu0 %v673
    %2984 = vmatpush1.msra.mxu0 %v672
    %2985 = vmatprep.subr.mxu0 %v677
    %2986 = vmatpush1.msra.mxu0 %v676
    %2987 = vmatprep.subr.mxu0 %v681
    %2988 = vmatpush1.msra.mxu0 %v680
    %2989 = vmatprep.subr.mxu0 %v685
    %2990 = vmatpush1.msra.mxu0 %v684
    %2991 = vmatprep.subr.mxu0 %v689
    %2992 = vmatpush1.msra.mxu0 %v688
    %2993 = vmatprep.subr.mxu0 %v693
    %2994 = vmatpush1.msra.mxu0 %v692
    %2995 = vmatprep.subr.mxu0 %v697
    %2996 = vmatpush1.msra.mxu0 %v696
    %2997 = vmatprep.subr.mxu0 %v701
    %2998 = vmatpush1.msra.mxu0 %v700
    %2999 = vmatprep.subr.mxu0 %v705
    %3000 = vmatpush1.msra.mxu0 %v704
    %3001 = vmatprep.subr.mxu0 %v709
    %3002 = vmatpush1.msra.mxu0 %v708
    %3003 = vmatprep.subr.mxu0 %v713
    %3004 = vmatpush1.msra.mxu0 %v712
    %3005 = vmatprep.subr.mxu0 %v717
    %3006 = vmatpush1.msra.mxu0 %v716
    %3007 = vmatprep.subr.mxu0 %v721
    %3008 = vmatpush1.msra.mxu0 %v720
    %3009 = vmatprep.subr.mxu0 %v725
    %3010 = vmatpush1.msra.mxu0 %v724
    %3011 = vmatprep.subr.mxu0 %v729
    %3012 = vmatpush1.msra.mxu0 %v728
    %3013 = vmatprep.subr.mxu0 %v733
    %3014 = vmatpush1.msra.mxu0 %v732
    %3015 = vmatprep.subr.mxu0 %v737
    %3016 = vmatpush1.msra.mxu0 %v736
    %3017 = vmatprep.subr.mxu0 %v741
    %3018 = vmatpush1.msra.mxu0 %v740
    %3019 = vmatprep.subr.mxu0 %v745
    %3020 = vmatpush1.msra.mxu0 %v744
    %3021 = vmatprep.subr.mxu0 %v749
    %3022 = vmatpush1.msra.mxu0 %v748
    %3023 = vmatprep.subr.mxu0 %v753
    %3024 = vmatpush1.msra.mxu0 %v752
    %3025 = vmatprep.subr.mxu0 %v757
    %3026 = vmatpush1.msra.mxu0 %v756
    %3027 = vmatprep.subr.mxu0 %v761
    %3028 = vmatpush1.msra.mxu0 %v760
    %3029 = vmatprep.subr.mxu0 %v765
    %3030 = vmatpush1.msra.mxu0 %v764
    %3031 = vmatprep.subr.mxu0 %v769
    %3032 = vmatpush1.msra.mxu0 %v768
    %3033 = vmatprep.mubr.f32.mxu0 %v2712
    %3034 = vmatmul.mubr.f32.gmra.mrb[0].mxu0 %v2546
    %v3035 = vpop.f32.mrb[0].mxu0
    %v3036 = vadd.f32 %v783, %v3035
    %v3037 = vpop.f32.mrb[0].mxu0
    %v3038 = vadd.f32 %v787, %v3037
    %3039 = vdwg.mxu0
    %v3040 = vxor.u32 %v2965, 2147483648
    %v3041 = vxor.u32 %v2967, 2147483648
    %v3042 = vxor.u32 %v3036, 2147483648
    %v3043 = vmul.f32 %v3040, 1.442695
    %v3044 = vpow.pop %v3043
    %v3045 = vmul.f32 %v3041, 1.442695
    %v3046 = vpow.pop %v3045
    %v3047 = vmul.f32 %v3042, 1.442695
    %v3048 = vpow.pop %v3047
    %v3049 = vadd.f32 %v3044, 1.0
    %v3050 = vadd.f32 %v3046, 1.0
    %v3051 = vadd.f32 %v3048, 1.0
    %v3052 = vrcp.pop %v3049
    %v3053 = vmul.f32 1.0, %v3052
    %v3054 = vrcp.pop %v3050
    %v3055 = vmul.f32 1.0, %v3054
    %v3056 = vrcp.pop %v3051
    %v3057 = vmul.f32 1.0, %v3056
    %v3058 = vtanh.pop %v3038
    %v3059 = vmul.f32 %v3055, %v2710
    %v3060 = vmul.f32 %v3053, %v3058
    %v3061 = vadd.f32 %v3059, %v3060
    %v3062 = vtanh.pop %v3061
    %v3063 = vmul.f32 %v3057, %v3062
    %3064 = vmatprep.subr.mxu0 %v643
    %3065 = vmatpush1.msra.mxu0 %v642
    %3066 = vmatprep.subr.mxu0 %v647
    %3067 = vmatpush1.msra.mxu0 %v646
    %3068 = vmatprep.subr.mxu0 %v651
    %3069 = vmatpush1.msra.mxu0 %v650
    %3070 = vmatprep.subr.mxu0 %v655
    %3071 = vmatpush1.msra.mxu0 %v654
    %3072 = vmatprep.subr.mxu0 %v659
    %3073 = vmatpush1.msra.mxu0 %v658
    %3074 = vmatprep.subr.mxu0 %v663
    %3075 = vmatpush1.msra.mxu0 %v662
    %3076 = vmatprep.subr.mxu0 %v667
    %3077 = vmatpush1.msra.mxu0 %v666
    %3078 = vmatprep.subr.mxu0 %v671
    %3079 = vmatpush1.msra.mxu0 %v670
    %3080 = vmatprep.subr.mxu0 %v675
    %3081 = vmatpush1.msra.mxu0 %v674
    %3082 = vmatprep.subr.mxu0 %v679
    %3083 = vmatpush1.msra.mxu0 %v678
    %3084 = vmatprep.subr.mxu0 %v683
    %3085 = vmatpush1.msra.mxu0 %v682
    %3086 = vmatprep.subr.mxu0 %v687
    %3087 = vmatpush1.msra.mxu0 %v686
    %3088 = vmatprep.subr.mxu0 %v691
    %3089 = vmatpush1.msra.mxu0 %v690
    %3090 = vmatprep.subr.mxu0 %v695
    %3091 = vmatpush1.msra.mxu0 %v694
    %3092 = vmatprep.subr.mxu0 %v699
    %3093 = vmatpush1.msra.mxu0 %v698
    %3094 = vmatprep.subr.mxu0 %v703
    %3095 = vmatpush1.msra.mxu0 %v702
    %3096 = vmatprep.subr.mxu0 %v707
    %3097 = vmatpush1.msra.mxu0 %v706
    %3098 = vmatprep.subr.mxu0 %v711
    %3099 = vmatpush1.msra.mxu0 %v710
    %3100 = vmatprep.subr.mxu0 %v715
    %3101 = vmatpush1.msra.mxu0 %v714
    %3102 = vmatprep.subr.mxu0 %v719
    %3103 = vmatpush1.msra.mxu0 %v718
    %3104 = vmatprep.subr.mxu0 %v723
    %3105 = vmatpush1.msra.mxu0 %v722
    %3106 = vmatprep.subr.mxu0 %v727
    %3107 = vmatpush1.msra.mxu0 %v726
    %3108 = vmatprep.subr.mxu0 %v731
    %3109 = vmatpush1.msra.mxu0 %v730
    %3110 = vmatprep.subr.mxu0 %v735
    %3111 = vmatpush1.msra.mxu0 %v734
    %3112 = vmatprep.subr.mxu0 %v739
    %3113 = vmatpush1.msra.mxu0 %v738
    %3114 = vmatprep.subr.mxu0 %v743
    %3115 = vmatpush1.msra.mxu0 %v742
    %3116 = vmatprep.subr.mxu0 %v747
    %3117 = vmatpush1.msra.mxu0 %v746
    %3118 = vmatprep.subr.mxu0 %v751
    %3119 = vmatpush1.msra.mxu0 %v750
    %3120 = vmatprep.subr.mxu0 %v755
    %3121 = vmatpush1.msra.mxu0 %v754
    %3122 = vmatprep.subr.mxu0 %v759
    %3123 = vmatpush1.msra.mxu0 %v758
    %3124 = vmatprep.subr.mxu0 %v763
    %3125 = vmatpush1.msra.mxu0 %v762
    %3126 = vmatprep.subr.mxu0 %v767
    %3127 = vmatpush1.msra.mxu0 %v766
    %3128 = vmatprep.mubr.f32.mxu0 %v3063
    %3129 = vmatmul.mubr.f32.gmra.mrb[0].mxu0 %v2897
    %v3130 = vpop.f32.mrb[0].mxu0
    %v3131 = vadd.f32 %v775, %v3130
    %v3132 = vpop.f32.mrb[0].mxu0
    %v3133 = vadd.f32 %v779, %v3132
    %3134 = vdwg.mxu0
    %3135 = vmatprep.subr.mxu0 %v645
    %3136 = vmatpush1.msra.mxu0 %v644
    %3137 = vmatprep.subr.mxu0 %v649
    %3138 = vmatpush1.msra.mxu0 %v648
    %3139 = vmatprep.subr.mxu0 %v653
    %3140 = vmatpush1.msra.mxu0 %v652
    %3141 = vmatprep.subr.mxu0 %v657
    %3142 = vmatpush1.msra.mxu0 %v656
    %3143 = vmatprep.subr.mxu0 %v661
    %3144 = vmatpush1.msra.mxu0 %v660
    %3145 = vmatprep.subr.mxu0 %v665
    %3146 = vmatpush1.msra.mxu0 %v664
    %3147 = vmatprep.subr.mxu0 %v669
    %3148 = vmatpush1.msra.mxu0 %v668
    %3149 = vmatprep.subr.mxu0 %v673
    %3150 = vmatpush1.msra.mxu0 %v672
    %3151 = vmatprep.subr.mxu0 %v677
    %3152 = vmatpush1.msra.mxu0 %v676
    %3153 = vmatprep.subr.mxu0 %v681
    %3154 = vmatpush1.msra.mxu0 %v680
    %3155 = vmatprep.subr.mxu0 %v685
    %3156 = vmatpush1.msra.mxu0 %v684
    %3157 = vmatprep.subr.mxu0 %v689
    %3158 = vmatpush1.msra.mxu0 %v688
    %3159 = vmatprep.subr.mxu0 %v693
    %3160 = vmatpush1.msra.mxu0 %v692
    %3161 = vmatprep.subr.mxu0 %v697
    %3162 = vmatpush1.msra.mxu0 %v696
    %3163 = vmatprep.subr.mxu0 %v701
    %3164 = vmatpush1.msra.mxu0 %v700
    %3165 = vmatprep.subr.mxu0 %v705
    %3166 = vmatpush1.msra.mxu0 %v704
    %3167 = vmatprep.subr.mxu0 %v709
    %3168 = vmatpush1.msra.mxu0 %v708
    %3169 = vmatprep.subr.mxu0 %v713
    %3170 = vmatpush1.msra.mxu0 %v712
    %3171 = vmatprep.subr.mxu0 %v717
    %3172 = vmatpush1.msra.mxu0 %v716
    %3173 = vmatprep.subr.mxu0 %v721
    %3174 = vmatpush1.msra.mxu0 %v720
    %3175 = vmatprep.subr.mxu0 %v725
    %3176 = vmatpush1.msra.mxu0 %v724
    %3177 = vmatprep.subr.mxu0 %v729
    %3178 = vmatpush1.msra.mxu0 %v728
    %3179 = vmatprep.subr.mxu0 %v733
    %3180 = vmatpush1.msra.mxu0 %v732
    %3181 = vmatprep.subr.mxu0 %v737
    %3182 = vmatpush1.msra.mxu0 %v736
    %3183 = vmatprep.subr.mxu0 %v741
    %3184 = vmatpush1.msra.mxu0 %v740
    %3185 = vmatprep.subr.mxu0 %v745
    %3186 = vmatpush1.msra.mxu0 %v744
    %3187 = vmatprep.subr.mxu0 %v749
    %3188 = vmatpush1.msra.mxu0 %v748
    %3189 = vmatprep.subr.mxu0 %v753
    %3190 = vmatpush1.msra.mxu0 %v752
    %3191 = vmatprep.subr.mxu0 %v757
    %3192 = vmatpush1.msra.mxu0 %v756
    %3193 = vmatprep.subr.mxu0 %v761
    %3194 = vmatpush1.msra.mxu0 %v760
    %3195 = vmatprep.subr.mxu0 %v765
    %3196 = vmatpush1.msra.mxu0 %v764
    %3197 = vmatprep.subr.mxu0 %v769
    %3198 = vmatpush1.msra.mxu0 %v768
    %3199 = vmatprep.mubr.f32.mxu0 %v3063
    %3200 = vmatmul.mubr.f32.gmra.mrb[0].mxu0 %v2897
    %v3201 = vpop.f32.mrb[0].mxu0
    %v3202 = vadd.f32 %v783, %v3201
    %v3203 = vpop.f32.mrb[0].mxu0
    %v3204 = vadd.f32 %v787, %v3203
    %3205 = vdwg.mxu0
    %v3206 = vxor.u32 %v3131, 2147483648
    %v3207 = vxor.u32 %v3133, 2147483648
    %v3208 = vxor.u32 %v3202, 2147483648
    %v3209 = vmul.f32 %v3206, 1.442695
    %v3210 = vpow.pop %v3209
    %v3211 = vmul.f32 %v3207, 1.442695
    %v3212 = vpow.pop %v3211
    %v3213 = vmul.f32 %v3208, 1.442695
    %v3214 = vpow.pop %v3213
    %v3215 = vadd.f32 %v3210, 1.0
    %v3216 = vadd.f32 %v3212, 1.0
    %v3217 = vadd.f32 %v3214, 1.0
    %v3218 = vrcp.pop %v3215
    %v3219 = vmul.f32 1.0, %v3218
    %v3220 = vrcp.pop %v3216
    %v3221 = vmul.f32 1.0, %v3220
    %v3222 = vrcp.pop %v3217
    %v3223 = vmul.f32 1.0, %v3222
    %v3224 = vtanh.pop %v3204
    %v3225 = vmul.f32 %v3221, %v3061
    %v3226 = vmul.f32 %v3219, %v3224
    %v3227 = vadd.f32 %v3225, %v3226
    %v3228 = vtanh.pop %v3227
    %v3229 = vmul.f32 %v3223, %v3228
    %v3230 = vld [vmem:[%s6] sm:$0xff]
    %v3231 = vld [vmem:[%s6 + $0x8] sm:$0xff]
    %v3232 = vld [vmem:[%s6 + $0x10] sm:$0xff]
    %v3233 = vld [vmem:[%s6 + $0x18] sm:$0xff]
    %v3234 = vld [vmem:[%s6 + $0x20] sm:$0xff]
    %v3235 = vld [vmem:[%s6 + $0x28] sm:$0xff]
    %v3236 = vld [vmem:[%s6 + $0x30] sm:$0xff]
    %v3237 = vld [vmem:[%s6 + $0x38] sm:$0xff]
    %v3238 = vld [vmem:[%s6 + $0x40] sm:$0xff]
    %v3239 = vld [vmem:[%s6 + $0x48] sm:$0xff]
    %v3240 = vld [vmem:[%s6 + $0x50] sm:$0xff]
    %v3241 = vld [vmem:[%s6 + $0x58] sm:$0xff]
    %v3242 = vld [vmem:[%s6 + $0x60] sm:$0xff]
    %v3243 = vld [vmem:[%s6 + $0x68] sm:$0xff]
    %v3244 = vld [vmem:[%s6 + $0x70] sm:$0xff]
    %v3245 = vld [vmem:[%s6 + $0x78] sm:$0xff]
    %v3246 = vld [vmem:[%s7] sm:$0x1]
    %v3248 = vlaneseq
    %v3249 = vshrl.u32 %v3248, 7
    %v3250 = vsub.s32 0, %v3249
    %v3251 = vrot.slane %v3246, %v3250
    %3253 = vmatprep.subr.mxu0 0.0
    %3254 = vmatpush1.msra.mxu0 %v3230
    %3255 = vmatprep.subr.mxu0 0.0
    %3256 = vmatpush1.msra.mxu0 %v3231
    %3257 = vmatprep.subr.mxu0 0.0
    %3258 = vmatpush1.msra.mxu0 %v3232
    %3259 = vmatprep.subr.mxu0 0.0
    %3260 = vmatpush1.msra.mxu0 %v3233
    %3261 = vmatprep.subr.mxu0 0.0
    %3262 = vmatpush1.msra.mxu0 %v3234
    %3263 = vmatprep.subr.mxu0 0.0
    %3264 = vmatpush1.msra.mxu0 %v3235
    %3265 = vmatprep.subr.mxu0 0.0
    %3266 = vmatpush1.msra.mxu0 %v3236
    %3267 = vmatprep.subr.mxu0 0.0
    %3268 = vmatpush1.msra.mxu0 %v3237
    %3269 = vmatprep.subr.mxu0 0.0
    %3270 = vmatpush1.msra.mxu0 %v3238
    %3271 = vmatprep.subr.mxu0 0.0
    %3272 = vmatpush1.msra.mxu0 %v3239
    %3273 = vmatprep.subr.mxu0 0.0
    %3274 = vmatpush1.msra.mxu0 %v3240
    %3275 = vmatprep.subr.mxu0 0.0
    %3276 = vmatpush1.msra.mxu0 %v3241
    %3277 = vmatprep.subr.mxu0 0.0
    %3278 = vmatpush1.msra.mxu0 %v3242
    %3279 = vmatprep.subr.mxu0 0.0
    %3280 = vmatpush1.msra.mxu0 %v3243
    %3281 = vmatprep.subr.mxu0 0.0
    %3282 = vmatpush1.msra.mxu0 %v3244
    %3283 = vmatprep.subr.mxu0 0.0
    %3284 = vmatpush1.msra.mxu0 %v3245
    %3285 = vmatprep.subr.mxu0 0.0
    %3286 = vmatpush1.msra.mxu0 0.0
    %3287 = vmatprep.subr.mxu0 0.0
    %3288 = vmatpush1.msra.mxu0 0.0
    %3289 = vmatprep.subr.mxu0 0.0
    %3290 = vmatpush1.msra.mxu0 0.0
    %3291 = vmatprep.subr.mxu0 0.0
    %3292 = vmatpush1.msra.mxu0 0.0
    %3293 = vmatprep.subr.mxu0 0.0
    %3294 = vmatpush1.msra.mxu0 0.0
    %3295 = vmatprep.subr.mxu0 0.0
    %3296 = vmatpush1.msra.mxu0 0.0
    %3297 = vmatprep.subr.mxu0 0.0
    %3298 = vmatpush1.msra.mxu0 0.0
    %3299 = vmatprep.subr.mxu0 0.0
    %3300 = vmatpush1.msra.mxu0 0.0
    %3301 = vmatprep.subr.mxu0 0.0
    %3302 = vmatpush1.msra.mxu0 0.0
    %3303 = vmatprep.subr.mxu0 0.0
    %3304 = vmatpush1.msra.mxu0 0.0
    %3305 = vmatprep.subr.mxu0 0.0
    %3306 = vmatpush1.msra.mxu0 0.0
    %3307 = vmatprep.subr.mxu0 0.0
    %3308 = vmatpush1.msra.mxu0 0.0
    %3309 = vmatprep.subr.mxu0 0.0
    %3310 = vmatpush1.msra.mxu0 0.0
    %3311 = vmatprep.subr.mxu0 0.0
    %3312 = vmatpush1.msra.mxu0 0.0
    %3313 = vmatprep.subr.mxu0 0.0
    %3314 = vmatpush1.msra.mxu0 0.0
    %3315 = vmatprep.subr.mxu0 0.0
    %3316 = vmatpush1.msra.mxu0 0.0
    %3317 = vmatprep.mubr.f32.mxu0 0.0
    %3318 = vmatmul.mubr.f32.gmra.mrb[0].mxu0 %v3229
    %v3319 = vpop.f32.mrb[0].mxu0
    %v3320 = vadd.f32 %v3251, %v3319
    %v3321 = vpop.f32.mrb[0].mxu0
    %3322 = vdwg.mxu0
    %vm3323 = vcmask 25600
    %3324 = vst.msk [vmem:[#allocation7] sm:$0x3] %vm3323, %v3320
    // Predicated region
    $region38: #{tpu_custom_call.1} parent=1 // pred_check
      _
    $region39: #{tpu_custom_call.1} parent=1 // pred_check_branch
      %3326 = sbr.rel (0) target = $region41
    $region40: #{tpu_custom_call.1} parent=1 // pred_region
      %s3328 = ssub.s32 32, 32
      %3329 = vsyncadd [#allocation6], %s3328
      %s3331 = sshll.u32 [#allocation7], 4
      %s3332 = int_to_ptr.vmem [resolvable:$true] %s3331
      %3334 = dma.vmem_to_hbm [thread:$0]  %s3332, 32, %s8, [#allocation6]
    $region41: #{tpu_custom_call.1} parent=1 // pred_fallthru
      _
    // Predicated region
    $region42: #{tpu_custom_call.1} parent=1 // pred_check
      _
    $region43: #{tpu_custom_call.1} parent=1 // pred_check_branch
      %3336 = sbr.rel (0) target = $region45
    $region44: #{tpu_custom_call.1} parent=1 // pred_region
      %3337 = dma.done [#allocation6], 32
    $region45: #{tpu_custom_call.1} parent=1 // pred_fallthru
      _
    %3338 = vsyncpa [#allocation5], 1
    %3339 = vsyncpa [#allocation6], 1
  %3340 = vsyncmov [#allocation3]
  %s3341 = vpop.sfrf %3340
  %p3342 = scmp.eq.s32.totalorder %s3341, 0
  %p3343 = pneg %p3342
  %3345 = shalt.err (%p3343)

</llo_original>
